<compile_context>
chip_gen: v7x
topology: tpu7x:2x2x1
jax: 0.10.0
libtpu: 0.0.40
codegen_flags: <defaults>
</compile_context>

<pallas_src>
import functools

import jax
import jax.numpy as jnp
from jax.experimental import pallas as pl
from jax.experimental.pallas import tpu as pltpu

IN_FEATURES = 1 * 28 * 28        # 784
H1, H2, H3, OUT = 384, 128, 32, 1
LEAKY_SLOPE = 0.01               # torch.nn.LeakyReLU default negative_slope
TILE_B = 1024                    # 512-2048 hits ~85% of HBM roofline; sweep if needed


def _round_up(x, m):
    return ((x + m - 1) // m) * m


def _leaky_relu(x):
    return jnp.where(x > 0, x, LEAKY_SLOPE * x)


def discriminator_kernel(x_ref, w1_ref, w2_ref, w3_ref, w4_ref, o_ref):
    # x arrives f32 from HBM; cast to bf16 here (VPU work hidden under the fc1
    # MXU pass) instead of a separate wrapper-side XLA pad/convert pass.
    xb = x_ref[...].astype(jnp.bfloat16)
    # fc1 + LeakyReLU  (bf16 MXU inputs, f32 accumulation)
    h = _leaky_relu(jnp.dot(xb, w1_ref[...], preferred_element_type=jnp.float32))
    # fc2 + LeakyReLU
    h = _leaky_relu(jnp.dot(h.astype(jnp.bfloat16), w2_ref[...],
                            preferred_element_type=jnp.float32))
    # fc3 + LeakyReLU
    h = _leaky_relu(jnp.dot(h.astype(jnp.bfloat16), w3_ref[...],
                            preferred_element_type=jnp.float32))
    # fc4 (32 -> 1), produced lane-dense: contract the 32 features of (1,32) x
    # (tb,32) so the batch stays on the lane axis and the output block is (1, tb).
    logits = jax.lax.dot_general(
        w4_ref[...], h.astype(jnp.bfloat16),
        dimension_numbers=(((1,), (1,)), ((), ())),
        preferred_element_type=jnp.float32)                     # (1, tb)
    # sigmoid via EUP exp + approx reciprocal (division stays off the VALU path)
    o_ref[...] = pl.reciprocal(1.0 + jnp.exp(-logits), approx=True).astype(o_ref.dtype)


def prepare_params(w1t, w2t, w3t, w4):
    """One-time weight prep, hoisted out of the per-step forward.

    w1t/w2t/w3t: transposed (in, out) fc weights, f32.  w4: PyTorch-layout (1, 32).
    Returns bf16 copies ready for the kernel (done once, not per call)."""
    return (w1t.astype(jnp.bfloat16),
            w2t.astype(jnp.bfloat16),
            w3t.astype(jnp.bfloat16),
            w4.reshape(OUT, H3).astype(jnp.bfloat16))


@functools.partial(jax.jit, static_argnames=("tile_b",))
def discriminator_forward(x, w1b, w2b, w3b, w4b, *, tile_b=TILE_B):
    """x: (B, 784) f32.  w1b/w2b/w3b: bf16 (in, out) weights.  w4b: bf16 (1, 32).
    Returns (B, 1) f32 probabilities."""
    B = x.shape[0]
    tile_b = _round_up(tile_b, 256)
    # Batch tile: MXU-height aligned (multiple of 256), capped so there are at
    # least 2 grid steps when the batch allows it (keeps both v7x TCs busy), and
    # never larger than the (8-rounded) batch itself for tiny batches.
    tb = min(tile_b, _round_up(-(-B // 2), 256), _round_up(B, 8))
    num_tiles = -(-B // tb)

    out = pl.pallas_call(
        discriminator_kernel,
        # Lane-dense output: one (1, tb) row per tile of a single-row array.
        out_shape=jax.ShapeDtypeStruct((1, num_tiles * tb), jnp.float32),
        grid=(num_tiles,),
        in_specs=[
            # x streamed straight from HBM, tiled over batch.  (v6e: if the x DMA
            # is still exposed after sizing, sweep pipeline_mode=pl.Buffered(3).)
            pl.BlockSpec((tb, IN_FEATURES), lambda i: (i, 0)),
            # Weights: constant index maps -> fetched once, VMEM-resident.
            pl.BlockSpec((IN_FEATURES, H1), lambda i: (0, 0)),
            pl.BlockSpec((H1, H2), lambda i: (0, 0)),
            pl.BlockSpec((H2, H3), lambda i: (0, 0)),
            pl.BlockSpec((OUT, H3), lambda i: (0, 0)),
        ],
        out_specs=pl.BlockSpec((1, tb), lambda i: (0, i)),
        compiler_params=pltpu.CompilerParams(
            dimension_semantics=("parallel",),   # shard batch tiles across TCs
            # ~14 MiB used at tb=1024 (~24 MiB at tb=2048): safe on v5e/v6e's
            # 128 MiB and v7x's 64 MiB physical VMEM.  Bump if pushing tb >= 4096.
            vmem_limit_bytes=32 << 20,
        ),
    )(x, w1b, w2b, w3b, w4b)
    # Flat lane order == batch order; drop the padded tail of the last tile.
    return out.reshape(-1)[:B].reshape(B, OUT)


def init_params(key):
    """normal(0, 0.02) init matching Discriminator._init_weights().  PyTorch Linear
    weights are (out, in); fc1..fc3 are returned transposed (in, out) for the
    kernel's x @ W layout, fc4 kept as (1, 32)."""
    k1, k2, k3, k4 = jax.random.split(key, 4)
    std = 0.02
    w1 = std * jax.random.normal(k1, (H1, IN_FEATURES), jnp.float32)
    w2 = std * jax.random.normal(k2, (H2, H1), jnp.float32)
    w3 = std * jax.random.normal(k3, (H3, H2), jnp.float32)
    w4 = std * jax.random.normal(k4, (OUT, H3), jnp.float32)
    return w1.T, w2.T, w3.T, w4


def reference_forward(x, w1t, w2t, w3t, w4):
    h = jax.nn.leaky_relu(x @ w1t, LEAKY_SLOPE)
    h = jax.nn.leaky_relu(h @ w2t, LEAKY_SLOPE)
    h = jax.nn.leaky_relu(h @ w3t, LEAKY_SLOPE)
    return jax.nn.sigmoid(h @ w4.T)


if __name__ == "__main__":
    key = jax.random.PRNGKey(0)
    kx, kp = jax.random.split(key)
    # Not a multiple of the batch tile: exercises the partial last block and a
    # 2-step grid (both v7x TensorCores get work).
    B = 300
    x = jax.random.normal(kx, (B, IN_FEATURES), jnp.float32)
    f32_params = init_params(kp)
    kernel_params = prepare_params(*f32_params)   # bf16 casts hoisted: done once

    out = discriminator_forward(x, *kernel_params)
    out = jax.block_until_ready(out)

    ref = reference_forward(x, *f32_params)
    assert out.shape == (B, OUT)
    assert bool(jnp.all(jnp.isfinite(out)))
    # bf16 MXU inputs + approx-reciprocal sigmoid -> loosened tolerance vs f32 ref
    assert jnp.allclose(out, ref, atol=2e-2, rtol=2e-2), float(jnp.max(jnp.abs(out - ref)))
    print("KERNEL_OK")
</pallas_src>

<mosaic_0001>
module attributes {stable_mosaic.version = 11 : i64} {
  func.func @discriminator_kernel(%arg0: i32, %arg1: memref<256x784xf32, #tpu.memory_space<vmem>>, %arg2: memref<784x384xbf16, #tpu.memory_space<vmem>>, %arg3: memref<384x128xbf16, #tpu.memory_space<vmem>>, %arg4: memref<128x32xbf16, #tpu.memory_space<vmem>>, %arg5: memref<1x32xbf16, #tpu.memory_space<vmem>>, %arg6: memref<1x256xf32, #tpu.memory_space<vmem>>) attributes {dimension_semantics = [#tpu.dimension_semantics<parallel>], iteration_bounds = array<i64: 2>, scalar_prefetch = 0 : i64, scratch_operands = 0 : i64, tpu.core_type = #tpu.core_type<tc>, window_params = [{transform_indices = @transform_0, window_bounds = array<i64: 256, 784>}, {pipeline_mode = #tpu.pipeline_mode<synchronous>, transform_indices = @transform_1, window_bounds = array<i64: 784, 384>}, {pipeline_mode = #tpu.pipeline_mode<synchronous>, transform_indices = @transform_2, window_bounds = array<i64: 384, 128>}, {pipeline_mode = #tpu.pipeline_mode<synchronous>, transform_indices = @transform_3, window_bounds = array<i64: 128, 32>}, {pipeline_mode = #tpu.pipeline_mode<synchronous>, transform_indices = @transform_4, window_bounds = array<i64: 1, 32>}, {transform_indices = @transform_5, window_bounds = array<i64: 1, 256>}]} {
    %c0 = arith.constant 0 : index
    %c0_0 = arith.constant 0 : index
    %0 = vector.load %arg1[%c0, %c0_0] : memref<256x784xf32, #tpu.memory_space<vmem>>, vector<256x784xf32>
    %1 = arith.truncf %0 : vector<256x784xf32> to vector<256x784xbf16>
    %c0_1 = arith.constant 0 : index
    %c0_2 = arith.constant 0 : index
    %2 = vector.load %arg2[%c0_1, %c0_2] : memref<784x384xbf16, #tpu.memory_space<vmem>>, vector<784x384xbf16>
    %cst = arith.constant dense<0.000000e+00> : vector<256x384xf32>
    %3 = tpu.matmul %1, %2, %cst {dimension_numbers = #tpu.dot_dimension_numbers<[1], [0], [0], [1], [0, 0, 1, 1], [], []>} : vector<256x784xbf16>, vector<784x384xbf16>, vector<256x384xf32> -> vector<256x384xf32>
    %cst_3 = arith.constant 0.000000e+00 : f32
    %4 = vector.broadcast %cst_3 : f32 to vector<256x384xf32>
    %5 = arith.cmpf ogt, %3, %4 : vector<256x384xf32>
    %cst_4 = arith.constant 0.00999999977 : f32
    %6 = vector.broadcast %cst_4 : f32 to vector<256x384xf32>
    %7 = arith.mulf %6, %3 : vector<256x384xf32>
    %8 = arith.select %5, %3, %7 : vector<256x384xi1>, vector<256x384xf32>
    %9 = arith.truncf %8 : vector<256x384xf32> to vector<256x384xbf16>
    %c0_5 = arith.constant 0 : index
    %c0_6 = arith.constant 0 : index
    %10 = vector.load %arg3[%c0_5, %c0_6] : memref<384x128xbf16, #tpu.memory_space<vmem>>, vector<384x128xbf16>
    %cst_7 = arith.constant dense<0.000000e+00> : vector<256x128xf32>
    %11 = tpu.matmul %9, %10, %cst_7 {dimension_numbers = #tpu.dot_dimension_numbers<[1], [0], [0], [1], [0, 0, 1, 1], [], []>} : vector<256x384xbf16>, vector<384x128xbf16>, vector<256x128xf32> -> vector<256x128xf32>
    %cst_8 = arith.constant 0.000000e+00 : f32
    %12 = vector.broadcast %cst_8 : f32 to vector<256x128xf32>
    %13 = arith.cmpf ogt, %11, %12 : vector<256x128xf32>
    %cst_9 = arith.constant 0.00999999977 : f32
    %14 = vector.broadcast %cst_9 : f32 to vector<256x128xf32>
    %15 = arith.mulf %14, %11 : vector<256x128xf32>
    %16 = arith.select %13, %11, %15 : vector<256x128xi1>, vector<256x128xf32>
    %17 = arith.truncf %16 : vector<256x128xf32> to vector<256x128xbf16>
    %c0_10 = arith.constant 0 : index
    %c0_11 = arith.constant 0 : index
    %18 = vector.load %arg4[%c0_10, %c0_11] : memref<128x32xbf16, #tpu.memory_space<vmem>>, vector<128x32xbf16>
    %cst_12 = arith.constant dense<0.000000e+00> : vector<256x32xf32>
    %19 = tpu.matmul %17, %18, %cst_12 {dimension_numbers = #tpu.dot_dimension_numbers<[1], [0], [0], [1], [0, 0, 1, 1], [], []>} : vector<256x128xbf16>, vector<128x32xbf16>, vector<256x32xf32> -> vector<256x32xf32>
    %cst_13 = arith.constant 0.000000e+00 : f32
    %20 = vector.broadcast %cst_13 : f32 to vector<256x32xf32>
    %21 = arith.cmpf ogt, %19, %20 : vector<256x32xf32>
    %cst_14 = arith.constant 0.00999999977 : f32
    %22 = vector.broadcast %cst_14 : f32 to vector<256x32xf32>
    %23 = arith.mulf %22, %19 : vector<256x32xf32>
    %24 = arith.select %21, %19, %23 : vector<256x32xi1>, vector<256x32xf32>
    %c0_15 = arith.constant 0 : index
    %c0_16 = arith.constant 0 : index
    %25 = vector.load %arg5[%c0_15, %c0_16] : memref<1x32xbf16, #tpu.memory_space<vmem>>, vector<1x32xbf16>
    %26 = arith.truncf %24 : vector<256x32xf32> to vector<256x32xbf16>
    %cst_17 = arith.constant dense<0.000000e+00> : vector<1x256xf32>
    %27 = tpu.matmul %25, %26, %cst_17 {dimension_numbers = #tpu.dot_dimension_numbers<[1], [1], [0], [0], [0, 0, 1, 0], [], []>} : vector<1x32xbf16>, vector<256x32xbf16>, vector<1x256xf32> -> vector<1x256xf32>
    %cst_18 = arith.constant 0.000000e+00 : f32
    %28 = vector.broadcast %cst_18 : f32 to vector<1x256xf32>
    %29 = arith.subf %28, %27 : vector<1x256xf32>
    %30 = math.exp %29 : vector<1x256xf32>
    %cst_19 = arith.constant 1.000000e+00 : f32
    %31 = vector.broadcast %cst_19 : f32 to vector<1x256xf32>
    %32 = arith.addf %31, %30 : vector<1x256xf32>
    %33 = tpu.reciprocal %32 {approx = true} : vector<1x256xf32> -> vector<1x256xf32>
    %c0_20 = arith.constant 0 : index
    %c0_21 = arith.constant 0 : index
    %34 = vector.load %arg6[%c0_20, %c0_21] : memref<1x256xf32, #tpu.memory_space<vmem>>, vector<1x256xf32>
    tpu.vector_store %arg6[%c0_20, %c0_21], %33 {strides = array<i32>} : memref<1x256xf32, #tpu.memory_space<vmem>>, vector<1x256xf32>,
    return
  }
  func.func @transform_0(%arg0: i32) -> (i32, i32) {
    %c0_i32 = arith.constant 0 : i32
    %c0_i32_0 = arith.constant 0 : i32
    return %arg0, %c0_i32 : i32, i32
  }
  func.func @transform_1(%arg0: i32) -> (i32, i32) {
    %c0_i32 = arith.constant 0 : i32
    %c0_i32_0 = arith.constant 0 : i32
    %c0_i32_1 = arith.constant 0 : i32
    return %c0_i32, %c0_i32_0 : i32, i32
  }
  func.func @transform_2(%arg0: i32) -> (i32, i32) {
    %c0_i32 = arith.constant 0 : i32
    %c0_i32_0 = arith.constant 0 : i32
    %c0_i32_1 = arith.constant 0 : i32
    return %c0_i32, %c0_i32_0 : i32, i32
  }
  func.func @transform_3(%arg0: i32) -> (i32, i32) {
    %c0_i32 = arith.constant 0 : i32
    %c0_i32_0 = arith.constant 0 : i32
    %c0_i32_1 = arith.constant 0 : i32
    return %c0_i32, %c0_i32_0 : i32, i32
  }
  func.func @transform_4(%arg0: i32) -> (i32, i32) {
    %c0_i32 = arith.constant 0 : i32
    %c0_i32_0 = arith.constant 0 : i32
    %c0_i32_1 = arith.constant 0 : i32
    return %c0_i32, %c0_i32_0 : i32, i32
  }
  func.func @transform_5(%arg0: i32) -> (i32, i32) {
    %c0_i32 = arith.constant 0 : i32
    %c0_i32_0 = arith.constant 0 : i32
    return %c0_i32, %arg0 : i32, i32
  }
}

</mosaic_0001>

<llo_original>
// kernel: discriminator_forward.1
$region0: #{discriminator_forward.1}
  #allocation0 [shape = 'u32[]', space=smem, size = 0x4, offset = 0x4, fixed_abs, tag = 'smem constant byte address 0x4 - core index']
  #allocation1 [shape = 'u32[144,128]{1,0:T(1,128)}', space=vmem, size = 0x12000, scoped, tag = 'internal scratch']
  %s0 = inlined_call_operand.hbm [shape: f32[300,784], index: 0, kind: input, shape index: {}]
  %s1 = inlined_call_operand.hbm [shape: bf16[784,384], index: 1, kind: input, shape index: {}]
  %s2 = inlined_call_operand.hbm [shape: bf16[384,128], index: 2, kind: input, shape index: {}]
  %s3 = inlined_call_operand.vmem [shape: bf16[128,32], index: 3, kind: input, shape index: {}]
  %s4 = inlined_call_operand.hbm [shape: bf16[1,32], index: 4, kind: input, shape index: {}]
  %s5 = inlined_call_operand.vmem [shape: f32[1,512], index: 5, kind: output, shape index: {}]
  %s6 = sld [smem:[#allocation0]]
  $region69: #{discriminator_forward.1} parent=0
    _
  %s8 = ssub.s32 1, %s6
  %s9 = scalar_select 0, %s8, %s6
  $region1: #{discriminator_forward.1} parent=0
    #allocation2 [shape = 'u8[1835008]{0}', space=vmem, size = 0x1c0000, scoped, tag = 'input window, operand 0']
    #allocation3 [shape = 's32[2]{0}', space=sflag, size = 0x8, scoped, tag = 'scoped memory for discriminator_forward.1']
    #allocation4 [shape = 'u8[602112]{0}', space=vmem, size = 0x93000, scoped, tag = 'input window, operand 1, single buffered']
    #allocation5 [shape = 's32[1]{0}', space=sflag, size = 0x4, scoped, tag = 'scoped memory for discriminator_forward.1']
    #allocation6 [shape = 'u8[98304]{0}', space=vmem, size = 0x18000, scoped, tag = 'input window, operand 2, single buffered']
    #allocation7 [shape = 'u8[512]{0}', space=vmem, size = 0x400, scoped, tag = 'input window, operand 4, single buffered']
    #allocation8 [shape = 's32[1]{0}', space=sflag, size = 0x4, scoped, tag = 'scoped memory for discriminator_forward.1']
    %10 = vsyncpa [#allocation3], 0
    %s11 = scalar_lea.sflag [#allocation3], 1
    %12 = vsyncpa %s11, 0
    %13 = vsyncpa [#allocation5], 0
    %14 = vsyncpa [#allocation8], 0
    loop: start=0, step=1, limit=4
    $region2: #{discriminator_forward.1} parent=1 // loop_pre_header
      _
    $region3: #{discriminator_forward.1} parent=1 // loop_header
      %s16 = sphi 0, %s20
      %p17 = scmp.ge.s32.totalorder %s16, 4
      %s26 = sphi 0, %s28
      %s29 = sphi 0, %s26
      %s30 = sphi 0, %s29
      %s46 = sphi 0, %s30
      %s50 = sphi 0, %s50
      %s52 = sphi 0, %s50
      %s53 = sphi 0, %s52
      %s67 = sphi 0, %s53
      %s71 = sphi 0, %s71
      %s73 = sphi 0, %s71
      %s74 = sphi 0, %s73
      %s88 = sphi 0, %s74
      %s92 = sphi 0, %s92
      %s94 = sphi 0, %s92
      %s95 = sphi 0, %s94
      %s109 = sphi 0, %s95
      %s113 = sphi 0, %s113
      %s115 = sphi 0, %s113
      %s116 = sphi 0, %s115
      %s130 = sphi 0, %s116
      %s136 = sphi 0, %s138
      %s139 = sphi 0, %s136
      %s140 = sphi 0, %s139
      %s156 = sphi 0, %s140
    $region4: #{discriminator_forward.1} parent=1 // loop_header_branch
      %19 = sbr.rel (%p17) target = $region8
    $region5: #{discriminator_forward.1} parent=1 // loop_body
      %s21 = ssub.s32 %s16, 1
      %s22 = ssub.s32 %s16, 2
      %s23 = sadd.s32 %s16, 1
      %s24 = ssub.s32 %s16, %s23
      %p25 = scmp.eq.s32.totalorder %s24, 0
      %s27 = sadd.s32 %s26, 1
      %s28 = scalar_select %p25, %s26, %s27
      %p31 = pneg %p25
      %p32 = scmp.eq.s32.totalorder %s16, 1
      %p33 = por %p31, %p32
      %p34 = scmp.ne.s32.totalorder %s26, %s29
      %p35 = scmp.eq.s32.totalorder %s16, 0
      %p36 = por %p34, %p35
      %p37 = scmp.ne.s32.totalorder %s26, %s29
      %p38 = scmp.eq.s32.totalorder %s21, 1
      %p39 = por %p37, %p38
      %p40 = scmp.ne.s32.totalorder %s29, %s30
      %p41 = scmp.eq.s32.totalorder %s21, 0
      %p42 = por %p40, %p41
      %p43 = scmp.ne.s32.totalorder %s29, %s30
      %p44 = scmp.eq.s32.totalorder %s22, 1
      %p45 = por %p43, %p44
      %p47 = scmp.ne.s32.totalorder %s30, %s46
      %p48 = scmp.eq.s32.totalorder %s22, 0
      %p49 = por %p47, %p48
      %s51 = sadd.s32 %s50, 1
      %p54 = scmp.eq.s32.totalorder %s16, 1
      %p55 = scmp.ne.s32.totalorder %s50, %s52
      %p56 = scmp.eq.s32.totalorder %s16, 0
      %p57 = por %p55, %p56
      %p58 = scmp.ne.s32.totalorder %s50, %s52
      %p59 = scmp.eq.s32.totalorder %s21, 1
      %p60 = por %p58, %p59
      %p61 = scmp.ne.s32.totalorder %s52, %s53
      %p62 = scmp.eq.s32.totalorder %s21, 0
      %p63 = por %p61, %p62
      %p64 = scmp.ne.s32.totalorder %s52, %s53
      %p65 = scmp.eq.s32.totalorder %s22, 1
      %p66 = por %p64, %p65
      %p68 = scmp.ne.s32.totalorder %s53, %s67
      %p69 = scmp.eq.s32.totalorder %s22, 0
      %p70 = por %p68, %p69
      %s72 = sadd.s32 %s71, 1
      %p75 = scmp.eq.s32.totalorder %s16, 1
      %p76 = scmp.ne.s32.totalorder %s71, %s73
      %p77 = scmp.eq.s32.totalorder %s16, 0
      %p78 = por %p76, %p77
      %p79 = scmp.ne.s32.totalorder %s71, %s73
      %p80 = scmp.eq.s32.totalorder %s21, 1
      %p81 = por %p79, %p80
      %p82 = scmp.ne.s32.totalorder %s73, %s74
      %p83 = scmp.eq.s32.totalorder %s21, 0
      %p84 = por %p82, %p83
      %p85 = scmp.ne.s32.totalorder %s73, %s74
      %p86 = scmp.eq.s32.totalorder %s22, 1
      %p87 = por %p85, %p86
      %p89 = scmp.ne.s32.totalorder %s74, %s88
      %p90 = scmp.eq.s32.totalorder %s22, 0
      %p91 = por %p89, %p90
      %s93 = sadd.s32 %s92, 1
      %p96 = scmp.eq.s32.totalorder %s16, 1
      %p97 = scmp.ne.s32.totalorder %s92, %s94
      %p98 = scmp.eq.s32.totalorder %s16, 0
      %p99 = por %p97, %p98
      %p100 = scmp.ne.s32.totalorder %s92, %s94
      %p101 = scmp.eq.s32.totalorder %s21, 1
      %p102 = por %p100, %p101
      %p103 = scmp.ne.s32.totalorder %s94, %s95
      %p104 = scmp.eq.s32.totalorder %s21, 0
      %p105 = por %p103, %p104
      %p106 = scmp.ne.s32.totalorder %s94, %s95
      %p107 = scmp.eq.s32.totalorder %s22, 1
      %p108 = por %p106, %p107
      %p110 = scmp.ne.s32.totalorder %s95, %s109
      %p111 = scmp.eq.s32.totalorder %s22, 0
      %p112 = por %p110, %p111
      %s114 = sadd.s32 %s113, 1
      %p117 = scmp.eq.s32.totalorder %s16, 1
      %p118 = scmp.ne.s32.totalorder %s113, %s115
      %p119 = scmp.eq.s32.totalorder %s16, 0
      %p120 = por %p118, %p119
      %p121 = scmp.ne.s32.totalorder %s113, %s115
      %p122 = scmp.eq.s32.totalorder %s21, 1
      %p123 = por %p121, %p122
      %p124 = scmp.ne.s32.totalorder %s115, %s116
      %p125 = scmp.eq.s32.totalorder %s21, 0
      %p126 = por %p124, %p125
      %p127 = scmp.ne.s32.totalorder %s115, %s116
      %p128 = scmp.eq.s32.totalorder %s22, 1
      %p129 = por %p127, %p128
      %p131 = scmp.ne.s32.totalorder %s116, %s130
      %p132 = scmp.eq.s32.totalorder %s22, 0
      %p133 = por %p131, %p132
      %s134 = ssub.s32 %s16, %s23
      %p135 = scmp.eq.s32.totalorder %s134, 0
      %s137 = sadd.s32 %s136, 1
      %s138 = scalar_select %p135, %s136, %s137
      %p141 = pneg %p135
      %p142 = scmp.eq.s32.totalorder %s16, 1
      %p143 = por %p141, %p142
      %p144 = scmp.ne.s32.totalorder %s136, %s139
      %p145 = scmp.eq.s32.totalorder %s16, 0
      %p146 = por %p144, %p145
      %p147 = scmp.ne.s32.totalorder %s136, %s139
      %p148 = scmp.eq.s32.totalorder %s21, 1
      %p149 = por %p147, %p148
      %p150 = scmp.ne.s32.totalorder %s139, %s140
      %p151 = scmp.eq.s32.totalorder %s21, 0
      %p152 = por %p150, %p151
      %p153 = scmp.ne.s32.totalorder %s139, %s140
      %p154 = scmp.eq.s32.totalorder %s22, 1
      %p155 = por %p153, %p154
      %p157 = scmp.ne.s32.totalorder %s140, %s156
      %p158 = scmp.eq.s32.totalorder %s22, 0
      %p159 = por %p157, %p158
      %p160 = scmp.le.s32.totalorder 1, %s16
      %p161 = scmp.lt.s32.totalorder %s16, 3
      %p162 = pnand %p160, %p161
      %p163 = pneg %p162
      // Predicated region
      $region9: #{discriminator_forward.1} parent=5 // pred_check
        _
      $region10: #{discriminator_forward.1} parent=5 // pred_check_branch
        %165 = sbr.rel (%p162) target = $region12
      $region11: #{discriminator_forward.1} parent=5 // pred_region
        %s166 = ssub.s32 %s16, 1
        // Predicated region
        $region13: #{discriminator_forward.1} parent=11 // pred_check
          %p167 = pneg %p63
        $region14: #{discriminator_forward.1} parent=11 // pred_check_branch
          %169 = sbr.rel (%p167) target = $region16
        $region15: #{discriminator_forward.1} parent=11 // pred_region
          %s171 = ssub.s32 18816, 18816
          %172 = vsyncadd [#allocation5], %s171
          %s173 = sshll.u32 [#allocation4], 4
          %s174 = int_to_ptr.vmem [resolvable:$true] %s173
          %179 = dma.hbm_to_vmem [thread:$0]  %s1, 18816, %s174, [#allocation5], 192, 192, 12
        $region16: #{discriminator_forward.1} parent=11 // pred_fallthru
          _
        // Predicated region
        $region17: #{discriminator_forward.1} parent=11 // pred_check
          %p180 = pneg %p84
        $region18: #{discriminator_forward.1} parent=11 // pred_check_branch
          %182 = sbr.rel (%p180) target = $region20
        $region19: #{discriminator_forward.1} parent=11 // pred_region
          %s184 = ssub.s32 3072, 3072
          %185 = vsyncadd [#allocation5], %s184
          %s186 = sshll.u32 [#allocation6], 4
          %s187 = int_to_ptr.vmem [resolvable:$true] %s186
          %192 = dma.hbm_to_vmem [thread:$0]  %s2, 3072, %s187, [#allocation5], 64, 64, 4
        $region20: #{discriminator_forward.1} parent=11 // pred_fallthru
          _
        // Predicated region
        $region21: #{discriminator_forward.1} parent=11 // pred_check
          %p193 = pneg %p105
        $region22: #{discriminator_forward.1} parent=11 // pred_check_branch
          %195 = sbr.rel (%p193) target = $region24
        $region23: #{discriminator_forward.1} parent=11 // pred_region
          _
        $region24: #{discriminator_forward.1} parent=11 // pred_fallthru
          _
        // Predicated region
        $region25: #{discriminator_forward.1} parent=11 // pred_check
          %p196 = pneg %p126
        $region26: #{discriminator_forward.1} parent=11 // pred_check_branch
          %198 = sbr.rel (%p196) target = $region28
        $region27: #{discriminator_forward.1} parent=11 // pred_region
          %s200 = ssub.s32 16, 16
          %201 = vsyncadd [#allocation8], %s200
          %s203 = sshll.u32 [#allocation7], 4
          %s204 = int_to_ptr.vmem [resolvable:$true] %s203
          %206 = dma.hbm_to_vmem [thread:$0]  %s4, 16, %s204, [#allocation8]
        $region28: #{discriminator_forward.1} parent=11 // pred_fallthru
          _
      $region12: #{discriminator_forward.1} parent=5 // pred_fallthru
        _
      %p207 = scmp.lt.s32.totalorder %s16, 2
      // Predicated region
      $region29: #{discriminator_forward.1} parent=5 // pred_check
        %p208 = pneg %p207
      $region30: #{discriminator_forward.1} parent=5 // pred_check_branch
        %210 = sbr.rel (%p208) target = $region32
      $region31: #{discriminator_forward.1} parent=5 // pred_region
        // Predicated region
        $region33: #{discriminator_forward.1} parent=31 // pred_check
          %p211 = pneg %p36
        $region34: #{discriminator_forward.1} parent=31 // pred_check_branch
          %213 = sbr.rel (%p211) target = $region36
        $region35: #{discriminator_forward.1} parent=31 // pred_region
          %s214 = sand.u32 %s26, 1
          %s215 = scalar_lea.sflag [#allocation3], %s214
          %s216 = sand.u32 %s26, 1
          %s217 = smul.addr %s216, 1792
          %s218 = scalar_lea.vmem [#allocation2], %s217
          %s219 = smul.u32 32, %s16
          %s220 = ssub.s32 38, %s219
          %p221 = scmp.lt.s32.totalorder %s220, 32
          %s222 = scalar_select %p221, %s220, 32
          %s223 = smul.u32 128, %s222
          %s224 = smul.u32 %s223, 7
          %s226 = ssub.s32 28672, %s224
          %227 = vsyncadd %s215, %s226
          %p228 = scmp.ne.s32.totalorder 0, %s224
          %s229 = smul.addr %s219, 7
          %s230 = smul.addr %s229, 128
          %s231 = scalar_lea.hbm %s0, %s230
          %s232 = smul.u32 56, %s222
          %s233 = sshll.u32 %s218, 4
          %s234 = int_to_ptr.vmem [resolvable:$true] %s233
          %s235 = sshll.u32 %s232, 4
          %239 = dma.hbm_to_vmem [thread:$0]  (%p228), %s231, %s235, %s234, %s215, 896, 896, 56
        $region36: #{discriminator_forward.1} parent=31 // pred_fallthru
          _
      $region32: #{discriminator_forward.1} parent=5 // pred_fallthru
        _
      %p240 = scmp.le.s32.totalorder 1, %s16
      %p241 = scmp.lt.s32.totalorder %s16, 3
      %p242 = pnand %p240, %p241
      %p243 = pneg %p242
      // Predicated region
      $region37: #{discriminator_forward.1} parent=5 // pred_check
        _
      $region38: #{discriminator_forward.1} parent=5 // pred_check_branch
        %245 = sbr.rel (%p242) target = $region40
      $region39: #{discriminator_forward.1} parent=5 // pred_region
        %s246 = ssub.s32 %s16, 1
        %s247 = sand.u32 %s29, 1
        %s248 = scalar_lea.sflag [#allocation3], %s247
        %s249 = sand.u32 %s29, 1
        %s250 = smul.addr %s249, 1792
        %s251 = scalar_lea.vmem [#allocation2], %s250
        // Predicated region
        $region41: #{discriminator_forward.1} parent=39 // pred_check
          %p252 = pneg %p42
        $region42: #{discriminator_forward.1} parent=39 // pred_check_branch
          %254 = sbr.rel (%p252) target = $region44
        $region43: #{discriminator_forward.1} parent=39 // pred_region
          %255 = dma.done %s248, 28672
        $region44: #{discriminator_forward.1} parent=39 // pred_fallthru
          _
        // Predicated region
        $region45: #{discriminator_forward.1} parent=39 // pred_check
          %p256 = pneg %p63
        $region46: #{discriminator_forward.1} parent=39 // pred_check_branch
          %258 = sbr.rel (%p256) target = $region48
        $region47: #{discriminator_forward.1} parent=39 // pred_region
          %259 = dma.done [#allocation5], 18816
        $region48: #{discriminator_forward.1} parent=39 // pred_fallthru
          _
        // Predicated region
        $region49: #{discriminator_forward.1} parent=39 // pred_check
          %p260 = pneg %p84
        $region50: #{discriminator_forward.1} parent=39 // pred_check_branch
          %262 = sbr.rel (%p260) target = $region52
        $region51: #{discriminator_forward.1} parent=39 // pred_region
          %263 = dma.done [#allocation5], 3072
        $region52: #{discriminator_forward.1} parent=39 // pred_fallthru
          _
        // Predicated region
        $region53: #{discriminator_forward.1} parent=39 // pred_check
          %p264 = pneg %p126
        $region54: #{discriminator_forward.1} parent=39 // pred_check_branch
          %266 = sbr.rel (%p264) target = $region56
        $region55: #{discriminator_forward.1} parent=39 // pred_region
          %267 = dma.done [#allocation8], 16
        $region56: #{discriminator_forward.1} parent=39 // pred_fallthru
          _
        %s268 = sand.u32 %s29, 1
        %s269 = scalar_lea.sflag [#allocation3], %s268
        %s270 = sand.u32 %s29, 1
        %s271 = smul.addr %s270, 1792
        %s272 = scalar_lea.vmem [#allocation2], %s271
        %p273 = pneg %p42
        %p274 = pneg %p39
        %p275 = pneg %p63
        %p276 = pneg %p60
        %p277 = pneg %p84
        %p278 = pneg %p81
        %p279 = pneg %p105
        %p280 = pneg %p102
        %p281 = pneg %p126
        %p282 = pneg %p123
        %p283 = pneg %p152
        %p284 = pneg %p149
        %s285 = smul.u32 2, %s21
        %p286 = scmp.lt.s32.totalorder %s285, 3
        %s287 = scalar_select %p286, %s285, 3
        %s288 = scalar_lea.vmem %s5, %s287
        %s289 = smul.u32 32, %s21
        %s290 = ssub.s32 38, %s289
        %p291 = scmp.lt.s32.totalorder %s290, 32
        %s292 = scalar_select %p291, %s290, 32
        %s293 = smul.u32 128, %s292
        %s294 = smul.u32 %s293, 7
        %s295 = smul.u32 2, %s21
        %p296 = scmp.lt.s32.totalorder %s295, 3
        %s297 = scalar_select %p296, %s295, 3
        %s298 = scalar_lea.vmem %s5, %s297
        %s299 = smul.u32 2, %s21
        %v301 = vld [vmem:[%s251] sm:$0xff]
        %v302 = vld [vmem:[%s251 + $0x8] sm:$0xff]
        %v303 = vld [vmem:[%s251 + $0x10] sm:$0xff]
        %v304 = vld [vmem:[%s251 + $0x18] sm:$0xff]
        %v305 = vld [vmem:[%s251 + $0x20] sm:$0xff]
        %v306 = vld [vmem:[%s251 + $0x28] sm:$0xff]
        %v307 = vld [vmem:[%s251 + $0x30] sm:$0xff]
        %v308 = vld [vmem:[%s251 + $0x38] sm:$0xff]
        %v309 = vld [vmem:[%s251 + $0x40] sm:$0xff]
        %v310 = vld [vmem:[%s251 + $0x48] sm:$0xff]
        %v311 = vld [vmem:[%s251 + $0x50] sm:$0xff]
        %v312 = vld [vmem:[%s251 + $0x58] sm:$0xff]
        %v313 = vld [vmem:[%s251 + $0x60] sm:$0xff]
        %v314 = vld [vmem:[%s251 + $0x68] sm:$0xff]
        %v315 = vld [vmem:[%s251 + $0x70] sm:$0xff]
        %v316 = vld [vmem:[%s251 + $0x78] sm:$0xff]
        %v317 = vld [vmem:[%s251 + $0x80] sm:$0xff]
        %v318 = vld [vmem:[%s251 + $0x88] sm:$0xff]
        %v319 = vld [vmem:[%s251 + $0x90] sm:$0xff]
        %v320 = vld [vmem:[%s251 + $0x98] sm:$0xff]
        %v321 = vld [vmem:[%s251 + $0xa0] sm:$0xff]
        %v322 = vld [vmem:[%s251 + $0xa8] sm:$0xff]
        %v323 = vld [vmem:[%s251 + $0xb0] sm:$0xff]
        %v324 = vld [vmem:[%s251 + $0xb8] sm:$0xff]
        %v325 = vld [vmem:[%s251 + $0xc0] sm:$0xff]
        %v326 = vld [vmem:[%s251 + $0xc8] sm:$0xff]
        %v327 = vld [vmem:[%s251 + $0xd0] sm:$0xff]
        %v328 = vld [vmem:[%s251 + $0xd8] sm:$0xff]
        %v329 = vld [vmem:[%s251 + $0xe0] sm:$0xff]
        %v330 = vld [vmem:[%s251 + $0xe8] sm:$0xff]
        %v331 = vld [vmem:[%s251 + $0xf0] sm:$0xff]
        %v332 = vld [vmem:[%s251 + $0xf8] sm:$0xff]
        %v333 = vld [vmem:[%s251 + $0x100] sm:$0xff]
        %v334 = vld [vmem:[%s251 + $0x108] sm:$0xff]
        %v335 = vld [vmem:[%s251 + $0x110] sm:$0xff]
        %v336 = vld [vmem:[%s251 + $0x118] sm:$0xff]
        %v337 = vld [vmem:[%s251 + $0x120] sm:$0xff]
        %v338 = vld [vmem:[%s251 + $0x128] sm:$0xff]
        %v339 = vld [vmem:[%s251 + $0x130] sm:$0xff]
        %v340 = vld [vmem:[%s251 + $0x138] sm:$0xff]
        %v341 = vld [vmem:[%s251 + $0x140] sm:$0xff]
        %v342 = vld [vmem:[%s251 + $0x148] sm:$0xff]
        %v343 = vld [vmem:[%s251 + $0x150] sm:$0xff]
        %v344 = vld [vmem:[%s251 + $0x158] sm:$0xff]
        %v345 = vld [vmem:[%s251 + $0x160] sm:$0xff]
        %v346 = vld [vmem:[%s251 + $0x168] sm:$0xff]
        %v347 = vld [vmem:[%s251 + $0x170] sm:$0xff]
        %v348 = vld [vmem:[%s251 + $0x178] sm:$0xff]
        %v349 = vld [vmem:[%s251 + $0x180] sm:$0xff]
        %v350 = vld [vmem:[%s251 + $0x188] sm:$0xff]
        %v351 = vld [vmem:[%s251 + $0x190] sm:$0xff]
        %v352 = vld [vmem:[%s251 + $0x198] sm:$0xff]
        %v353 = vld [vmem:[%s251 + $0x1a0] sm:$0xff]
        %v354 = vld [vmem:[%s251 + $0x1a8] sm:$0xff]
        %v355 = vld [vmem:[%s251 + $0x1b0] sm:$0xff]
        %v356 = vld [vmem:[%s251 + $0x1b8] sm:$0xff]
        %v357 = vld [vmem:[%s251 + $0x1c0] sm:$0xff]
        %v358 = vld [vmem:[%s251 + $0x1c8] sm:$0xff]
        %v359 = vld [vmem:[%s251 + $0x1d0] sm:$0xff]
        %v360 = vld [vmem:[%s251 + $0x1d8] sm:$0xff]
        %v361 = vld [vmem:[%s251 + $0x1e0] sm:$0xff]
        %v362 = vld [vmem:[%s251 + $0x1e8] sm:$0xff]
        %v363 = vld [vmem:[%s251 + $0x1f0] sm:$0xff]
        %v364 = vld [vmem:[%s251 + $0x1f8] sm:$0xff]
        %v365 = vld [vmem:[%s251 + $0x200] sm:$0xff]
        %v366 = vld [vmem:[%s251 + $0x208] sm:$0xff]
        %v367 = vld [vmem:[%s251 + $0x210] sm:$0xff]
        %v368 = vld [vmem:[%s251 + $0x218] sm:$0xff]
        %v369 = vld [vmem:[%s251 + $0x220] sm:$0xff]
        %v370 = vld [vmem:[%s251 + $0x228] sm:$0xff]
        %v371 = vld [vmem:[%s251 + $0x230] sm:$0xff]
        %v372 = vld [vmem:[%s251 + $0x238] sm:$0xff]
        %v373 = vld [vmem:[%s251 + $0x240] sm:$0xff]
        %v374 = vld [vmem:[%s251 + $0x248] sm:$0xff]
        %v375 = vld [vmem:[%s251 + $0x250] sm:$0xff]
        %v376 = vld [vmem:[%s251 + $0x258] sm:$0xff]
        %v377 = vld [vmem:[%s251 + $0x260] sm:$0xff]
        %v378 = vld [vmem:[%s251 + $0x268] sm:$0xff]
        %v379 = vld [vmem:[%s251 + $0x270] sm:$0xff]
        %v380 = vld [vmem:[%s251 + $0x278] sm:$0xff]
        %v381 = vld [vmem:[%s251 + $0x280] sm:$0xff]
        %v382 = vld [vmem:[%s251 + $0x288] sm:$0xff]
        %v383 = vld [vmem:[%s251 + $0x290] sm:$0xff]
        %v384 = vld [vmem:[%s251 + $0x298] sm:$0xff]
        %v385 = vld [vmem:[%s251 + $0x2a0] sm:$0xff]
        %v386 = vld [vmem:[%s251 + $0x2a8] sm:$0xff]
        %v387 = vld [vmem:[%s251 + $0x2b0] sm:$0xff]
        %v388 = vld [vmem:[%s251 + $0x2b8] sm:$0xff]
        %v389 = vld [vmem:[%s251 + $0x2c0] sm:$0xff]
        %v390 = vld [vmem:[%s251 + $0x2c8] sm:$0xff]
        %v391 = vld [vmem:[%s251 + $0x2d0] sm:$0xff]
        %v392 = vld [vmem:[%s251 + $0x2d8] sm:$0xff]
        %v393 = vld [vmem:[%s251 + $0x2e0] sm:$0xff]
        %v394 = vld [vmem:[%s251 + $0x2e8] sm:$0xff]
        %v395 = vld [vmem:[%s251 + $0x2f0] sm:$0xff]
        %v396 = vld [vmem:[%s251 + $0x2f8] sm:$0xff]
        %v397 = vld [vmem:[%s251 + $0x300] sm:$0xff]
        %v398 = vld [vmem:[%s251 + $0x308] sm:$0xff]
        %v399 = vld [vmem:[%s251 + $0x310] sm:$0xff]
        %v400 = vld [vmem:[%s251 + $0x318] sm:$0xff]
        %v401 = vld [vmem:[%s251 + $0x320] sm:$0xff]
        %v402 = vld [vmem:[%s251 + $0x328] sm:$0xff]
        %v403 = vld [vmem:[%s251 + $0x330] sm:$0xff]
        %v404 = vld [vmem:[%s251 + $0x338] sm:$0xff]
        %v405 = vld [vmem:[%s251 + $0x340] sm:$0xff]
        %v406 = vld [vmem:[%s251 + $0x348] sm:$0xff]
        %v407 = vld [vmem:[%s251 + $0x350] sm:$0xff]
        %v408 = vld [vmem:[%s251 + $0x358] sm:$0xff]
        %v409 = vld [vmem:[%s251 + $0x360] sm:$0xff]
        %v410 = vld [vmem:[%s251 + $0x368] sm:$0xff]
        %v411 = vld [vmem:[%s251 + $0x370] sm:$0xff]
        %v412 = vld [vmem:[%s251 + $0x378] sm:$0xff]
        %v413 = vld [vmem:[%s251 + $0x380] sm:$0xff]
        %v414 = vld [vmem:[%s251 + $0x388] sm:$0xff]
        %v415 = vld [vmem:[%s251 + $0x390] sm:$0xff]
        %v416 = vld [vmem:[%s251 + $0x398] sm:$0xff]
        %v417 = vld [vmem:[%s251 + $0x3a0] sm:$0xff]
        %v418 = vld [vmem:[%s251 + $0x3a8] sm:$0xff]
        %v419 = vld [vmem:[%s251 + $0x3b0] sm:$0xff]
        %v420 = vld [vmem:[%s251 + $0x3b8] sm:$0xff]
        %v421 = vld [vmem:[%s251 + $0x3c0] sm:$0xff]
        %v422 = vld [vmem:[%s251 + $0x3c8] sm:$0xff]
        %v423 = vld [vmem:[%s251 + $0x3d0] sm:$0xff]
        %v424 = vld [vmem:[%s251 + $0x3d8] sm:$0xff]
        %v425 = vld [vmem:[%s251 + $0x3e0] sm:$0xff]
        %v426 = vld [vmem:[%s251 + $0x3e8] sm:$0xff]
        %v427 = vld [vmem:[%s251 + $0x3f0] sm:$0xff]
        %v428 = vld [vmem:[%s251 + $0x3f8] sm:$0xff]
        %v429 = vld [vmem:[%s251 + $0x400] sm:$0xff]
        %v430 = vld [vmem:[%s251 + $0x408] sm:$0xff]
        %v431 = vld [vmem:[%s251 + $0x410] sm:$0xff]
        %v432 = vld [vmem:[%s251 + $0x418] sm:$0xff]
        %v433 = vld [vmem:[%s251 + $0x420] sm:$0xff]
        %v434 = vld [vmem:[%s251 + $0x428] sm:$0xff]
        %v435 = vld [vmem:[%s251 + $0x430] sm:$0xff]
        %v436 = vld [vmem:[%s251 + $0x438] sm:$0xff]
        %v437 = vld [vmem:[%s251 + $0x440] sm:$0xff]
        %v438 = vld [vmem:[%s251 + $0x448] sm:$0xff]
        %v439 = vld [vmem:[%s251 + $0x450] sm:$0xff]
        %v440 = vld [vmem:[%s251 + $0x458] sm:$0xff]
        %v441 = vld [vmem:[%s251 + $0x460] sm:$0xff]
        %v442 = vld [vmem:[%s251 + $0x468] sm:$0xff]
        %v443 = vld [vmem:[%s251 + $0x470] sm:$0xff]
        %v444 = vld [vmem:[%s251 + $0x478] sm:$0xff]
        %v445 = vld [vmem:[%s251 + $0x480] sm:$0xff]
        %v446 = vld [vmem:[%s251 + $0x488] sm:$0xff]
        %v447 = vld [vmem:[%s251 + $0x490] sm:$0xff]
        %v448 = vld [vmem:[%s251 + $0x498] sm:$0xff]
        %v449 = vld [vmem:[%s251 + $0x4a0] sm:$0xff]
        %v450 = vld [vmem:[%s251 + $0x4a8] sm:$0xff]
        %v451 = vld [vmem:[%s251 + $0x4b0] sm:$0xff]
        %v452 = vld [vmem:[%s251 + $0x4b8] sm:$0xff]
        %v453 = vld [vmem:[%s251 + $0x4c0] sm:$0xff]
        %v454 = vld [vmem:[%s251 + $0x4c8] sm:$0xff]
        %v455 = vld [vmem:[%s251 + $0x4d0] sm:$0xff]
        %v456 = vld [vmem:[%s251 + $0x4d8] sm:$0xff]
        %v457 = vld [vmem:[%s251 + $0x4e0] sm:$0xff]
        %v458 = vld [vmem:[%s251 + $0x4e8] sm:$0xff]
        %v459 = vld [vmem:[%s251 + $0x4f0] sm:$0xff]
        %v460 = vld [vmem:[%s251 + $0x4f8] sm:$0xff]
        %v461 = vld [vmem:[%s251 + $0x500] sm:$0xff]
        %v462 = vld [vmem:[%s251 + $0x508] sm:$0xff]
        %v463 = vld [vmem:[%s251 + $0x510] sm:$0xff]
        %v464 = vld [vmem:[%s251 + $0x518] sm:$0xff]
        %v465 = vld [vmem:[%s251 + $0x520] sm:$0xff]
        %v466 = vld [vmem:[%s251 + $0x528] sm:$0xff]
        %v467 = vld [vmem:[%s251 + $0x530] sm:$0xff]
        %v468 = vld [vmem:[%s251 + $0x538] sm:$0xff]
        %v469 = vld [vmem:[%s251 + $0x540] sm:$0xff]
        %v470 = vld [vmem:[%s251 + $0x548] sm:$0xff]
        %v471 = vld [vmem:[%s251 + $0x550] sm:$0xff]
        %v472 = vld [vmem:[%s251 + $0x558] sm:$0xff]
        %v473 = vld [vmem:[%s251 + $0x560] sm:$0xff]
        %v474 = vld [vmem:[%s251 + $0x568] sm:$0xff]
        %v475 = vld [vmem:[%s251 + $0x570] sm:$0xff]
        %v476 = vld [vmem:[%s251 + $0x578] sm:$0xff]
        %v477 = vld [vmem:[%s251 + $0x580] sm:$0xff]
        %v478 = vld [vmem:[%s251 + $0x588] sm:$0xff]
        %v479 = vld [vmem:[%s251 + $0x590] sm:$0xff]
        %v480 = vld [vmem:[%s251 + $0x598] sm:$0xff]
        %v481 = vld [vmem:[%s251 + $0x5a0] sm:$0xff]
        %v482 = vld [vmem:[%s251 + $0x5a8] sm:$0xff]
        %v483 = vld [vmem:[%s251 + $0x5b0] sm:$0xff]
        %v484 = vld [vmem:[%s251 + $0x5b8] sm:$0xff]
        %v485 = vld [vmem:[%s251 + $0x5c0] sm:$0xff]
        %v486 = vld [vmem:[%s251 + $0x5c8] sm:$0xff]
        %v487 = vld [vmem:[%s251 + $0x5d0] sm:$0xff]
        %v488 = vld [vmem:[%s251 + $0x5d8] sm:$0xff]
        %v489 = vld [vmem:[%s251 + $0x5e0] sm:$0xff]
        %v490 = vld [vmem:[%s251 + $0x5e8] sm:$0xff]
        %v491 = vld [vmem:[%s251 + $0x5f0] sm:$0xff]
        %v492 = vld [vmem:[%s251 + $0x5f8] sm:$0xff]
        %v493 = vld [vmem:[%s251 + $0x600] sm:$0xff]
        %v494 = vld [vmem:[%s251 + $0x608] sm:$0xff]
        %v495 = vld [vmem:[%s251 + $0x610] sm:$0xff]
        %v496 = vld [vmem:[%s251 + $0x618] sm:$0xff]
        %v497 = vld [vmem:[%s251 + $0x620] sm:$0xff]
        %v498 = vld [vmem:[%s251 + $0x628] sm:$0xff]
        %v499 = vld [vmem:[%s251 + $0x630] sm:$0xff]
        %v500 = vld [vmem:[%s251 + $0x638] sm:$0xff]
        %v501 = vld [vmem:[%s251 + $0x640] sm:$0xff]
        %v502 = vld [vmem:[%s251 + $0x648] sm:$0xff]
        %v503 = vld [vmem:[%s251 + $0x650] sm:$0xff]
        %v504 = vld [vmem:[%s251 + $0x658] sm:$0xff]
        %v505 = vld [vmem:[%s251 + $0x660] sm:$0xff]
        %v506 = vld [vmem:[%s251 + $0x668] sm:$0xff]
        %v507 = vld [vmem:[%s251 + $0x670] sm:$0xff]
        %v508 = vld [vmem:[%s251 + $0x678] sm:$0xff]
        %v509 = vld [vmem:[%s251 + $0x680] sm:$0xff]
        %v510 = vld [vmem:[%s251 + $0x688] sm:$0xff]
        %v511 = vld [vmem:[%s251 + $0x690] sm:$0xff]
        %v512 = vld [vmem:[%s251 + $0x698] sm:$0xff]
        %v513 = vld [vmem:[%s251 + $0x6a0] sm:$0xff]
        %v514 = vld [vmem:[%s251 + $0x6a8] sm:$0xff]
        %v515 = vld [vmem:[%s251 + $0x6b0] sm:$0xff]
        %v516 = vld [vmem:[%s251 + $0x6b8] sm:$0xff]
        %v517 = vld [vmem:[%s251 + $0x6c0] sm:$0xff]
        %v518 = vld [vmem:[%s251 + $0x6c8] sm:$0xff]
        %v519 = vld [vmem:[%s251 + $0x6d0] sm:$0xff]
        %v520 = vld [vmem:[%s251 + $0x6d8] sm:$0xff]
        %v521 = vld [vmem:[%s251 + $0x6e0] sm:$0xff]
        %v522 = vld [vmem:[%s251 + $0x6e8] sm:$0xff]
        %v523 = vld [vmem:[%s251 + $0x6f0] sm:$0xff]
        %v524 = vld [vmem:[%s251 + $0x6f8] sm:$0xff]
        %v525 = vpack.c.bf16 %v308, %v301
        %v526 = vpack.c.bf16 %v309, %v302
        %v527 = vpack.c.bf16 %v310, %v303
        %v528 = vpack.c.bf16 %v311, %v304
        %v529 = vpack.c.bf16 %v312, %v305
        %v530 = vpack.c.bf16 %v313, %v306
        %v531 = vpack.c.bf16 %v314, %v307
        %v532 = vpack.c.bf16 %v322, %v315
        %v533 = vpack.c.bf16 %v323, %v316
        %v534 = vpack.c.bf16 %v324, %v317
        %v535 = vpack.c.bf16 %v325, %v318
        %v536 = vpack.c.bf16 %v326, %v319
        %v537 = vpack.c.bf16 %v327, %v320
        %v538 = vpack.c.bf16 %v328, %v321
        %v539 = vpack.c.bf16 %v336, %v329
        %v540 = vpack.c.bf16 %v337, %v330
        %v541 = vpack.c.bf16 %v338, %v331
        %v542 = vpack.c.bf16 %v339, %v332
        %v543 = vpack.c.bf16 %v340, %v333
        %v544 = vpack.c.bf16 %v341, %v334
        %v545 = vpack.c.bf16 %v342, %v335
        %v546 = vpack.c.bf16 %v350, %v343
        %v547 = vpack.c.bf16 %v351, %v344
        %v548 = vpack.c.bf16 %v352, %v345
        %v549 = vpack.c.bf16 %v353, %v346
        %v550 = vpack.c.bf16 %v354, %v347
        %v551 = vpack.c.bf16 %v355, %v348
        %v552 = vpack.c.bf16 %v356, %v349
        %v553 = vpack.c.bf16 %v364, %v357
        %v554 = vpack.c.bf16 %v365, %v358
        %v555 = vpack.c.bf16 %v366, %v359
        %v556 = vpack.c.bf16 %v367, %v360
        %v557 = vpack.c.bf16 %v368, %v361
        %v558 = vpack.c.bf16 %v369, %v362
        %v559 = vpack.c.bf16 %v370, %v363
        %v560 = vpack.c.bf16 %v378, %v371
        %v561 = vpack.c.bf16 %v379, %v372
        %v562 = vpack.c.bf16 %v380, %v373
        %v563 = vpack.c.bf16 %v381, %v374
        %v564 = vpack.c.bf16 %v382, %v375
        %v565 = vpack.c.bf16 %v383, %v376
        %v566 = vpack.c.bf16 %v384, %v377
        %v567 = vpack.c.bf16 %v392, %v385
        %v568 = vpack.c.bf16 %v393, %v386
        %v569 = vpack.c.bf16 %v394, %v387
        %v570 = vpack.c.bf16 %v395, %v388
        %v571 = vpack.c.bf16 %v396, %v389
        %v572 = vpack.c.bf16 %v397, %v390
        %v573 = vpack.c.bf16 %v398, %v391
        %v574 = vpack.c.bf16 %v406, %v399
        %v575 = vpack.c.bf16 %v407, %v400
        %v576 = vpack.c.bf16 %v408, %v401
        %v577 = vpack.c.bf16 %v409, %v402
        %v578 = vpack.c.bf16 %v410, %v403
        %v579 = vpack.c.bf16 %v411, %v404
        %v580 = vpack.c.bf16 %v412, %v405
        %v581 = vpack.c.bf16 %v420, %v413
        %v582 = vpack.c.bf16 %v421, %v414
        %v583 = vpack.c.bf16 %v422, %v415
        %v584 = vpack.c.bf16 %v423, %v416
        %v585 = vpack.c.bf16 %v424, %v417
        %v586 = vpack.c.bf16 %v425, %v418
        %v587 = vpack.c.bf16 %v426, %v419
        %v588 = vpack.c.bf16 %v434, %v427
        %v589 = vpack.c.bf16 %v435, %v428
        %v590 = vpack.c.bf16 %v436, %v429
        %v591 = vpack.c.bf16 %v437, %v430
        %v592 = vpack.c.bf16 %v438, %v431
        %v593 = vpack.c.bf16 %v439, %v432
        %v594 = vpack.c.bf16 %v440, %v433
        %v595 = vpack.c.bf16 %v448, %v441
        %v596 = vpack.c.bf16 %v449, %v442
        %v597 = vpack.c.bf16 %v450, %v443
        %v598 = vpack.c.bf16 %v451, %v444
        %v599 = vpack.c.bf16 %v452, %v445
        %v600 = vpack.c.bf16 %v453, %v446
        %v601 = vpack.c.bf16 %v454, %v447
        %v602 = vpack.c.bf16 %v462, %v455
        %v603 = vpack.c.bf16 %v463, %v456
        %v604 = vpack.c.bf16 %v464, %v457
        %v605 = vpack.c.bf16 %v465, %v458
        %v606 = vpack.c.bf16 %v466, %v459
        %v607 = vpack.c.bf16 %v467, %v460
        %v608 = vpack.c.bf16 %v468, %v461
        %v609 = vpack.c.bf16 %v476, %v469
        %v610 = vpack.c.bf16 %v477, %v470
        %v611 = vpack.c.bf16 %v478, %v471
        %v612 = vpack.c.bf16 %v479, %v472
        %v613 = vpack.c.bf16 %v480, %v473
        %v614 = vpack.c.bf16 %v481, %v474
        %v615 = vpack.c.bf16 %v482, %v475
        %v616 = vpack.c.bf16 %v490, %v483
        %v617 = vpack.c.bf16 %v491, %v484
        %v618 = vpack.c.bf16 %v492, %v485
        %v619 = vpack.c.bf16 %v493, %v486
        %v620 = vpack.c.bf16 %v494, %v487
        %v621 = vpack.c.bf16 %v495, %v488
        %v622 = vpack.c.bf16 %v496, %v489
        %v623 = vpack.c.bf16 %v504, %v497
        %v624 = vpack.c.bf16 %v505, %v498
        %v625 = vpack.c.bf16 %v506, %v499
        %v626 = vpack.c.bf16 %v507, %v500
        %v627 = vpack.c.bf16 %v508, %v501
        %v628 = vpack.c.bf16 %v509, %v502
        %v629 = vpack.c.bf16 %v510, %v503
        %v630 = vpack.c.bf16 %v518, %v511
        %v631 = vpack.c.bf16 %v519, %v512
        %v632 = vpack.c.bf16 %v520, %v513
        %v633 = vpack.c.bf16 %v521, %v514
        %v634 = vpack.c.bf16 %v522, %v515
        %v635 = vpack.c.bf16 %v523, %v516
        %v636 = vpack.c.bf16 %v524, %v517
        %v637 = vld [vmem:[#allocation4] sm:$0xff]
        %v638 = vld [vmem:[#allocation4 + $0x8] sm:$0xf]
        %v639 = vld [vmem:[#allocation4 + $0xc] sm:$0xff]
        %v640 = vld [vmem:[#allocation4 + $0x14] sm:$0xf]
        %v641 = vld [vmem:[#allocation4 + $0x18] sm:$0xff]
        %v642 = vld [vmem:[#allocation4 + $0x20] sm:$0xf]
        %v643 = vld [vmem:[#allocation4 + $0x24] sm:$0xff]
        %v644 = vld [vmem:[#allocation4 + $0x2c] sm:$0xf]
        %v645 = vld [vmem:[#allocation4 + $0x30] sm:$0xff]
        %v646 = vld [vmem:[#allocation4 + $0x38] sm:$0xf]
        %v647 = vld [vmem:[#allocation4 + $0x3c] sm:$0xff]
        %v648 = vld [vmem:[#allocation4 + $0x44] sm:$0xf]
        %v649 = vld [vmem:[#allocation4 + $0x48] sm:$0xff]
        %v650 = vld [vmem:[#allocation4 + $0x50] sm:$0xf]
        %v651 = vld [vmem:[#allocation4 + $0x54] sm:$0xff]
        %v652 = vld [vmem:[#allocation4 + $0x5c] sm:$0xf]
        %v653 = vld [vmem:[#allocation4 + $0x60] sm:$0xff]
        %v654 = vld [vmem:[#allocation4 + $0x68] sm:$0xf]
        %v655 = vld [vmem:[#allocation4 + $0x6c] sm:$0xff]
        %v656 = vld [vmem:[#allocation4 + $0x74] sm:$0xf]
        %v657 = vld [vmem:[#allocation4 + $0x78] sm:$0xff]
        %v658 = vld [vmem:[#allocation4 + $0x80] sm:$0xf]
        %v659 = vld [vmem:[#allocation4 + $0x84] sm:$0xff]
        %v660 = vld [vmem:[#allocation4 + $0x8c] sm:$0xf]
        %v661 = vld [vmem:[#allocation4 + $0x90] sm:$0xff]
        %v662 = vld [vmem:[#allocation4 + $0x98] sm:$0xf]
        %v663 = vld [vmem:[#allocation4 + $0x9c] sm:$0xff]
        %v664 = vld [vmem:[#allocation4 + $0xa4] sm:$0xf]
        %v665 = vld [vmem:[#allocation4 + $0xa8] sm:$0xff]
        %v666 = vld [vmem:[#allocation4 + $0xb0] sm:$0xf]
        %v667 = vld [vmem:[#allocation4 + $0xb4] sm:$0xff]
        %v668 = vld [vmem:[#allocation4 + $0xbc] sm:$0xf]
        %v669 = vld [vmem:[#allocation4 + $0xc0] sm:$0xff]
        %v670 = vld [vmem:[#allocation4 + $0xc8] sm:$0xf]
        %v671 = vld [vmem:[#allocation4 + $0xcc] sm:$0xff]
        %v672 = vld [vmem:[#allocation4 + $0xd4] sm:$0xf]
        %v673 = vld [vmem:[#allocation4 + $0xd8] sm:$0xff]
        %v674 = vld [vmem:[#allocation4 + $0xe0] sm:$0xf]
        %v675 = vld [vmem:[#allocation4 + $0xe4] sm:$0xff]
        %v676 = vld [vmem:[#allocation4 + $0xec] sm:$0xf]
        %v677 = vld [vmem:[#allocation4 + $0xf0] sm:$0xff]
        %v678 = vld [vmem:[#allocation4 + $0xf8] sm:$0xf]
        %v679 = vld [vmem:[#allocation4 + $0xfc] sm:$0xff]
        %v680 = vld [vmem:[#allocation4 + $0x104] sm:$0xf]
        %v681 = vld [vmem:[#allocation4 + $0x108] sm:$0xff]
        %v682 = vld [vmem:[#allocation4 + $0x110] sm:$0xf]
        %v683 = vld [vmem:[#allocation4 + $0x114] sm:$0xff]
        %v684 = vld [vmem:[#allocation4 + $0x11c] sm:$0xf]
        %v685 = vld [vmem:[#allocation4 + $0x120] sm:$0xff]
        %v686 = vld [vmem:[#allocation4 + $0x128] sm:$0xf]
        %v687 = vld [vmem:[#allocation4 + $0x12c] sm:$0xff]
        %v688 = vld [vmem:[#allocation4 + $0x134] sm:$0xf]
        %v689 = vld [vmem:[#allocation4 + $0x138] sm:$0xff]
        %v690 = vld [vmem:[#allocation4 + $0x140] sm:$0xf]
        %v691 = vld [vmem:[#allocation4 + $0x144] sm:$0xff]
        %v692 = vld [vmem:[#allocation4 + $0x14c] sm:$0xf]
        %v693 = vld [vmem:[#allocation4 + $0x150] sm:$0xff]
        %v694 = vld [vmem:[#allocation4 + $0x158] sm:$0xf]
        %v695 = vld [vmem:[#allocation4 + $0x15c] sm:$0xff]
        %v696 = vld [vmem:[#allocation4 + $0x164] sm:$0xf]
        %v697 = vld [vmem:[#allocation4 + $0x168] sm:$0xff]
        %v698 = vld [vmem:[#allocation4 + $0x170] sm:$0xf]
        %v699 = vld [vmem:[#allocation4 + $0x174] sm:$0xff]
        %v700 = vld [vmem:[#allocation4 + $0x17c] sm:$0xf]
        %v701 = vld [vmem:[#allocation4 + $0x180] sm:$0xff]
        %v702 = vld [vmem:[#allocation4 + $0x188] sm:$0xf]
        %v703 = vld [vmem:[#allocation4 + $0x18c] sm:$0xff]
        %v704 = vld [vmem:[#allocation4 + $0x194] sm:$0xf]
        %v705 = vld [vmem:[#allocation4 + $0x198] sm:$0xff]
        %v706 = vld [vmem:[#allocation4 + $0x1a0] sm:$0xf]
        %v707 = vld [vmem:[#allocation4 + $0x1a4] sm:$0xff]
        %v708 = vld [vmem:[#allocation4 + $0x1ac] sm:$0xf]
        %v709 = vld [vmem:[#allocation4 + $0x1b0] sm:$0xff]
        %v710 = vld [vmem:[#allocation4 + $0x1b8] sm:$0xf]
        %v711 = vld [vmem:[#allocation4 + $0x1bc] sm:$0xff]
        %v712 = vld [vmem:[#allocation4 + $0x1c4] sm:$0xf]
        %v713 = vld [vmem:[#allocation4 + $0x1c8] sm:$0xff]
        %v714 = vld [vmem:[#allocation4 + $0x1d0] sm:$0xf]
        %v715 = vld [vmem:[#allocation4 + $0x1d4] sm:$0xff]
        %v716 = vld [vmem:[#allocation4 + $0x1dc] sm:$0xf]
        %v717 = vld [vmem:[#allocation4 + $0x1e0] sm:$0xff]
        %v718 = vld [vmem:[#allocation4 + $0x1e8] sm:$0xf]
        %v719 = vld [vmem:[#allocation4 + $0x1ec] sm:$0xff]
        %v720 = vld [vmem:[#allocation4 + $0x1f4] sm:$0xf]
        %v721 = vld [vmem:[#allocation4 + $0x1f8] sm:$0xff]
        %v722 = vld [vmem:[#allocation4 + $0x200] sm:$0xf]
        %v723 = vld [vmem:[#allocation4 + $0x204] sm:$0xff]
        %v724 = vld [vmem:[#allocation4 + $0x20c] sm:$0xf]
        %v725 = vld [vmem:[#allocation4 + $0x210] sm:$0xff]
        %v726 = vld [vmem:[#allocation4 + $0x218] sm:$0xf]
        %v727 = vld [vmem:[#allocation4 + $0x21c] sm:$0xff]
        %v728 = vld [vmem:[#allocation4 + $0x224] sm:$0xf]
        %v729 = vld [vmem:[#allocation4 + $0x228] sm:$0xff]
        %v730 = vld [vmem:[#allocation4 + $0x230] sm:$0xf]
        %v731 = vld [vmem:[#allocation4 + $0x234] sm:$0xff]
        %v732 = vld [vmem:[#allocation4 + $0x23c] sm:$0xf]
        %v733 = vld [vmem:[#allocation4 + $0x240] sm:$0xff]
        %v734 = vld [vmem:[#allocation4 + $0x248] sm:$0xf]
        %v735 = vld [vmem:[#allocation4 + $0x24c] sm:$0xff]
        %v736 = vld [vmem:[#allocation4 + $0x254] sm:$0xf]
        %v737 = vld [vmem:[#allocation4 + $0x258] sm:$0xff]
        %v738 = vld [vmem:[#allocation4 + $0x260] sm:$0xf]
        %v739 = vld [vmem:[#allocation4 + $0x264] sm:$0xff]
        %v740 = vld [vmem:[#allocation4 + $0x26c] sm:$0xf]
        %v741 = vld [vmem:[#allocation4 + $0x270] sm:$0xff]
        %v742 = vld [vmem:[#allocation4 + $0x278] sm:$0xf]
        %v743 = vld [vmem:[#allocation4 + $0x27c] sm:$0xff]
        %v744 = vld [vmem:[#allocation4 + $0x284] sm:$0xf]
        %v745 = vld [vmem:[#allocation4 + $0x288] sm:$0xff]
        %v746 = vld [vmem:[#allocation4 + $0x290] sm:$0xf]
        %v747 = vld [vmem:[#allocation4 + $0x294] sm:$0xff]
        %v748 = vld [vmem:[#allocation4 + $0x29c] sm:$0xf]
        %v749 = vld [vmem:[#allocation4 + $0x2a0] sm:$0xff]
        %v750 = vld [vmem:[#allocation4 + $0x2a8] sm:$0xf]
        %v751 = vld [vmem:[#allocation4 + $0x2ac] sm:$0xff]
        %v752 = vld [vmem:[#allocation4 + $0x2b4] sm:$0xf]
        %v753 = vld [vmem:[#allocation4 + $0x2b8] sm:$0xff]
        %v754 = vld [vmem:[#allocation4 + $0x2c0] sm:$0xf]
        %v755 = vld [vmem:[#allocation4 + $0x2c4] sm:$0xff]
        %v756 = vld [vmem:[#allocation4 + $0x2cc] sm:$0xf]
        %v757 = vld [vmem:[#allocation4 + $0x2d0] sm:$0xff]
        %v758 = vld [vmem:[#allocation4 + $0x2d8] sm:$0xf]
        %v759 = vld [vmem:[#allocation4 + $0x2dc] sm:$0xff]
        %v760 = vld [vmem:[#allocation4 + $0x2e4] sm:$0xf]
        %v761 = vld [vmem:[#allocation4 + $0x2e8] sm:$0xff]
        %v762 = vld [vmem:[#allocation4 + $0x2f0] sm:$0xf]
        %v763 = vld [vmem:[#allocation4 + $0x2f4] sm:$0xff]
        %v764 = vld [vmem:[#allocation4 + $0x2fc] sm:$0xf]
        %v765 = vld [vmem:[#allocation4 + $0x300] sm:$0xff]
        %v766 = vld [vmem:[#allocation4 + $0x308] sm:$0xf]
        %v767 = vld [vmem:[#allocation4 + $0x30c] sm:$0xff]
        %v768 = vld [vmem:[#allocation4 + $0x314] sm:$0xf]
        %v769 = vld [vmem:[#allocation4 + $0x318] sm:$0xff]
        %v770 = vld [vmem:[#allocation4 + $0x320] sm:$0xf]
        %v771 = vld [vmem:[#allocation4 + $0x324] sm:$0xff]
        %v772 = vld [vmem:[#allocation4 + $0x32c] sm:$0xf]
        %v773 = vld [vmem:[#allocation4 + $0x330] sm:$0xff]
        %v774 = vld [vmem:[#allocation4 + $0x338] sm:$0xf]
        %v775 = vld [vmem:[#allocation4 + $0x33c] sm:$0xff]
        %v776 = vld [vmem:[#allocation4 + $0x344] sm:$0xf]
        %v777 = vld [vmem:[#allocation4 + $0x348] sm:$0xff]
        %v778 = vld [vmem:[#allocation4 + $0x350] sm:$0xf]
        %v779 = vld [vmem:[#allocation4 + $0x354] sm:$0xff]
        %v780 = vld [vmem:[#allocation4 + $0x35c] sm:$0xf]
        %v781 = vld [vmem:[#allocation4 + $0x360] sm:$0xff]
        %v782 = vld [vmem:[#allocation4 + $0x368] sm:$0xf]
        %v783 = vld [vmem:[#allocation4 + $0x36c] sm:$0xff]
        %v784 = vld [vmem:[#allocation4 + $0x374] sm:$0xf]
        %v785 = vld [vmem:[#allocation4 + $0x378] sm:$0xff]
        %v786 = vld [vmem:[#allocation4 + $0x380] sm:$0xf]
        %v787 = vld [vmem:[#allocation4 + $0x384] sm:$0xff]
        %v788 = vld [vmem:[#allocation4 + $0x38c] sm:$0xf]
        %v789 = vld [vmem:[#allocation4 + $0x390] sm:$0xff]
        %v790 = vld [vmem:[#allocation4 + $0x398] sm:$0xf]
        %v791 = vld [vmem:[#allocation4 + $0x39c] sm:$0xff]
        %v792 = vld [vmem:[#allocation4 + $0x3a4] sm:$0xf]
        %v793 = vld [vmem:[#allocation4 + $0x3a8] sm:$0xff]
        %v794 = vld [vmem:[#allocation4 + $0x3b0] sm:$0xf]
        %v795 = vld [vmem:[#allocation4 + $0x3b4] sm:$0xff]
        %v796 = vld [vmem:[#allocation4 + $0x3bc] sm:$0xf]
        %v797 = vld [vmem:[#allocation4 + $0x3c0] sm:$0xff]
        %v798 = vld [vmem:[#allocation4 + $0x3c8] sm:$0xf]
        %v799 = vld [vmem:[#allocation4 + $0x3cc] sm:$0xff]
        %v800 = vld [vmem:[#allocation4 + $0x3d4] sm:$0xf]
        %v801 = vld [vmem:[#allocation4 + $0x3d8] sm:$0xff]
        %v802 = vld [vmem:[#allocation4 + $0x3e0] sm:$0xf]
        %v803 = vld [vmem:[#allocation4 + $0x3e4] sm:$0xff]
        %v804 = vld [vmem:[#allocation4 + $0x3ec] sm:$0xf]
        %v805 = vld [vmem:[#allocation4 + $0x3f0] sm:$0xff]
        %v806 = vld [vmem:[#allocation4 + $0x3f8] sm:$0xf]
        %v807 = vld [vmem:[#allocation4 + $0x3fc] sm:$0xff]
        %v808 = vld [vmem:[#allocation4 + $0x404] sm:$0xf]
        %v809 = vld [vmem:[#allocation4 + $0x408] sm:$0xff]
        %v810 = vld [vmem:[#allocation4 + $0x410] sm:$0xf]
        %v811 = vld [vmem:[#allocation4 + $0x414] sm:$0xff]
        %v812 = vld [vmem:[#allocation4 + $0x41c] sm:$0xf]
        %v813 = vld [vmem:[#allocation4 + $0x420] sm:$0xff]
        %v814 = vld [vmem:[#allocation4 + $0x428] sm:$0xf]
        %v815 = vld [vmem:[#allocation4 + $0x42c] sm:$0xff]
        %v816 = vld [vmem:[#allocation4 + $0x434] sm:$0xf]
        %v817 = vld [vmem:[#allocation4 + $0x438] sm:$0xff]
        %v818 = vld [vmem:[#allocation4 + $0x440] sm:$0xf]
        %v819 = vld [vmem:[#allocation4 + $0x444] sm:$0xff]
        %v820 = vld [vmem:[#allocation4 + $0x44c] sm:$0xf]
        %v821 = vld [vmem:[#allocation4 + $0x450] sm:$0xff]
        %v822 = vld [vmem:[#allocation4 + $0x458] sm:$0xf]
        %v823 = vld [vmem:[#allocation4 + $0x45c] sm:$0xff]
        %v824 = vld [vmem:[#allocation4 + $0x464] sm:$0xf]
        %v825 = vld [vmem:[#allocation4 + $0x468] sm:$0xff]
        %v826 = vld [vmem:[#allocation4 + $0x470] sm:$0xf]
        %v827 = vld [vmem:[#allocation4 + $0x474] sm:$0xff]
        %v828 = vld [vmem:[#allocation4 + $0x47c] sm:$0xf]
        %v829 = vld [vmem:[#allocation4 + $0x480] sm:$0xff]
        %v830 = vld [vmem:[#allocation4 + $0x488] sm:$0xf]
        %v831 = vld [vmem:[#allocation4 + $0x48c] sm:$0xff]
        %v832 = vld [vmem:[#allocation4 + $0x494] sm:$0xf]
        %v1029 = vunpack.c.l.b16 %v637
        %v1030 = vunpack.c.h.b16 %v637
        %v1031 = vunpack.c.l.b16 %v638
        %v1032 = vunpack.c.l.b16 %v639
        %v1033 = vunpack.c.h.b16 %v639
        %v1034 = vunpack.c.l.b16 %v640
        %v1035 = vunpack.c.l.b16 %v641
        %v1036 = vunpack.c.h.b16 %v641
        %v1037 = vunpack.c.l.b16 %v642
        %v1038 = vunpack.c.l.b16 %v643
        %v1039 = vunpack.c.h.b16 %v643
        %v1040 = vunpack.c.l.b16 %v644
        %v1041 = vunpack.c.l.b16 %v645
        %v1042 = vunpack.c.h.b16 %v645
        %v1043 = vunpack.c.l.b16 %v646
        %v1044 = vunpack.c.l.b16 %v647
        %v1045 = vunpack.c.h.b16 %v647
        %v1046 = vunpack.c.l.b16 %v648
        %v1047 = vunpack.c.l.b16 %v649
        %v1048 = vunpack.c.h.b16 %v649
        %v1049 = vunpack.c.l.b16 %v650
        %v1050 = vunpack.c.l.b16 %v651
        %v1051 = vunpack.c.h.b16 %v651
        %v1052 = vunpack.c.l.b16 %v652
        %v1053 = vunpack.c.l.b16 %v653
        %v1054 = vunpack.c.h.b16 %v653
        %v1055 = vunpack.c.l.b16 %v654
        %v1056 = vunpack.c.l.b16 %v655
        %v1057 = vunpack.c.h.b16 %v655
        %v1058 = vunpack.c.l.b16 %v656
        %v1059 = vunpack.c.l.b16 %v657
        %v1060 = vunpack.c.h.b16 %v657
        %v1061 = vunpack.c.l.b16 %v658
        %v1062 = vunpack.c.l.b16 %v659
        %v1063 = vunpack.c.h.b16 %v659
        %v1064 = vunpack.c.l.b16 %v660
        %v1065 = vunpack.c.l.b16 %v661
        %v1066 = vunpack.c.h.b16 %v661
        %v1067 = vunpack.c.l.b16 %v662
        %v1068 = vunpack.c.l.b16 %v663
        %v1069 = vunpack.c.h.b16 %v663
        %v1070 = vunpack.c.l.b16 %v664
        %v1071 = vunpack.c.l.b16 %v665
        %v1072 = vunpack.c.h.b16 %v665
        %v1073 = vunpack.c.l.b16 %v666
        %v1074 = vunpack.c.l.b16 %v667
        %v1075 = vunpack.c.h.b16 %v667
        %v1076 = vunpack.c.l.b16 %v668
        %v1077 = vunpack.c.l.b16 %v669
        %v1078 = vunpack.c.h.b16 %v669
        %v1079 = vunpack.c.l.b16 %v670
        %v1080 = vunpack.c.l.b16 %v671
        %v1081 = vunpack.c.h.b16 %v671
        %v1082 = vunpack.c.l.b16 %v672
        %v1083 = vunpack.c.l.b16 %v673
        %v1084 = vunpack.c.h.b16 %v673
        %v1085 = vunpack.c.l.b16 %v674
        %v1086 = vunpack.c.l.b16 %v675
        %v1087 = vunpack.c.h.b16 %v675
        %v1088 = vunpack.c.l.b16 %v676
        %v1089 = vunpack.c.l.b16 %v677
        %v1090 = vunpack.c.h.b16 %v677
        %v1091 = vunpack.c.l.b16 %v678
        %v1092 = vunpack.c.l.b16 %v679
        %v1093 = vunpack.c.h.b16 %v679
        %v1094 = vunpack.c.l.b16 %v680
        %v1095 = vunpack.c.l.b16 %v681
        %v1096 = vunpack.c.h.b16 %v681
        %v1097 = vunpack.c.l.b16 %v682
        %v1098 = vunpack.c.l.b16 %v683
        %v1099 = vunpack.c.h.b16 %v683
        %v1100 = vunpack.c.l.b16 %v684
        %v1101 = vunpack.c.l.b16 %v685
        %v1102 = vunpack.c.h.b16 %v685
        %v1103 = vunpack.c.l.b16 %v686
        %v1104 = vunpack.c.l.b16 %v687
        %v1105 = vunpack.c.h.b16 %v687
        %v1106 = vunpack.c.l.b16 %v688
        %v1107 = vunpack.c.l.b16 %v689
        %v1108 = vunpack.c.h.b16 %v689
        %v1109 = vunpack.c.l.b16 %v690
        %v1110 = vunpack.c.l.b16 %v691
        %v1111 = vunpack.c.h.b16 %v691
        %v1112 = vunpack.c.l.b16 %v692
        %v1113 = vunpack.c.l.b16 %v693
        %v1114 = vunpack.c.h.b16 %v693
        %v1115 = vunpack.c.l.b16 %v694
        %v1116 = vunpack.c.l.b16 %v695
        %v1117 = vunpack.c.h.b16 %v695
        %v1118 = vunpack.c.l.b16 %v696
        %v1119 = vunpack.c.l.b16 %v697
        %v1120 = vunpack.c.h.b16 %v697
        %v1121 = vunpack.c.l.b16 %v698
        %v1122 = vunpack.c.l.b16 %v699
        %v1123 = vunpack.c.h.b16 %v699
        %v1124 = vunpack.c.l.b16 %v700
        %v1125 = vunpack.c.l.b16 %v701
        %v1126 = vunpack.c.h.b16 %v701
        %v1127 = vunpack.c.l.b16 %v702
        %v1128 = vunpack.c.l.b16 %v703
        %v1129 = vunpack.c.h.b16 %v703
        %v1130 = vunpack.c.l.b16 %v704
        %v1131 = vunpack.c.l.b16 %v705
        %v1132 = vunpack.c.h.b16 %v705
        %v1133 = vunpack.c.l.b16 %v706
        %v1134 = vunpack.c.l.b16 %v707
        %v1135 = vunpack.c.h.b16 %v707
        %v1136 = vunpack.c.l.b16 %v708
        %v1137 = vunpack.c.l.b16 %v709
        %v1138 = vunpack.c.h.b16 %v709
        %v1139 = vunpack.c.l.b16 %v710
        %v1140 = vunpack.c.l.b16 %v711
        %v1141 = vunpack.c.h.b16 %v711
        %v1142 = vunpack.c.l.b16 %v712
        %v1143 = vunpack.c.l.b16 %v713
        %v1144 = vunpack.c.h.b16 %v713
        %v1145 = vunpack.c.l.b16 %v714
        %v1146 = vunpack.c.l.b16 %v715
        %v1147 = vunpack.c.h.b16 %v715
        %v1148 = vunpack.c.l.b16 %v716
        %v1149 = vunpack.c.l.b16 %v717
        %v1150 = vunpack.c.h.b16 %v717
        %v1151 = vunpack.c.l.b16 %v718
        %v1152 = vunpack.c.l.b16 %v719
        %v1153 = vunpack.c.h.b16 %v719
        %v1154 = vunpack.c.l.b16 %v720
        %v1155 = vunpack.c.l.b16 %v721
        %v1156 = vunpack.c.h.b16 %v721
        %v1157 = vunpack.c.l.b16 %v722
        %v1158 = vunpack.c.l.b16 %v723
        %v1159 = vunpack.c.h.b16 %v723
        %v1160 = vunpack.c.l.b16 %v724
        %v1161 = vunpack.c.l.b16 %v725
        %v1162 = vunpack.c.h.b16 %v725
        %v1163 = vunpack.c.l.b16 %v726
        %v1164 = vunpack.c.l.b16 %v727
        %v1165 = vunpack.c.h.b16 %v727
        %v1166 = vunpack.c.l.b16 %v728
        %v1167 = vunpack.c.l.b16 %v729
        %v1168 = vunpack.c.h.b16 %v729
        %v1169 = vunpack.c.l.b16 %v730
        %v1170 = vunpack.c.l.b16 %v731
        %v1171 = vunpack.c.h.b16 %v731
        %v1172 = vunpack.c.l.b16 %v732
        %v1173 = vunpack.c.l.b16 %v733
        %v1174 = vunpack.c.h.b16 %v733
        %v1175 = vunpack.c.l.b16 %v734
        %v1176 = vunpack.c.l.b16 %v735
        %v1177 = vunpack.c.h.b16 %v735
        %v1178 = vunpack.c.l.b16 %v736
        %v1179 = vunpack.c.l.b16 %v737
        %v1180 = vunpack.c.h.b16 %v737
        %v1181 = vunpack.c.l.b16 %v738
        %v1182 = vunpack.c.l.b16 %v739
        %v1183 = vunpack.c.h.b16 %v739
        %v1184 = vunpack.c.l.b16 %v740
        %v1185 = vunpack.c.l.b16 %v741
        %v1186 = vunpack.c.h.b16 %v741
        %v1187 = vunpack.c.l.b16 %v742
        %v1188 = vunpack.c.l.b16 %v743
        %v1189 = vunpack.c.h.b16 %v743
        %v1190 = vunpack.c.l.b16 %v744
        %v1191 = vunpack.c.l.b16 %v745
        %v1192 = vunpack.c.h.b16 %v745
        %v1193 = vunpack.c.l.b16 %v746
        %v1194 = vunpack.c.l.b16 %v747
        %v1195 = vunpack.c.h.b16 %v747
        %v1196 = vunpack.c.l.b16 %v748
        %v1197 = vunpack.c.l.b16 %v749
        %v1198 = vunpack.c.h.b16 %v749
        %v1199 = vunpack.c.l.b16 %v750
        %v1200 = vunpack.c.l.b16 %v751
        %v1201 = vunpack.c.h.b16 %v751
        %v1202 = vunpack.c.l.b16 %v752
        %v1203 = vunpack.c.l.b16 %v753
        %v1204 = vunpack.c.h.b16 %v753
        %v1205 = vunpack.c.l.b16 %v754
        %v1206 = vunpack.c.l.b16 %v755
        %v1207 = vunpack.c.h.b16 %v755
        %v1208 = vunpack.c.l.b16 %v756
        %v1209 = vunpack.c.l.b16 %v757
        %v1210 = vunpack.c.h.b16 %v757
        %v1211 = vunpack.c.l.b16 %v758
        %v1212 = vunpack.c.l.b16 %v759
        %v1213 = vunpack.c.h.b16 %v759
        %v1214 = vunpack.c.l.b16 %v760
        %v1215 = vunpack.c.l.b16 %v761
        %v1216 = vunpack.c.h.b16 %v761
        %v1217 = vunpack.c.l.b16 %v762
        %v1218 = vunpack.c.l.b16 %v763
        %v1219 = vunpack.c.h.b16 %v763
        %v1220 = vunpack.c.l.b16 %v764
        %v1221 = vunpack.c.l.b16 %v765
        %v1222 = vunpack.c.h.b16 %v765
        %v1223 = vunpack.c.l.b16 %v766
        %v1224 = vunpack.c.l.b16 %v767
        %v1225 = vunpack.c.h.b16 %v767
        %v1226 = vunpack.c.l.b16 %v768
        %v1227 = vunpack.c.l.b16 %v769
        %v1228 = vunpack.c.h.b16 %v769
        %v1229 = vunpack.c.l.b16 %v770
        %v1230 = vunpack.c.l.b16 %v771
        %v1231 = vunpack.c.h.b16 %v771
        %v1232 = vunpack.c.l.b16 %v772
        %v1233 = vunpack.c.l.b16 %v773
        %v1234 = vunpack.c.h.b16 %v773
        %v1235 = vunpack.c.l.b16 %v774
        %v1236 = vunpack.c.l.b16 %v775
        %v1237 = vunpack.c.h.b16 %v775
        %v1238 = vunpack.c.l.b16 %v776
        %v1239 = vunpack.c.l.b16 %v777
        %v1240 = vunpack.c.h.b16 %v777
        %v1241 = vunpack.c.l.b16 %v778
        %v1242 = vunpack.c.l.b16 %v779
        %v1243 = vunpack.c.h.b16 %v779
        %v1244 = vunpack.c.l.b16 %v780
        %v1245 = vunpack.c.l.b16 %v781
        %v1246 = vunpack.c.h.b16 %v781
        %v1247 = vunpack.c.l.b16 %v782
        %v1248 = vunpack.c.l.b16 %v783
        %v1249 = vunpack.c.h.b16 %v783
        %v1250 = vunpack.c.l.b16 %v784
        %v1251 = vunpack.c.l.b16 %v785
        %v1252 = vunpack.c.h.b16 %v785
        %v1253 = vunpack.c.l.b16 %v786
        %v1254 = vunpack.c.l.b16 %v787
        %v1255 = vunpack.c.h.b16 %v787
        %v1256 = vunpack.c.l.b16 %v788
        %v1257 = vunpack.c.l.b16 %v789
        %v1258 = vunpack.c.h.b16 %v789
        %v1259 = vunpack.c.l.b16 %v790
        %v1260 = vunpack.c.l.b16 %v791
        %v1261 = vunpack.c.h.b16 %v791
        %v1262 = vunpack.c.l.b16 %v792
        %v1263 = vunpack.c.l.b16 %v793
        %v1264 = vunpack.c.h.b16 %v793
        %v1265 = vunpack.c.l.b16 %v794
        %v1266 = vunpack.c.l.b16 %v795
        %v1267 = vunpack.c.h.b16 %v795
        %v1268 = vunpack.c.l.b16 %v796
        %v1269 = vunpack.c.l.b16 %v797
        %v1270 = vunpack.c.h.b16 %v797
        %v1271 = vunpack.c.l.b16 %v798
        %v1272 = vunpack.c.l.b16 %v799
        %v1273 = vunpack.c.h.b16 %v799
        %v1274 = vunpack.c.l.b16 %v800
        %v1275 = vunpack.c.l.b16 %v801
        %v1276 = vunpack.c.h.b16 %v801
        %v1277 = vunpack.c.l.b16 %v802
        %v1278 = vunpack.c.l.b16 %v803
        %v1279 = vunpack.c.h.b16 %v803
        %v1280 = vunpack.c.l.b16 %v804
        %v1281 = vunpack.c.l.b16 %v805
        %v1282 = vunpack.c.h.b16 %v805
        %v1283 = vunpack.c.l.b16 %v806
        %v1284 = vunpack.c.l.b16 %v807
        %v1285 = vunpack.c.h.b16 %v807
        %v1286 = vunpack.c.l.b16 %v808
        %v1287 = vunpack.c.l.b16 %v809
        %v1288 = vunpack.c.h.b16 %v809
        %v1289 = vunpack.c.l.b16 %v810
        %v1290 = vunpack.c.l.b16 %v811
        %v1291 = vunpack.c.h.b16 %v811
        %v1292 = vunpack.c.l.b16 %v812
        %v1293 = vunpack.c.l.b16 %v813
        %v1294 = vunpack.c.h.b16 %v813
        %v1295 = vunpack.c.l.b16 %v814
        %v1296 = vunpack.c.l.b16 %v815
        %v1297 = vunpack.c.h.b16 %v815
        %v1298 = vunpack.c.l.b16 %v816
        %v1299 = vunpack.c.l.b16 %v817
        %v1300 = vunpack.c.h.b16 %v817
        %v1301 = vunpack.c.l.b16 %v818
        %v1302 = vunpack.c.l.b16 %v819
        %v1303 = vunpack.c.h.b16 %v819
        %v1304 = vunpack.c.l.b16 %v820
        %v1305 = vunpack.c.l.b16 %v821
        %v1306 = vunpack.c.h.b16 %v821
        %v1307 = vunpack.c.l.b16 %v822
        %v1308 = vunpack.c.l.b16 %v823
        %v1309 = vunpack.c.h.b16 %v823
        %v1310 = vunpack.c.l.b16 %v824
        %v1311 = vunpack.c.l.b16 %v825
        %v1312 = vunpack.c.h.b16 %v825
        %v1313 = vunpack.c.l.b16 %v826
        %v1314 = vunpack.c.l.b16 %v827
        %v1315 = vunpack.c.h.b16 %v827
        %v1316 = vunpack.c.l.b16 %v828
        %v1317 = vunpack.c.l.b16 %v829
        %v1318 = vunpack.c.h.b16 %v829
        %v1319 = vunpack.c.l.b16 %v830
        %v1320 = vunpack.c.l.b16 %v831
        %v1321 = vunpack.c.h.b16 %v831
        %v1322 = vunpack.c.l.b16 %v832
        %v1323 = vpack.c.b16 %v1032, %v1029
        %v1324 = vpack.c.b16 %v1033, %v1030
        %v1325 = vpack.c.b16 %v1034, %v1031
        %v1326 = vpack.c.b16 %v1038, %v1035
        %v1327 = vpack.c.b16 %v1039, %v1036
        %v1328 = vpack.c.b16 %v1040, %v1037
        %v1329 = vpack.c.b16 %v1044, %v1041
        %v1330 = vpack.c.b16 %v1045, %v1042
        %v1331 = vpack.c.b16 %v1046, %v1043
        %v1332 = vpack.c.b16 %v1050, %v1047
        %v1333 = vpack.c.b16 %v1051, %v1048
        %v1334 = vpack.c.b16 %v1052, %v1049
        %v1335 = vpack.c.b16 %v1056, %v1053
        %v1336 = vpack.c.b16 %v1057, %v1054
        %v1337 = vpack.c.b16 %v1058, %v1055
        %v1338 = vpack.c.b16 %v1062, %v1059
        %v1339 = vpack.c.b16 %v1063, %v1060
        %v1340 = vpack.c.b16 %v1064, %v1061
        %v1341 = vpack.c.b16 %v1068, %v1065
        %v1342 = vpack.c.b16 %v1069, %v1066
        %v1343 = vpack.c.b16 %v1070, %v1067
        %v1344 = vpack.c.b16 %v1074, %v1071
        %v1345 = vpack.c.b16 %v1075, %v1072
        %v1346 = vpack.c.b16 %v1076, %v1073
        %v1347 = vpack.c.b16 %v1080, %v1077
        %v1348 = vpack.c.b16 %v1081, %v1078
        %v1349 = vpack.c.b16 %v1082, %v1079
        %v1350 = vpack.c.b16 %v1086, %v1083
        %v1351 = vpack.c.b16 %v1087, %v1084
        %v1352 = vpack.c.b16 %v1088, %v1085
        %v1353 = vpack.c.b16 %v1092, %v1089
        %v1354 = vpack.c.b16 %v1093, %v1090
        %v1355 = vpack.c.b16 %v1094, %v1091
        %v1356 = vpack.c.b16 %v1098, %v1095
        %v1357 = vpack.c.b16 %v1099, %v1096
        %v1358 = vpack.c.b16 %v1100, %v1097
        %v1359 = vpack.c.b16 %v1104, %v1101
        %v1360 = vpack.c.b16 %v1105, %v1102
        %v1361 = vpack.c.b16 %v1106, %v1103
        %v1362 = vpack.c.b16 %v1110, %v1107
        %v1363 = vpack.c.b16 %v1111, %v1108
        %v1364 = vpack.c.b16 %v1112, %v1109
        %v1365 = vpack.c.b16 %v1116, %v1113
        %v1366 = vpack.c.b16 %v1117, %v1114
        %v1367 = vpack.c.b16 %v1118, %v1115
        %v1368 = vpack.c.b16 %v1122, %v1119
        %v1369 = vpack.c.b16 %v1123, %v1120
        %v1370 = vpack.c.b16 %v1124, %v1121
        %v1371 = vpack.c.b16 %v1128, %v1125
        %v1372 = vpack.c.b16 %v1129, %v1126
        %v1373 = vpack.c.b16 %v1130, %v1127
        %v1374 = vpack.c.b16 %v1134, %v1131
        %v1375 = vpack.c.b16 %v1135, %v1132
        %v1376 = vpack.c.b16 %v1136, %v1133
        %v1377 = vpack.c.b16 %v1140, %v1137
        %v1378 = vpack.c.b16 %v1141, %v1138
        %v1379 = vpack.c.b16 %v1142, %v1139
        %v1380 = vpack.c.b16 %v1146, %v1143
        %v1381 = vpack.c.b16 %v1147, %v1144
        %v1382 = vpack.c.b16 %v1148, %v1145
        %v1383 = vpack.c.b16 %v1152, %v1149
        %v1384 = vpack.c.b16 %v1153, %v1150
        %v1385 = vpack.c.b16 %v1154, %v1151
        %v1386 = vpack.c.b16 %v1158, %v1155
        %v1387 = vpack.c.b16 %v1159, %v1156
        %v1388 = vpack.c.b16 %v1160, %v1157
        %v1389 = vpack.c.b16 %v1164, %v1161
        %v1390 = vpack.c.b16 %v1165, %v1162
        %v1391 = vpack.c.b16 %v1166, %v1163
        %v1392 = vpack.c.b16 %v1170, %v1167
        %v1393 = vpack.c.b16 %v1171, %v1168
        %v1394 = vpack.c.b16 %v1172, %v1169
        %v1395 = vpack.c.b16 %v1176, %v1173
        %v1396 = vpack.c.b16 %v1177, %v1174
        %v1397 = vpack.c.b16 %v1178, %v1175
        %v1398 = vpack.c.b16 %v1182, %v1179
        %v1399 = vpack.c.b16 %v1183, %v1180
        %v1400 = vpack.c.b16 %v1184, %v1181
        %v1401 = vpack.c.b16 %v1188, %v1185
        %v1402 = vpack.c.b16 %v1189, %v1186
        %v1403 = vpack.c.b16 %v1190, %v1187
        %v1404 = vpack.c.b16 %v1194, %v1191
        %v1405 = vpack.c.b16 %v1195, %v1192
        %v1406 = vpack.c.b16 %v1196, %v1193
        %v1407 = vpack.c.b16 %v1200, %v1197
        %v1408 = vpack.c.b16 %v1201, %v1198
        %v1409 = vpack.c.b16 %v1202, %v1199
        %v1410 = vpack.c.b16 %v1206, %v1203
        %v1411 = vpack.c.b16 %v1207, %v1204
        %v1412 = vpack.c.b16 %v1208, %v1205
        %v1413 = vpack.c.b16 %v1212, %v1209
        %v1414 = vpack.c.b16 %v1213, %v1210
        %v1415 = vpack.c.b16 %v1214, %v1211
        %v1416 = vpack.c.b16 %v1218, %v1215
        %v1417 = vpack.c.b16 %v1219, %v1216
        %v1418 = vpack.c.b16 %v1220, %v1217
        %v1419 = vpack.c.b16 %v1224, %v1221
        %v1420 = vpack.c.b16 %v1225, %v1222
        %v1421 = vpack.c.b16 %v1226, %v1223
        %v1422 = vpack.c.b16 %v1230, %v1227
        %v1423 = vpack.c.b16 %v1231, %v1228
        %v1424 = vpack.c.b16 %v1232, %v1229
        %v1425 = vpack.c.b16 %v1236, %v1233
        %v1426 = vpack.c.b16 %v1237, %v1234
        %v1427 = vpack.c.b16 %v1238, %v1235
        %v1428 = vpack.c.b16 %v1242, %v1239
        %v1429 = vpack.c.b16 %v1243, %v1240
        %v1430 = vpack.c.b16 %v1244, %v1241
        %v1431 = vpack.c.b16 %v1248, %v1245
        %v1432 = vpack.c.b16 %v1249, %v1246
        %v1433 = vpack.c.b16 %v1250, %v1247
        %v1434 = vpack.c.b16 %v1254, %v1251
        %v1435 = vpack.c.b16 %v1255, %v1252
        %v1436 = vpack.c.b16 %v1256, %v1253
        %v1437 = vpack.c.b16 %v1260, %v1257
        %v1438 = vpack.c.b16 %v1261, %v1258
        %v1439 = vpack.c.b16 %v1262, %v1259
        %v1440 = vpack.c.b16 %v1266, %v1263
        %v1441 = vpack.c.b16 %v1267, %v1264
        %v1442 = vpack.c.b16 %v1268, %v1265
        %v1443 = vpack.c.b16 %v1272, %v1269
        %v1444 = vpack.c.b16 %v1273, %v1270
        %v1445 = vpack.c.b16 %v1274, %v1271
        %v1446 = vpack.c.b16 %v1278, %v1275
        %v1447 = vpack.c.b16 %v1279, %v1276
        %v1448 = vpack.c.b16 %v1280, %v1277
        %v1449 = vpack.c.b16 %v1284, %v1281
        %v1450 = vpack.c.b16 %v1285, %v1282
        %v1451 = vpack.c.b16 %v1286, %v1283
        %v1452 = vpack.c.b16 %v1290, %v1287
        %v1453 = vpack.c.b16 %v1291, %v1288
        %v1454 = vpack.c.b16 %v1292, %v1289
        %v1455 = vpack.c.b16 %v1296, %v1293
        %v1456 = vpack.c.b16 %v1297, %v1294
        %v1457 = vpack.c.b16 %v1298, %v1295
        %v1458 = vpack.c.b16 %v1302, %v1299
        %v1459 = vpack.c.b16 %v1303, %v1300
        %v1460 = vpack.c.b16 %v1304, %v1301
        %v1461 = vpack.c.b16 %v1308, %v1305
        %v1462 = vpack.c.b16 %v1309, %v1306
        %v1463 = vpack.c.b16 %v1310, %v1307
        %v1464 = vpack.c.b16 %v1314, %v1311
        %v1465 = vpack.c.b16 %v1315, %v1312
        %v1466 = vpack.c.b16 %v1316, %v1313
        %v1467 = vpack.c.b16 %v1320, %v1317
        %v1468 = vpack.c.b16 %v1321, %v1318
        %v1469 = vpack.c.b16 %v1322, %v1319
        %vm1617 = vcmask 130048
        %v1619 = vsel %vm1617, %v531, 0
        %v1622 = vsel %vm1617, %v538, 0
        %v1625 = vsel %vm1617, %v545, 0
        %v1628 = vsel %vm1617, %v552, 0
        %v1631 = vsel %vm1617, %v559, 0
        %v1634 = vsel %vm1617, %v566, 0
        %v1637 = vsel %vm1617, %v573, 0
        %v1640 = vsel %vm1617, %v580, 0
        %v1643 = vsel %vm1617, %v587, 0
        %v1646 = vsel %vm1617, %v594, 0
        %v1649 = vsel %vm1617, %v601, 0
        %v1652 = vsel %vm1617, %v608, 0
        %v1655 = vsel %vm1617, %v615, 0
        %v1658 = vsel %vm1617, %v622, 0
        %v1661 = vsel %vm1617, %v629, 0
        %v1664 = vsel %vm1617, %v636, 0
        %1666 = vmatprep.subr.bf16.mxu0 %v1324
        %1667 = vmatpush1.bf16.msra.mxu0 %v1323
        %1668 = vmatprep.subr.bf16.mxu0 %v1327
        %1669 = vmatpush1.bf16.msra.mxu0 %v1326
        %1670 = vmatprep.subr.bf16.mxu0 %v1330
        %1671 = vmatpush1.bf16.msra.mxu0 %v1329
        %1672 = vmatprep.subr.bf16.mxu0 %v1333
        %1673 = vmatpush1.bf16.msra.mxu0 %v1332
        %1674 = vmatprep.subr.bf16.mxu0 %v1336
        %1675 = vmatpush1.bf16.msra.mxu0 %v1335
        %1676 = vmatprep.subr.bf16.mxu0 %v1339
        %1677 = vmatpush1.bf16.msra.mxu0 %v1338
        %1678 = vmatprep.subr.bf16.mxu0 %v1342
        %1679 = vmatpush1.bf16.msra.mxu0 %v1341
        %1680 = vmatprep.subr.bf16.mxu0 %v1345
        %1681 = vmatpush1.bf16.msra.mxu0 %v1344
        %1682 = vmatprep.subr.bf16.mxu0 %v1348
        %1683 = vmatpush1.bf16.msra.mxu0 %v1347
        %1684 = vmatprep.subr.bf16.mxu0 %v1351
        %1685 = vmatpush1.bf16.msra.mxu0 %v1350
        %1686 = vmatprep.subr.bf16.mxu0 %v1354
        %1687 = vmatpush1.bf16.msra.mxu0 %v1353
        %1688 = vmatprep.subr.bf16.mxu0 %v1357
        %1689 = vmatpush1.bf16.msra.mxu0 %v1356
        %1690 = vmatprep.subr.bf16.mxu0 %v1360
        %1691 = vmatpush1.bf16.msra.mxu0 %v1359
        %1692 = vmatprep.subr.bf16.mxu0 %v1363
        %1693 = vmatpush1.bf16.msra.mxu0 %v1362
        %1694 = vmatprep.subr.bf16.mxu0 %v1366
        %1695 = vmatpush1.bf16.msra.mxu0 %v1365
        %1696 = vmatprep.subr.bf16.mxu0 %v1369
        %1697 = vmatpush1.bf16.msra.mxu0 %v1368
        %1698 = vmatprep.mubr.bf16.mxu0 %v526
        %1699 = vmatmul.mubr.bf16.gmra.mrb[0].mxu0 %v525
        %v1700 = vpop.f32.mrb[0].mxu0
        %v1701 = vadd.f32 0.0, %v1700
        %v1702 = vpop.f32.mrb[0].mxu0
        %v1703 = vadd.f32 0.0, %v1702
        %v1704 = vpop.f32.mrb[0].mxu0
        %v1705 = vadd.f32 0.0, %v1704
        %v1706 = vpop.f32.mrb[0].mxu0
        %v1707 = vadd.f32 0.0, %v1706
        %1708 = vmatprep.mubr.bf16.mxu0 %v533
        %1709 = vmatmul.mubr.bf16.gmra.mrb[0].mxu0 %v532
        %v1710 = vpop.f32.mrb[0].mxu0
        %v1711 = vadd.f32 0.0, %v1710
        %v1712 = vpop.f32.mrb[0].mxu0
        %v1713 = vadd.f32 0.0, %v1712
        %v1714 = vpop.f32.mrb[0].mxu0
        %v1715 = vadd.f32 0.0, %v1714
        %v1716 = vpop.f32.mrb[0].mxu0
        %v1717 = vadd.f32 0.0, %v1716
        %1718 = vmatprep.mubr.bf16.mxu0 %v540
        %1719 = vmatmul.mubr.bf16.gmra.mrb[0].mxu0 %v539
        %v1720 = vpop.f32.mrb[0].mxu0
        %v1721 = vadd.f32 0.0, %v1720
        %v1722 = vpop.f32.mrb[0].mxu0
        %v1723 = vadd.f32 0.0, %v1722
        %v1724 = vpop.f32.mrb[0].mxu0
        %v1725 = vadd.f32 0.0, %v1724
        %v1726 = vpop.f32.mrb[0].mxu0
        %v1727 = vadd.f32 0.0, %v1726
        %1728 = vmatprep.mubr.bf16.mxu0 %v547
        %1729 = vmatmul.mubr.bf16.gmra.mrb[0].mxu0 %v546
        %v1730 = vpop.f32.mrb[0].mxu0
        %v1731 = vadd.f32 0.0, %v1730
        %v1732 = vpop.f32.mrb[0].mxu0
        %v1733 = vadd.f32 0.0, %v1732
        %v1734 = vpop.f32.mrb[0].mxu0
        %v1735 = vadd.f32 0.0, %v1734
        %v1736 = vpop.f32.mrb[0].mxu0
        %v1737 = vadd.f32 0.0, %v1736
        %1738 = vmatprep.mubr.bf16.mxu0 %v554
        %1739 = vmatmul.mubr.bf16.gmra.mrb[0].mxu0 %v553
        %v1740 = vpop.f32.mrb[0].mxu0
        %v1741 = vadd.f32 0.0, %v1740
        %v1742 = vpop.f32.mrb[0].mxu0
        %v1743 = vadd.f32 0.0, %v1742
        %v1744 = vpop.f32.mrb[0].mxu0
        %v1745 = vadd.f32 0.0, %v1744
        %v1746 = vpop.f32.mrb[0].mxu0
        %v1747 = vadd.f32 0.0, %v1746
        %1748 = vmatprep.mubr.bf16.mxu0 %v561
        %1749 = vmatmul.mubr.bf16.gmra.mrb[0].mxu0 %v560
        %v1750 = vpop.f32.mrb[0].mxu0
        %v1751 = vadd.f32 0.0, %v1750
        %v1752 = vpop.f32.mrb[0].mxu0
        %v1753 = vadd.f32 0.0, %v1752
        %v1754 = vpop.f32.mrb[0].mxu0
        %v1755 = vadd.f32 0.0, %v1754
        %v1756 = vpop.f32.mrb[0].mxu0
        %v1757 = vadd.f32 0.0, %v1756
        %1758 = vmatprep.mubr.bf16.mxu0 %v568
        %1759 = vmatmul.mubr.bf16.gmra.mrb[0].mxu0 %v567
        %v1760 = vpop.f32.mrb[0].mxu0
        %v1761 = vadd.f32 0.0, %v1760
        %v1762 = vpop.f32.mrb[0].mxu0
        %v1763 = vadd.f32 0.0, %v1762
        %v1764 = vpop.f32.mrb[0].mxu0
        %v1765 = vadd.f32 0.0, %v1764
        %v1766 = vpop.f32.mrb[0].mxu0
        %v1767 = vadd.f32 0.0, %v1766
        %1768 = vmatprep.mubr.bf16.mxu0 %v575
        %1769 = vmatmul.mubr.bf16.gmra.mrb[0].mxu0 %v574
        %v1770 = vpop.f32.mrb[0].mxu0
        %v1771 = vadd.f32 0.0, %v1770
        %v1772 = vpop.f32.mrb[0].mxu0
        %v1773 = vadd.f32 0.0, %v1772
        %v1774 = vpop.f32.mrb[0].mxu0
        %v1775 = vadd.f32 0.0, %v1774
        %v1776 = vpop.f32.mrb[0].mxu0
        %v1777 = vadd.f32 0.0, %v1776
        %1778 = vmatprep.mubr.bf16.mxu0 %v582
        %1779 = vmatmul.mubr.bf16.gmra.mrb[0].mxu0 %v581
        %v1780 = vpop.f32.mrb[0].mxu0
        %v1781 = vadd.f32 0.0, %v1780
        %v1782 = vpop.f32.mrb[0].mxu0
        %v1783 = vadd.f32 0.0, %v1782
        %v1784 = vpop.f32.mrb[0].mxu0
        %v1785 = vadd.f32 0.0, %v1784
        %v1786 = vpop.f32.mrb[0].mxu0
        %v1787 = vadd.f32 0.0, %v1786
        %1788 = vmatprep.mubr.bf16.mxu0 %v589
        %1789 = vmatmul.mubr.bf16.gmra.mrb[0].mxu0 %v588
        %v1790 = vpop.f32.mrb[0].mxu0
        %v1791 = vadd.f32 0.0, %v1790
        %v1792 = vpop.f32.mrb[0].mxu0
        %v1793 = vadd.f32 0.0, %v1792
        %v1794 = vpop.f32.mrb[0].mxu0
        %v1795 = vadd.f32 0.0, %v1794
        %v1796 = vpop.f32.mrb[0].mxu0
        %v1797 = vadd.f32 0.0, %v1796
        %1798 = vmatprep.mubr.bf16.mxu0 %v596
        %1799 = vmatmul.mubr.bf16.gmra.mrb[0].mxu0 %v595
        %v1800 = vpop.f32.mrb[0].mxu0
        %v1801 = vadd.f32 0.0, %v1800
        %v1802 = vpop.f32.mrb[0].mxu0
        %v1803 = vadd.f32 0.0, %v1802
        %v1804 = vpop.f32.mrb[0].mxu0
        %v1805 = vadd.f32 0.0, %v1804
        %v1806 = vpop.f32.mrb[0].mxu0
        %v1807 = vadd.f32 0.0, %v1806
        %1808 = vmatprep.mubr.bf16.mxu0 %v603
        %1809 = vmatmul.mubr.bf16.gmra.mrb[0].mxu0 %v602
        %v1810 = vpop.f32.mrb[0].mxu0
        %v1811 = vadd.f32 0.0, %v1810
        %v1812 = vpop.f32.mrb[0].mxu0
        %v1813 = vadd.f32 0.0, %v1812
        %v1814 = vpop.f32.mrb[0].mxu0
        %v1815 = vadd.f32 0.0, %v1814
        %v1816 = vpop.f32.mrb[0].mxu0
        %v1817 = vadd.f32 0.0, %v1816
        %1818 = vmatprep.mubr.bf16.mxu0 %v610
        %1819 = vmatmul.mubr.bf16.gmra.mrb[0].mxu0 %v609
        %v1820 = vpop.f32.mrb[0].mxu0
        %v1821 = vadd.f32 0.0, %v1820
        %v1822 = vpop.f32.mrb[0].mxu0
        %v1823 = vadd.f32 0.0, %v1822
        %v1824 = vpop.f32.mrb[0].mxu0
        %v1825 = vadd.f32 0.0, %v1824
        %v1826 = vpop.f32.mrb[0].mxu0
        %v1827 = vadd.f32 0.0, %v1826
        %1828 = vmatprep.mubr.bf16.mxu0 %v617
        %1829 = vmatmul.mubr.bf16.gmra.mrb[0].mxu0 %v616
        %v1830 = vpop.f32.mrb[0].mxu0
        %v1831 = vadd.f32 0.0, %v1830
        %v1832 = vpop.f32.mrb[0].mxu0
        %v1833 = vadd.f32 0.0, %v1832
        %v1834 = vpop.f32.mrb[0].mxu0
        %v1835 = vadd.f32 0.0, %v1834
        %v1836 = vpop.f32.mrb[0].mxu0
        %v1837 = vadd.f32 0.0, %v1836
        %1838 = vmatprep.mubr.bf16.mxu0 %v624
        %1839 = vmatmul.mubr.bf16.gmra.mrb[0].mxu0 %v623
        %v1840 = vpop.f32.mrb[0].mxu0
        %v1841 = vadd.f32 0.0, %v1840
        %v1842 = vpop.f32.mrb[0].mxu0
        %v1843 = vadd.f32 0.0, %v1842
        %v1844 = vpop.f32.mrb[0].mxu0
        %v1845 = vadd.f32 0.0, %v1844
        %v1846 = vpop.f32.mrb[0].mxu0
        %v1847 = vadd.f32 0.0, %v1846
        %1848 = vmatprep.mubr.bf16.mxu0 %v631
        %1849 = vmatmul.mubr.bf16.gmra.mrb[0].mxu0 %v630
        %v1850 = vpop.f32.mrb[0].mxu0
        %v1851 = vadd.f32 0.0, %v1850
        %v1852 = vpop.f32.mrb[0].mxu0
        %v1853 = vadd.f32 0.0, %v1852
        %v1854 = vpop.f32.mrb[0].mxu0
        %v1855 = vadd.f32 0.0, %v1854
        %v1856 = vpop.f32.mrb[0].mxu0
        %v1857 = vadd.f32 0.0, %v1856
        %1858 = vdwg.mxu0
        %1859 = vmatprep.subr.bf16.mxu0 %v1372
        %1860 = vmatpush1.bf16.msra.mxu0 %v1371
        %1861 = vmatprep.subr.bf16.mxu0 %v1375
        %1862 = vmatpush1.bf16.msra.mxu0 %v1374
        %1863 = vmatprep.subr.bf16.mxu0 %v1378
        %1864 = vmatpush1.bf16.msra.mxu0 %v1377
        %1865 = vmatprep.subr.bf16.mxu0 %v1381
        %1866 = vmatpush1.bf16.msra.mxu0 %v1380
        %1867 = vmatprep.subr.bf16.mxu0 %v1384
        %1868 = vmatpush1.bf16.msra.mxu0 %v1383
        %1869 = vmatprep.subr.bf16.mxu0 %v1387
        %1870 = vmatpush1.bf16.msra.mxu0 %v1386
        %1871 = vmatprep.subr.bf16.mxu0 %v1390
        %1872 = vmatpush1.bf16.msra.mxu0 %v1389
        %1873 = vmatprep.subr.bf16.mxu0 %v1393
        %1874 = vmatpush1.bf16.msra.mxu0 %v1392
        %1875 = vmatprep.subr.bf16.mxu0 %v1396
        %1876 = vmatpush1.bf16.msra.mxu0 %v1395
        %1877 = vmatprep.subr.bf16.mxu0 %v1399
        %1878 = vmatpush1.bf16.msra.mxu0 %v1398
        %1879 = vmatprep.subr.bf16.mxu0 %v1402
        %1880 = vmatpush1.bf16.msra.mxu0 %v1401
        %1881 = vmatprep.subr.bf16.mxu0 %v1405
        %1882 = vmatpush1.bf16.msra.mxu0 %v1404
        %1883 = vmatprep.subr.bf16.mxu0 %v1408
        %1884 = vmatpush1.bf16.msra.mxu0 %v1407
        %1885 = vmatprep.subr.bf16.mxu0 %v1411
        %1886 = vmatpush1.bf16.msra.mxu0 %v1410
        %1887 = vmatprep.subr.bf16.mxu0 %v1414
        %1888 = vmatpush1.bf16.msra.mxu0 %v1413
        %1889 = vmatprep.subr.bf16.mxu0 %v1417
        %1890 = vmatpush1.bf16.msra.mxu0 %v1416
        %1891 = vmatprep.mubr.bf16.mxu0 %v528
        %1892 = vmatmul.mubr.bf16.gmra.mrb[0].mxu0 %v527
        %v1893 = vpop.f32.mrb[0].mxu0
        %v1894 = vadd.f32 %v1701, %v1893
        %v1895 = vpop.f32.mrb[0].mxu0
        %v1896 = vadd.f32 %v1703, %v1895
        %v1897 = vpop.f32.mrb[0].mxu0
        %v1898 = vadd.f32 %v1705, %v1897
        %v1899 = vpop.f32.mrb[0].mxu0
        %v1900 = vadd.f32 %v1707, %v1899
        %1901 = vmatprep.mubr.bf16.mxu0 %v535
        %1902 = vmatmul.mubr.bf16.gmra.mrb[0].mxu0 %v534
        %v1903 = vpop.f32.mrb[0].mxu0
        %v1904 = vadd.f32 %v1711, %v1903
        %v1905 = vpop.f32.mrb[0].mxu0
        %v1906 = vadd.f32 %v1713, %v1905
        %v1907 = vpop.f32.mrb[0].mxu0
        %v1908 = vadd.f32 %v1715, %v1907
        %v1909 = vpop.f32.mrb[0].mxu0
        %v1910 = vadd.f32 %v1717, %v1909
        %1911 = vmatprep.mubr.bf16.mxu0 %v542
        %1912 = vmatmul.mubr.bf16.gmra.mrb[0].mxu0 %v541
        %v1913 = vpop.f32.mrb[0].mxu0
        %v1914 = vadd.f32 %v1721, %v1913
        %v1915 = vpop.f32.mrb[0].mxu0
        %v1916 = vadd.f32 %v1723, %v1915
        %v1917 = vpop.f32.mrb[0].mxu0
        %v1918 = vadd.f32 %v1725, %v1917
        %v1919 = vpop.f32.mrb[0].mxu0
        %v1920 = vadd.f32 %v1727, %v1919
        %1921 = vmatprep.mubr.bf16.mxu0 %v549
        %1922 = vmatmul.mubr.bf16.gmra.mrb[0].mxu0 %v548
        %v1923 = vpop.f32.mrb[0].mxu0
        %v1924 = vadd.f32 %v1731, %v1923
        %v1925 = vpop.f32.mrb[0].mxu0
        %v1926 = vadd.f32 %v1733, %v1925
        %v1927 = vpop.f32.mrb[0].mxu0
        %v1928 = vadd.f32 %v1735, %v1927
        %v1929 = vpop.f32.mrb[0].mxu0
        %v1930 = vadd.f32 %v1737, %v1929
        %1931 = vmatprep.mubr.bf16.mxu0 %v556
        %1932 = vmatmul.mubr.bf16.gmra.mrb[0].mxu0 %v555
        %v1933 = vpop.f32.mrb[0].mxu0
        %v1934 = vadd.f32 %v1741, %v1933
        %v1935 = vpop.f32.mrb[0].mxu0
        %v1936 = vadd.f32 %v1743, %v1935
        %v1937 = vpop.f32.mrb[0].mxu0
        %v1938 = vadd.f32 %v1745, %v1937
        %v1939 = vpop.f32.mrb[0].mxu0
        %v1940 = vadd.f32 %v1747, %v1939
        %1941 = vmatprep.mubr.bf16.mxu0 %v563
        %1942 = vmatmul.mubr.bf16.gmra.mrb[0].mxu0 %v562
        %v1943 = vpop.f32.mrb[0].mxu0
        %v1944 = vadd.f32 %v1751, %v1943
        %v1945 = vpop.f32.mrb[0].mxu0
        %v1946 = vadd.f32 %v1753, %v1945
        %v1947 = vpop.f32.mrb[0].mxu0
        %v1948 = vadd.f32 %v1755, %v1947
        %v1949 = vpop.f32.mrb[0].mxu0
        %v1950 = vadd.f32 %v1757, %v1949
        %1951 = vmatprep.mubr.bf16.mxu0 %v570
        %1952 = vmatmul.mubr.bf16.gmra.mrb[0].mxu0 %v569
        %v1953 = vpop.f32.mrb[0].mxu0
        %v1954 = vadd.f32 %v1761, %v1953
        %v1955 = vpop.f32.mrb[0].mxu0
        %v1956 = vadd.f32 %v1763, %v1955
        %v1957 = vpop.f32.mrb[0].mxu0
        %v1958 = vadd.f32 %v1765, %v1957
        %v1959 = vpop.f32.mrb[0].mxu0
        %v1960 = vadd.f32 %v1767, %v1959
        %1961 = vmatprep.mubr.bf16.mxu0 %v577
        %1962 = vmatmul.mubr.bf16.gmra.mrb[0].mxu0 %v576
        %v1963 = vpop.f32.mrb[0].mxu0
        %v1964 = vadd.f32 %v1771, %v1963
        %v1965 = vpop.f32.mrb[0].mxu0
        %v1966 = vadd.f32 %v1773, %v1965
        %v1967 = vpop.f32.mrb[0].mxu0
        %v1968 = vadd.f32 %v1775, %v1967
        %v1969 = vpop.f32.mrb[0].mxu0
        %v1970 = vadd.f32 %v1777, %v1969
        %1971 = vmatprep.mubr.bf16.mxu0 %v584
        %1972 = vmatmul.mubr.bf16.gmra.mrb[0].mxu0 %v583
        %v1973 = vpop.f32.mrb[0].mxu0
        %v1974 = vadd.f32 %v1781, %v1973
        %v1975 = vpop.f32.mrb[0].mxu0
        %v1976 = vadd.f32 %v1783, %v1975
        %v1977 = vpop.f32.mrb[0].mxu0
        %v1978 = vadd.f32 %v1785, %v1977
        %v1979 = vpop.f32.mrb[0].mxu0
        %v1980 = vadd.f32 %v1787, %v1979
        %1981 = vmatprep.mubr.bf16.mxu0 %v591
        %1982 = vmatmul.mubr.bf16.gmra.mrb[0].mxu0 %v590
        %v1983 = vpop.f32.mrb[0].mxu0
        %v1984 = vadd.f32 %v1791, %v1983
        %v1985 = vpop.f32.mrb[0].mxu0
        %v1986 = vadd.f32 %v1793, %v1985
        %v1987 = vpop.f32.mrb[0].mxu0
        %v1988 = vadd.f32 %v1795, %v1987
        %v1989 = vpop.f32.mrb[0].mxu0
        %v1990 = vadd.f32 %v1797, %v1989
        %1991 = vmatprep.mubr.bf16.mxu0 %v598
        %1992 = vmatmul.mubr.bf16.gmra.mrb[0].mxu0 %v597
        %v1993 = vpop.f32.mrb[0].mxu0
        %v1994 = vadd.f32 %v1801, %v1993
        %v1995 = vpop.f32.mrb[0].mxu0
        %v1996 = vadd.f32 %v1803, %v1995
        %v1997 = vpop.f32.mrb[0].mxu0
        %v1998 = vadd.f32 %v1805, %v1997
        %v1999 = vpop.f32.mrb[0].mxu0
        %v2000 = vadd.f32 %v1807, %v1999
        %2001 = vmatprep.mubr.bf16.mxu0 %v605
        %2002 = vmatmul.mubr.bf16.gmra.mrb[0].mxu0 %v604
        %v2003 = vpop.f32.mrb[0].mxu0
        %v2004 = vadd.f32 %v1811, %v2003
        %v2005 = vpop.f32.mrb[0].mxu0
        %v2006 = vadd.f32 %v1813, %v2005
        %v2007 = vpop.f32.mrb[0].mxu0
        %v2008 = vadd.f32 %v1815, %v2007
        %v2009 = vpop.f32.mrb[0].mxu0
        %v2010 = vadd.f32 %v1817, %v2009
        %2011 = vmatprep.mubr.bf16.mxu0 %v612
        %2012 = vmatmul.mubr.bf16.gmra.mrb[0].mxu0 %v611
        %v2013 = vpop.f32.mrb[0].mxu0
        %v2014 = vadd.f32 %v1821, %v2013
        %v2015 = vpop.f32.mrb[0].mxu0
        %v2016 = vadd.f32 %v1823, %v2015
        %v2017 = vpop.f32.mrb[0].mxu0
        %v2018 = vadd.f32 %v1825, %v2017
        %v2019 = vpop.f32.mrb[0].mxu0
        %v2020 = vadd.f32 %v1827, %v2019
        %2021 = vmatprep.mubr.bf16.mxu0 %v619
        %2022 = vmatmul.mubr.bf16.gmra.mrb[0].mxu0 %v618
        %v2023 = vpop.f32.mrb[0].mxu0
        %v2024 = vadd.f32 %v1831, %v2023
        %v2025 = vpop.f32.mrb[0].mxu0
        %v2026 = vadd.f32 %v1833, %v2025
        %v2027 = vpop.f32.mrb[0].mxu0
        %v2028 = vadd.f32 %v1835, %v2027
        %v2029 = vpop.f32.mrb[0].mxu0
        %v2030 = vadd.f32 %v1837, %v2029
        %2031 = vmatprep.mubr.bf16.mxu0 %v626
        %2032 = vmatmul.mubr.bf16.gmra.mrb[0].mxu0 %v625
        %v2033 = vpop.f32.mrb[0].mxu0
        %v2034 = vadd.f32 %v1841, %v2033
        %v2035 = vpop.f32.mrb[0].mxu0
        %v2036 = vadd.f32 %v1843, %v2035
        %v2037 = vpop.f32.mrb[0].mxu0
        %v2038 = vadd.f32 %v1845, %v2037
        %v2039 = vpop.f32.mrb[0].mxu0
        %v2040 = vadd.f32 %v1847, %v2039
        %2041 = vmatprep.mubr.bf16.mxu0 %v633
        %2042 = vmatmul.mubr.bf16.gmra.mrb[0].mxu0 %v632
        %v2043 = vpop.f32.mrb[0].mxu0
        %v2044 = vadd.f32 %v1851, %v2043
        %v2045 = vpop.f32.mrb[0].mxu0
        %v2046 = vadd.f32 %v1853, %v2045
        %v2047 = vpop.f32.mrb[0].mxu0
        %v2048 = vadd.f32 %v1855, %v2047
        %v2049 = vpop.f32.mrb[0].mxu0
        %v2050 = vadd.f32 %v1857, %v2049
        %2051 = vdwg.mxu0
        %2052 = vmatprep.subr.bf16.mxu0 %v1420
        %2053 = vmatpush1.bf16.msra.mxu0 %v1419
        %2054 = vmatprep.subr.bf16.mxu0 %v1423
        %2055 = vmatpush1.bf16.msra.mxu0 %v1422
        %2056 = vmatprep.subr.bf16.mxu0 %v1426
        %2057 = vmatpush1.bf16.msra.mxu0 %v1425
        %2058 = vmatprep.subr.bf16.mxu0 %v1429
        %2059 = vmatpush1.bf16.msra.mxu0 %v1428
        %2060 = vmatprep.subr.bf16.mxu0 %v1432
        %2061 = vmatpush1.bf16.msra.mxu0 %v1431
        %2062 = vmatprep.subr.bf16.mxu0 %v1435
        %2063 = vmatpush1.bf16.msra.mxu0 %v1434
        %2064 = vmatprep.subr.bf16.mxu0 %v1438
        %2065 = vmatpush1.bf16.msra.mxu0 %v1437
        %2066 = vmatprep.subr.bf16.mxu0 %v1441
        %2067 = vmatpush1.bf16.msra.mxu0 %v1440
        %2068 = vmatprep.subr.bf16.mxu0 %v1444
        %2069 = vmatpush1.bf16.msra.mxu0 %v1443
        %2070 = vmatprep.subr.bf16.mxu0 %v1447
        %2071 = vmatpush1.bf16.msra.mxu0 %v1446
        %2072 = vmatprep.subr.bf16.mxu0 %v1450
        %2073 = vmatpush1.bf16.msra.mxu0 %v1449
        %2074 = vmatprep.subr.bf16.mxu0 %v1453
        %2075 = vmatpush1.bf16.msra.mxu0 %v1452
        %2076 = vmatprep.subr.bf16.mxu0 %v1456
        %2077 = vmatpush1.bf16.msra.mxu0 %v1455
        %2078 = vmatprep.subr.bf16.mxu0 %v1459
        %2079 = vmatpush1.bf16.msra.mxu0 %v1458
        %2080 = vmatprep.subr.bf16.mxu0 %v1462
        %2081 = vmatpush1.bf16.msra.mxu0 %v1461
        %2082 = vmatprep.subr.bf16.mxu0 %v1465
        %2083 = vmatpush1.bf16.msra.mxu0 %v1464
        %2084 = vmatprep.mubr.bf16.mxu0 %v530
        %2085 = vmatmul.mubr.bf16.gmra.mrb[0].mxu0 %v529
        %v2086 = vpop.f32.mrb[0].mxu0
        %v2087 = vadd.f32 %v1894, %v2086
        %v2088 = vpop.f32.mrb[0].mxu0
        %v2089 = vadd.f32 %v1896, %v2088
        %v2090 = vpop.f32.mrb[0].mxu0
        %v2091 = vadd.f32 %v1898, %v2090
        %v2092 = vpop.f32.mrb[0].mxu0
        %v2093 = vadd.f32 %v1900, %v2092
        %2094 = vmatprep.mubr.bf16.mxu0 %v537
        %2095 = vmatmul.mubr.bf16.gmra.mrb[0].mxu0 %v536
        %v2096 = vpop.f32.mrb[0].mxu0
        %v2097 = vadd.f32 %v1904, %v2096
        %v2098 = vpop.f32.mrb[0].mxu0
        %v2099 = vadd.f32 %v1906, %v2098
        %v2100 = vpop.f32.mrb[0].mxu0
        %v2101 = vadd.f32 %v1908, %v2100
        %v2102 = vpop.f32.mrb[0].mxu0
        %v2103 = vadd.f32 %v1910, %v2102
        %2104 = vmatprep.mubr.bf16.mxu0 %v544
        %2105 = vmatmul.mubr.bf16.gmra.mrb[0].mxu0 %v543
        %v2106 = vpop.f32.mrb[0].mxu0
        %v2107 = vadd.f32 %v1914, %v2106
        %v2108 = vpop.f32.mrb[0].mxu0
        %v2109 = vadd.f32 %v1916, %v2108
        %v2110 = vpop.f32.mrb[0].mxu0
        %v2111 = vadd.f32 %v1918, %v2110
        %v2112 = vpop.f32.mrb[0].mxu0
        %v2113 = vadd.f32 %v1920, %v2112
        %2114 = vmatprep.mubr.bf16.mxu0 %v551
        %2115 = vmatmul.mubr.bf16.gmra.mrb[0].mxu0 %v550
        %v2116 = vpop.f32.mrb[0].mxu0
        %v2117 = vadd.f32 %v1924, %v2116
        %v2118 = vpop.f32.mrb[0].mxu0
        %v2119 = vadd.f32 %v1926, %v2118
        %v2120 = vpop.f32.mrb[0].mxu0
        %v2121 = vadd.f32 %v1928, %v2120
        %v2122 = vpop.f32.mrb[0].mxu0
        %v2123 = vadd.f32 %v1930, %v2122
        %2124 = vmatprep.mubr.bf16.mxu0 %v558
        %2125 = vmatmul.mubr.bf16.gmra.mrb[0].mxu0 %v557
        %v2126 = vpop.f32.mrb[0].mxu0
        %v2127 = vadd.f32 %v1934, %v2126
        %v2128 = vpop.f32.mrb[0].mxu0
        %v2129 = vadd.f32 %v1936, %v2128
        %v2130 = vpop.f32.mrb[0].mxu0
        %v2131 = vadd.f32 %v1938, %v2130
        %v2132 = vpop.f32.mrb[0].mxu0
        %v2133 = vadd.f32 %v1940, %v2132
        %2134 = vmatprep.mubr.bf16.mxu0 %v565
        %2135 = vmatmul.mubr.bf16.gmra.mrb[0].mxu0 %v564
        %v2136 = vpop.f32.mrb[0].mxu0
        %v2137 = vadd.f32 %v1944, %v2136
        %v2138 = vpop.f32.mrb[0].mxu0
        %v2139 = vadd.f32 %v1946, %v2138
        %v2140 = vpop.f32.mrb[0].mxu0
        %v2141 = vadd.f32 %v1948, %v2140
        %v2142 = vpop.f32.mrb[0].mxu0
        %v2143 = vadd.f32 %v1950, %v2142
        %2144 = vmatprep.mubr.bf16.mxu0 %v572
        %2145 = vmatmul.mubr.bf16.gmra.mrb[0].mxu0 %v571
        %v2146 = vpop.f32.mrb[0].mxu0
        %v2147 = vadd.f32 %v1954, %v2146
        %v2148 = vpop.f32.mrb[0].mxu0
        %v2149 = vadd.f32 %v1956, %v2148
        %v2150 = vpop.f32.mrb[0].mxu0
        %v2151 = vadd.f32 %v1958, %v2150
        %v2152 = vpop.f32.mrb[0].mxu0
        %v2153 = vadd.f32 %v1960, %v2152
        %2154 = vmatprep.mubr.bf16.mxu0 %v579
        %2155 = vmatmul.mubr.bf16.gmra.mrb[0].mxu0 %v578
        %v2156 = vpop.f32.mrb[0].mxu0
        %v2157 = vadd.f32 %v1964, %v2156
        %v2158 = vpop.f32.mrb[0].mxu0
        %v2159 = vadd.f32 %v1966, %v2158
        %v2160 = vpop.f32.mrb[0].mxu0
        %v2161 = vadd.f32 %v1968, %v2160
        %v2162 = vpop.f32.mrb[0].mxu0
        %v2163 = vadd.f32 %v1970, %v2162
        %2164 = vmatprep.mubr.bf16.mxu0 %v586
        %2165 = vmatmul.mubr.bf16.gmra.mrb[0].mxu0 %v585
        %v2166 = vpop.f32.mrb[0].mxu0
        %v2167 = vadd.f32 %v1974, %v2166
        %v2168 = vpop.f32.mrb[0].mxu0
        %v2169 = vadd.f32 %v1976, %v2168
        %v2170 = vpop.f32.mrb[0].mxu0
        %v2171 = vadd.f32 %v1978, %v2170
        %v2172 = vpop.f32.mrb[0].mxu0
        %v2173 = vadd.f32 %v1980, %v2172
        %2174 = vmatprep.mubr.bf16.mxu0 %v593
        %2175 = vmatmul.mubr.bf16.gmra.mrb[0].mxu0 %v592
        %v2176 = vpop.f32.mrb[0].mxu0
        %v2177 = vadd.f32 %v1984, %v2176
        %v2178 = vpop.f32.mrb[0].mxu0
        %v2179 = vadd.f32 %v1986, %v2178
        %v2180 = vpop.f32.mrb[0].mxu0
        %v2181 = vadd.f32 %v1988, %v2180
        %v2182 = vpop.f32.mrb[0].mxu0
        %v2183 = vadd.f32 %v1990, %v2182
        %2184 = vmatprep.mubr.bf16.mxu0 %v600
        %2185 = vmatmul.mubr.bf16.gmra.mrb[0].mxu0 %v599
        %v2186 = vpop.f32.mrb[0].mxu0
        %v2187 = vadd.f32 %v1994, %v2186
        %v2188 = vpop.f32.mrb[0].mxu0
        %v2189 = vadd.f32 %v1996, %v2188
        %v2190 = vpop.f32.mrb[0].mxu0
        %v2191 = vadd.f32 %v1998, %v2190
        %v2192 = vpop.f32.mrb[0].mxu0
        %v2193 = vadd.f32 %v2000, %v2192
        %2194 = vmatprep.mubr.bf16.mxu0 %v607
        %2195 = vmatmul.mubr.bf16.gmra.mrb[0].mxu0 %v606
        %v2196 = vpop.f32.mrb[0].mxu0
        %v2197 = vadd.f32 %v2004, %v2196
        %v2198 = vpop.f32.mrb[0].mxu0
        %v2199 = vadd.f32 %v2006, %v2198
        %v2200 = vpop.f32.mrb[0].mxu0
        %v2201 = vadd.f32 %v2008, %v2200
        %v2202 = vpop.f32.mrb[0].mxu0
        %v2203 = vadd.f32 %v2010, %v2202
        %2204 = vmatprep.mubr.bf16.mxu0 %v614
        %2205 = vmatmul.mubr.bf16.gmra.mrb[0].mxu0 %v613
        %v2206 = vpop.f32.mrb[0].mxu0
        %v2207 = vadd.f32 %v2014, %v2206
        %v2208 = vpop.f32.mrb[0].mxu0
        %v2209 = vadd.f32 %v2016, %v2208
        %v2210 = vpop.f32.mrb[0].mxu0
        %v2211 = vadd.f32 %v2018, %v2210
        %v2212 = vpop.f32.mrb[0].mxu0
        %v2213 = vadd.f32 %v2020, %v2212
        %2214 = vmatprep.mubr.bf16.mxu0 %v621
        %2215 = vmatmul.mubr.bf16.gmra.mrb[0].mxu0 %v620
        %v2216 = vpop.f32.mrb[0].mxu0
        %v2217 = vadd.f32 %v2024, %v2216
        %v2218 = vpop.f32.mrb[0].mxu0
        %v2219 = vadd.f32 %v2026, %v2218
        %v2220 = vpop.f32.mrb[0].mxu0
        %v2221 = vadd.f32 %v2028, %v2220
        %v2222 = vpop.f32.mrb[0].mxu0
        %v2223 = vadd.f32 %v2030, %v2222
        %2224 = vmatprep.mubr.bf16.mxu0 %v628
        %2225 = vmatmul.mubr.bf16.gmra.mrb[0].mxu0 %v627
        %v2226 = vpop.f32.mrb[0].mxu0
        %v2227 = vadd.f32 %v2034, %v2226
        %v2228 = vpop.f32.mrb[0].mxu0
        %v2229 = vadd.f32 %v2036, %v2228
        %v2230 = vpop.f32.mrb[0].mxu0
        %v2231 = vadd.f32 %v2038, %v2230
        %v2232 = vpop.f32.mrb[0].mxu0
        %v2233 = vadd.f32 %v2040, %v2232
        %2234 = vmatprep.mubr.bf16.mxu0 %v635
        %2235 = vmatmul.mubr.bf16.gmra.mrb[0].mxu0 %v634
        %v2236 = vpop.f32.mrb[0].mxu0
        %v2237 = vadd.f32 %v2044, %v2236
        %v2238 = vpop.f32.mrb[0].mxu0
        %v2239 = vadd.f32 %v2046, %v2238
        %v2240 = vpop.f32.mrb[0].mxu0
        %v2241 = vadd.f32 %v2048, %v2240
        %v2242 = vpop.f32.mrb[0].mxu0
        %v2243 = vadd.f32 %v2050, %v2242
        %2244 = vdwg.mxu0
        %2245 = vmatprep.subr.bf16.mxu0 %v1468
        %2246 = vmatpush1.bf16.msra.mxu0 %v1467
        %2247 = vmatprep.subr.bf16.mxu0 0
        %2248 = vmatpush1.bf16.msra.mxu0 0
        %2249 = vmatprep.subr.bf16.mxu0 0
        %2250 = vmatpush1.bf16.msra.mxu0 0
        %2251 = vmatprep.subr.bf16.mxu0 0
        %2252 = vmatpush1.bf16.msra.mxu0 0
        %2253 = vmatprep.subr.bf16.mxu0 0
        %2254 = vmatpush1.bf16.msra.mxu0 0
        %2255 = vmatprep.subr.bf16.mxu0 0
        %2256 = vmatpush1.bf16.msra.mxu0 0
        %2257 = vmatprep.subr.bf16.mxu0 0
        %2258 = vmatpush1.bf16.msra.mxu0 0
        %2259 = vmatprep.subr.bf16.mxu0 0
        %2260 = vmatpush1.bf16.msra.mxu0 0
        %2261 = vmatprep.subr.bf16.mxu0 0
        %2262 = vmatpush1.bf16.msra.mxu0 0
        %2263 = vmatprep.subr.bf16.mxu0 0
        %2264 = vmatpush1.bf16.msra.mxu0 0
        %2265 = vmatprep.subr.bf16.mxu0 0
        %2266 = vmatpush1.bf16.msra.mxu0 0
        %2267 = vmatprep.subr.bf16.mxu0 0
        %2268 = vmatpush1.bf16.msra.mxu0 0
        %2269 = vmatprep.subr.bf16.mxu0 0
        %2270 = vmatpush1.bf16.msra.mxu0 0
        %2271 = vmatprep.subr.bf16.mxu0 0
        %2272 = vmatpush1.bf16.msra.mxu0 0
        %2273 = vmatprep.subr.bf16.mxu0 0
        %2274 = vmatpush1.bf16.msra.mxu0 0
        %2275 = vmatprep.subr.bf16.mxu0 0
        %2276 = vmatpush1.bf16.msra.mxu0 0
        %2277 = vmatprep.mubr.bf16.mxu0 0
        %2278 = vmatmul.mubr.bf16.gmra.mrb[0].mxu0 %v1619
        %v2279 = vpop.f32.mrb[0].mxu0
        %v2280 = vadd.f32 %v2087, %v2279
        %v2281 = vpop.f32.mrb[0].mxu0
        %v2282 = vadd.f32 %v2089, %v2281
        %v2283 = vpop.f32.mrb[0].mxu0
        %v2284 = vadd.f32 %v2091, %v2283
        %v2285 = vpop.f32.mrb[0].mxu0
        %v2286 = vadd.f32 %v2093, %v2285
        %2287 = vmatprep.mubr.bf16.mxu0 0
        %2288 = vmatmul.mubr.bf16.gmra.mrb[0].mxu0 %v1622
        %v2289 = vpop.f32.mrb[0].mxu0
        %v2290 = vadd.f32 %v2097, %v2289
        %v2291 = vpop.f32.mrb[0].mxu0
        %v2292 = vadd.f32 %v2099, %v2291
        %v2293 = vpop.f32.mrb[0].mxu0
        %v2294 = vadd.f32 %v2101, %v2293
        %v2295 = vpop.f32.mrb[0].mxu0
        %v2296 = vadd.f32 %v2103, %v2295
        %2297 = vmatprep.mubr.bf16.mxu0 0
        %2298 = vmatmul.mubr.bf16.gmra.mrb[0].mxu0 %v1625
        %v2299 = vpop.f32.mrb[0].mxu0
        %v2300 = vadd.f32 %v2107, %v2299
        %v2301 = vpop.f32.mrb[0].mxu0
        %v2302 = vadd.f32 %v2109, %v2301
        %v2303 = vpop.f32.mrb[0].mxu0
        %v2304 = vadd.f32 %v2111, %v2303
        %v2305 = vpop.f32.mrb[0].mxu0
        %v2306 = vadd.f32 %v2113, %v2305
        %2307 = vmatprep.mubr.bf16.mxu0 0
        %2308 = vmatmul.mubr.bf16.gmra.mrb[0].mxu0 %v1628
        %v2309 = vpop.f32.mrb[0].mxu0
        %v2310 = vadd.f32 %v2117, %v2309
        %v2311 = vpop.f32.mrb[0].mxu0
        %v2312 = vadd.f32 %v2119, %v2311
        %v2313 = vpop.f32.mrb[0].mxu0
        %v2314 = vadd.f32 %v2121, %v2313
        %v2315 = vpop.f32.mrb[0].mxu0
        %v2316 = vadd.f32 %v2123, %v2315
        %2317 = vmatprep.mubr.bf16.mxu0 0
        %2318 = vmatmul.mubr.bf16.gmra.mrb[0].mxu0 %v1631
        %v2319 = vpop.f32.mrb[0].mxu0
        %v2320 = vadd.f32 %v2127, %v2319
        %v2321 = vpop.f32.mrb[0].mxu0
        %v2322 = vadd.f32 %v2129, %v2321
        %v2323 = vpop.f32.mrb[0].mxu0
        %v2324 = vadd.f32 %v2131, %v2323
        %v2325 = vpop.f32.mrb[0].mxu0
        %v2326 = vadd.f32 %v2133, %v2325
        %2327 = vmatprep.mubr.bf16.mxu0 0
        %2328 = vmatmul.mubr.bf16.gmra.mrb[0].mxu0 %v1634
        %v2329 = vpop.f32.mrb[0].mxu0
        %v2330 = vadd.f32 %v2137, %v2329
        %v2331 = vpop.f32.mrb[0].mxu0
        %v2332 = vadd.f32 %v2139, %v2331
        %v2333 = vpop.f32.mrb[0].mxu0
        %v2334 = vadd.f32 %v2141, %v2333
        %v2335 = vpop.f32.mrb[0].mxu0
        %v2336 = vadd.f32 %v2143, %v2335
        %2337 = vmatprep.mubr.bf16.mxu0 0
        %2338 = vmatmul.mubr.bf16.gmra.mrb[0].mxu0 %v1637
        %v2339 = vpop.f32.mrb[0].mxu0
        %v2340 = vadd.f32 %v2147, %v2339
        %v2341 = vpop.f32.mrb[0].mxu0
        %v2342 = vadd.f32 %v2149, %v2341
        %v2343 = vpop.f32.mrb[0].mxu0
        %v2344 = vadd.f32 %v2151, %v2343
        %v2345 = vpop.f32.mrb[0].mxu0
        %v2346 = vadd.f32 %v2153, %v2345
        %2347 = vmatprep.mubr.bf16.mxu0 0
        %2348 = vmatmul.mubr.bf16.gmra.mrb[0].mxu0 %v1640
        %v2349 = vpop.f32.mrb[0].mxu0
        %v2350 = vadd.f32 %v2157, %v2349
        %v2351 = vpop.f32.mrb[0].mxu0
        %v2352 = vadd.f32 %v2159, %v2351
        %v2353 = vpop.f32.mrb[0].mxu0
        %v2354 = vadd.f32 %v2161, %v2353
        %v2355 = vpop.f32.mrb[0].mxu0
        %v2356 = vadd.f32 %v2163, %v2355
        %2357 = vmatprep.mubr.bf16.mxu0 0
        %2358 = vmatmul.mubr.bf16.gmra.mrb[0].mxu0 %v1643
        %v2359 = vpop.f32.mrb[0].mxu0
        %v2360 = vadd.f32 %v2167, %v2359
        %v2361 = vpop.f32.mrb[0].mxu0
        %v2362 = vadd.f32 %v2169, %v2361
        %v2363 = vpop.f32.mrb[0].mxu0
        %v2364 = vadd.f32 %v2171, %v2363
        %v2365 = vpop.f32.mrb[0].mxu0
        %v2366 = vadd.f32 %v2173, %v2365
        %2367 = vmatprep.mubr.bf16.mxu0 0
        %2368 = vmatmul.mubr.bf16.gmra.mrb[0].mxu0 %v1646
        %v2369 = vpop.f32.mrb[0].mxu0
        %v2370 = vadd.f32 %v2177, %v2369
        %v2371 = vpop.f32.mrb[0].mxu0
        %v2372 = vadd.f32 %v2179, %v2371
        %v2373 = vpop.f32.mrb[0].mxu0
        %v2374 = vadd.f32 %v2181, %v2373
        %v2375 = vpop.f32.mrb[0].mxu0
        %v2376 = vadd.f32 %v2183, %v2375
        %2377 = vmatprep.mubr.bf16.mxu0 0
        %2378 = vmatmul.mubr.bf16.gmra.mrb[0].mxu0 %v1649
        %v2379 = vpop.f32.mrb[0].mxu0
        %v2380 = vadd.f32 %v2187, %v2379
        %v2381 = vpop.f32.mrb[0].mxu0
        %v2382 = vadd.f32 %v2189, %v2381
        %v2383 = vpop.f32.mrb[0].mxu0
        %v2384 = vadd.f32 %v2191, %v2383
        %v2385 = vpop.f32.mrb[0].mxu0
        %v2386 = vadd.f32 %v2193, %v2385
        %2387 = vmatprep.mubr.bf16.mxu0 0
        %2388 = vmatmul.mubr.bf16.gmra.mrb[0].mxu0 %v1652
        %v2389 = vpop.f32.mrb[0].mxu0
        %v2390 = vadd.f32 %v2197, %v2389
        %v2391 = vpop.f32.mrb[0].mxu0
        %v2392 = vadd.f32 %v2199, %v2391
        %v2393 = vpop.f32.mrb[0].mxu0
        %v2394 = vadd.f32 %v2201, %v2393
        %v2395 = vpop.f32.mrb[0].mxu0
        %v2396 = vadd.f32 %v2203, %v2395
        %2397 = vmatprep.mubr.bf16.mxu0 0
        %2398 = vmatmul.mubr.bf16.gmra.mrb[0].mxu0 %v1655
        %v2399 = vpop.f32.mrb[0].mxu0
        %v2400 = vadd.f32 %v2207, %v2399
        %v2401 = vpop.f32.mrb[0].mxu0
        %v2402 = vadd.f32 %v2209, %v2401
        %v2403 = vpop.f32.mrb[0].mxu0
        %v2404 = vadd.f32 %v2211, %v2403
        %v2405 = vpop.f32.mrb[0].mxu0
        %v2406 = vadd.f32 %v2213, %v2405
        %2407 = vmatprep.mubr.bf16.mxu0 0
        %2408 = vmatmul.mubr.bf16.gmra.mrb[0].mxu0 %v1658
        %v2409 = vpop.f32.mrb[0].mxu0
        %v2410 = vadd.f32 %v2217, %v2409
        %v2411 = vpop.f32.mrb[0].mxu0
        %v2412 = vadd.f32 %v2219, %v2411
        %v2413 = vpop.f32.mrb[0].mxu0
        %v2414 = vadd.f32 %v2221, %v2413
        %v2415 = vpop.f32.mrb[0].mxu0
        %v2416 = vadd.f32 %v2223, %v2415
        %2417 = vmatprep.mubr.bf16.mxu0 0
        %2418 = vmatmul.mubr.bf16.gmra.mrb[0].mxu0 %v1661
        %v2419 = vpop.f32.mrb[0].mxu0
        %v2420 = vadd.f32 %v2227, %v2419
        %v2421 = vpop.f32.mrb[0].mxu0
        %v2422 = vadd.f32 %v2229, %v2421
        %v2423 = vpop.f32.mrb[0].mxu0
        %v2424 = vadd.f32 %v2231, %v2423
        %v2425 = vpop.f32.mrb[0].mxu0
        %v2426 = vadd.f32 %v2233, %v2425
        %2427 = vmatprep.mubr.bf16.mxu0 0
        %2428 = vmatmul.mubr.bf16.gmra.mrb[0].mxu0 %v1664
        %v2429 = vpop.f32.mrb[0].mxu0
        %v2430 = vadd.f32 %v2237, %v2429
        %v2431 = vpop.f32.mrb[0].mxu0
        %v2432 = vadd.f32 %v2239, %v2431
        %v2433 = vpop.f32.mrb[0].mxu0
        %v2434 = vadd.f32 %v2241, %v2433
        %v2435 = vpop.f32.mrb[0].mxu0
        %v2436 = vadd.f32 %v2243, %v2435
        %2437 = vdwg.mxu0
        %2438 = vmatprep.subr.bf16.mxu0 0
        %2439 = vmatpush1.bf16.msra.mxu0 %v1325
        %2440 = vmatprep.subr.bf16.mxu0 0
        %2441 = vmatpush1.bf16.msra.mxu0 %v1328
        %2442 = vmatprep.subr.bf16.mxu0 0
        %2443 = vmatpush1.bf16.msra.mxu0 %v1331
        %2444 = vmatprep.subr.bf16.mxu0 0
        %2445 = vmatpush1.bf16.msra.mxu0 %v1334
        %2446 = vmatprep.subr.bf16.mxu0 0
        %2447 = vmatpush1.bf16.msra.mxu0 %v1337
        %2448 = vmatprep.subr.bf16.mxu0 0
        %2449 = vmatpush1.bf16.msra.mxu0 %v1340
        %2450 = vmatprep.subr.bf16.mxu0 0
        %2451 = vmatpush1.bf16.msra.mxu0 %v1343
        %2452 = vmatprep.subr.bf16.mxu0 0
        %2453 = vmatpush1.bf16.msra.mxu0 %v1346
        %2454 = vmatprep.subr.bf16.mxu0 0
        %2455 = vmatpush1.bf16.msra.mxu0 %v1349
        %2456 = vmatprep.subr.bf16.mxu0 0
        %2457 = vmatpush1.bf16.msra.mxu0 %v1352
        %2458 = vmatprep.subr.bf16.mxu0 0
        %2459 = vmatpush1.bf16.msra.mxu0 %v1355
        %2460 = vmatprep.subr.bf16.mxu0 0
        %2461 = vmatpush1.bf16.msra.mxu0 %v1358
        %2462 = vmatprep.subr.bf16.mxu0 0
        %2463 = vmatpush1.bf16.msra.mxu0 %v1361
        %2464 = vmatprep.subr.bf16.mxu0 0
        %2465 = vmatpush1.bf16.msra.mxu0 %v1364
        %2466 = vmatprep.subr.bf16.mxu0 0
        %2467 = vmatpush1.bf16.msra.mxu0 %v1367
        %2468 = vmatprep.subr.bf16.mxu0 0
        %2469 = vmatpush1.bf16.msra.mxu0 %v1370
        %2470 = vmatprep.mubr.bf16.mxu0 %v526
        %2471 = vmatmul.mubr.bf16.gmra.mrb[0].mxu0 %v525
        %v2472 = vpop.f32.mrb[0].mxu0
        %v2473 = vadd.f32 0.0, %v2472
        %v2474 = vpop.f32.mrb[0].mxu0
        %v2475 = vpop.f32.mrb[0].mxu0
        %v2476 = vadd.f32 0.0, %v2475
        %v2477 = vpop.f32.mrb[0].mxu0
        %2478 = vmatprep.mubr.bf16.mxu0 %v533
        %2479 = vmatmul.mubr.bf16.gmra.mrb[0].mxu0 %v532
        %v2480 = vpop.f32.mrb[0].mxu0
        %v2481 = vadd.f32 0.0, %v2480
        %v2482 = vpop.f32.mrb[0].mxu0
        %v2483 = vpop.f32.mrb[0].mxu0
        %v2484 = vadd.f32 0.0, %v2483
        %v2485 = vpop.f32.mrb[0].mxu0
        %2486 = vmatprep.mubr.bf16.mxu0 %v540
        %2487 = vmatmul.mubr.bf16.gmra.mrb[0].mxu0 %v539
        %v2488 = vpop.f32.mrb[0].mxu0
        %v2489 = vadd.f32 0.0, %v2488
        %v2490 = vpop.f32.mrb[0].mxu0
        %v2491 = vpop.f32.mrb[0].mxu0
        %v2492 = vadd.f32 0.0, %v2491
        %v2493 = vpop.f32.mrb[0].mxu0
        %2494 = vmatprep.mubr.bf16.mxu0 %v547
        %2495 = vmatmul.mubr.bf16.gmra.mrb[0].mxu0 %v546
        %v2496 = vpop.f32.mrb[0].mxu0
        %v2497 = vadd.f32 0.0, %v2496
        %v2498 = vpop.f32.mrb[0].mxu0
        %v2499 = vpop.f32.mrb[0].mxu0
        %v2500 = vadd.f32 0.0, %v2499
        %v2501 = vpop.f32.mrb[0].mxu0
        %2502 = vmatprep.mubr.bf16.mxu0 %v554
        %2503 = vmatmul.mubr.bf16.gmra.mrb[0].mxu0 %v553
        %v2504 = vpop.f32.mrb[0].mxu0
        %v2505 = vadd.f32 0.0, %v2504
        %v2506 = vpop.f32.mrb[0].mxu0
        %v2507 = vpop.f32.mrb[0].mxu0
        %v2508 = vadd.f32 0.0, %v2507
        %v2509 = vpop.f32.mrb[0].mxu0
        %2510 = vmatprep.mubr.bf16.mxu0 %v561
        %2511 = vmatmul.mubr.bf16.gmra.mrb[0].mxu0 %v560
        %v2512 = vpop.f32.mrb[0].mxu0
        %v2513 = vadd.f32 0.0, %v2512
        %v2514 = vpop.f32.mrb[0].mxu0
        %v2515 = vpop.f32.mrb[0].mxu0
        %v2516 = vadd.f32 0.0, %v2515
        %v2517 = vpop.f32.mrb[0].mxu0
        %2518 = vmatprep.mubr.bf16.mxu0 %v568
        %2519 = vmatmul.mubr.bf16.gmra.mrb[0].mxu0 %v567
        %v2520 = vpop.f32.mrb[0].mxu0
        %v2521 = vadd.f32 0.0, %v2520
        %v2522 = vpop.f32.mrb[0].mxu0
        %v2523 = vpop.f32.mrb[0].mxu0
        %v2524 = vadd.f32 0.0, %v2523
        %v2525 = vpop.f32.mrb[0].mxu0
        %2526 = vmatprep.mubr.bf16.mxu0 %v575
        %2527 = vmatmul.mubr.bf16.gmra.mrb[0].mxu0 %v574
        %v2528 = vpop.f32.mrb[0].mxu0
        %v2529 = vadd.f32 0.0, %v2528
        %v2530 = vpop.f32.mrb[0].mxu0
        %v2531 = vpop.f32.mrb[0].mxu0
        %v2532 = vadd.f32 0.0, %v2531
        %v2533 = vpop.f32.mrb[0].mxu0
        %2534 = vmatprep.mubr.bf16.mxu0 %v582
        %2535 = vmatmul.mubr.bf16.gmra.mrb[0].mxu0 %v581
        %v2536 = vpop.f32.mrb[0].mxu0
        %v2537 = vadd.f32 0.0, %v2536
        %v2538 = vpop.f32.mrb[0].mxu0
        %v2539 = vpop.f32.mrb[0].mxu0
        %v2540 = vadd.f32 0.0, %v2539
        %v2541 = vpop.f32.mrb[0].mxu0
        %2542 = vmatprep.mubr.bf16.mxu0 %v589
        %2543 = vmatmul.mubr.bf16.gmra.mrb[0].mxu0 %v588
        %v2544 = vpop.f32.mrb[0].mxu0
        %v2545 = vadd.f32 0.0, %v2544
        %v2546 = vpop.f32.mrb[0].mxu0
        %v2547 = vpop.f32.mrb[0].mxu0
        %v2548 = vadd.f32 0.0, %v2547
        %v2549 = vpop.f32.mrb[0].mxu0
        %2550 = vmatprep.mubr.bf16.mxu0 %v596
        %2551 = vmatmul.mubr.bf16.gmra.mrb[0].mxu0 %v595
        %v2552 = vpop.f32.mrb[0].mxu0
        %v2553 = vadd.f32 0.0, %v2552
        %v2554 = vpop.f32.mrb[0].mxu0
        %v2555 = vpop.f32.mrb[0].mxu0
        %v2556 = vadd.f32 0.0, %v2555
        %v2557 = vpop.f32.mrb[0].mxu0
        %2558 = vmatprep.mubr.bf16.mxu0 %v603
        %2559 = vmatmul.mubr.bf16.gmra.mrb[0].mxu0 %v602
        %v2560 = vpop.f32.mrb[0].mxu0
        %v2561 = vadd.f32 0.0, %v2560
        %v2562 = vpop.f32.mrb[0].mxu0
        %v2563 = vpop.f32.mrb[0].mxu0
        %v2564 = vadd.f32 0.0, %v2563
        %v2565 = vpop.f32.mrb[0].mxu0
        %2566 = vmatprep.mubr.bf16.mxu0 %v610
        %2567 = vmatmul.mubr.bf16.gmra.mrb[0].mxu0 %v609
        %v2568 = vpop.f32.mrb[0].mxu0
        %v2569 = vadd.f32 0.0, %v2568
        %v2570 = vpop.f32.mrb[0].mxu0
        %v2571 = vpop.f32.mrb[0].mxu0
        %v2572 = vadd.f32 0.0, %v2571
        %v2573 = vpop.f32.mrb[0].mxu0
        %2574 = vmatprep.mubr.bf16.mxu0 %v617
        %2575 = vmatmul.mubr.bf16.gmra.mrb[0].mxu0 %v616
        %v2576 = vpop.f32.mrb[0].mxu0
        %v2577 = vadd.f32 0.0, %v2576
        %v2578 = vpop.f32.mrb[0].mxu0
        %v2579 = vpop.f32.mrb[0].mxu0
        %v2580 = vadd.f32 0.0, %v2579
        %v2581 = vpop.f32.mrb[0].mxu0
        %2582 = vmatprep.mubr.bf16.mxu0 %v624
        %2583 = vmatmul.mubr.bf16.gmra.mrb[0].mxu0 %v623
        %v2584 = vpop.f32.mrb[0].mxu0
        %v2585 = vadd.f32 0.0, %v2584
        %v2586 = vpop.f32.mrb[0].mxu0
        %v2587 = vpop.f32.mrb[0].mxu0
        %v2588 = vadd.f32 0.0, %v2587
        %v2589 = vpop.f32.mrb[0].mxu0
        %2590 = vmatprep.mubr.bf16.mxu0 %v631
        %2591 = vmatmul.mubr.bf16.gmra.mrb[0].mxu0 %v630
        %v2592 = vpop.f32.mrb[0].mxu0
        %v2593 = vadd.f32 0.0, %v2592
        %v2594 = vpop.f32.mrb[0].mxu0
        %v2595 = vpop.f32.mrb[0].mxu0
        %v2596 = vadd.f32 0.0, %v2595
        %v2597 = vpop.f32.mrb[0].mxu0
        %2598 = vdwg.mxu0
        %2599 = vmatprep.subr.bf16.mxu0 0
        %2600 = vmatpush1.bf16.msra.mxu0 %v1373
        %2601 = vmatprep.subr.bf16.mxu0 0
        %2602 = vmatpush1.bf16.msra.mxu0 %v1376
        %2603 = vmatprep.subr.bf16.mxu0 0
        %2604 = vmatpush1.bf16.msra.mxu0 %v1379
        %2605 = vmatprep.subr.bf16.mxu0 0
        %2606 = vmatpush1.bf16.msra.mxu0 %v1382
        %2607 = vmatprep.subr.bf16.mxu0 0
        %2608 = vmatpush1.bf16.msra.mxu0 %v1385
        %2609 = vmatprep.subr.bf16.mxu0 0
        %2610 = vmatpush1.bf16.msra.mxu0 %v1388
        %2611 = vmatprep.subr.bf16.mxu0 0
        %2612 = vmatpush1.bf16.msra.mxu0 %v1391
        %2613 = vmatprep.subr.bf16.mxu0 0
        %2614 = vmatpush1.bf16.msra.mxu0 %v1394
        %2615 = vmatprep.subr.bf16.mxu0 0
        %2616 = vmatpush1.bf16.msra.mxu0 %v1397
        %2617 = vmatprep.subr.bf16.mxu0 0
        %2618 = vmatpush1.bf16.msra.mxu0 %v1400
        %2619 = vmatprep.subr.bf16.mxu0 0
        %2620 = vmatpush1.bf16.msra.mxu0 %v1403
        %2621 = vmatprep.subr.bf16.mxu0 0
        %2622 = vmatpush1.bf16.msra.mxu0 %v1406
        %2623 = vmatprep.subr.bf16.mxu0 0
        %2624 = vmatpush1.bf16.msra.mxu0 %v1409
        %2625 = vmatprep.subr.bf16.mxu0 0
        %2626 = vmatpush1.bf16.msra.mxu0 %v1412
        %2627 = vmatprep.subr.bf16.mxu0 0
        %2628 = vmatpush1.bf16.msra.mxu0 %v1415
        %2629 = vmatprep.subr.bf16.mxu0 0
        %2630 = vmatpush1.bf16.msra.mxu0 %v1418
        %2631 = vmatprep.mubr.bf16.mxu0 %v528
        %2632 = vmatmul.mubr.bf16.gmra.mrb[0].mxu0 %v527
        %v2633 = vpop.f32.mrb[0].mxu0
        %v2634 = vadd.f32 %v2473, %v2633
        %v2635 = vpop.f32.mrb[0].mxu0
        %v2636 = vpop.f32.mrb[0].mxu0
        %v2637 = vadd.f32 %v2476, %v2636
        %v2638 = vpop.f32.mrb[0].mxu0
        %2639 = vmatprep.mubr.bf16.mxu0 %v535
        %2640 = vmatmul.mubr.bf16.gmra.mrb[0].mxu0 %v534
        %v2641 = vpop.f32.mrb[0].mxu0
        %v2642 = vadd.f32 %v2481, %v2641
        %v2643 = vpop.f32.mrb[0].mxu0
        %v2644 = vpop.f32.mrb[0].mxu0
        %v2645 = vadd.f32 %v2484, %v2644
        %v2646 = vpop.f32.mrb[0].mxu0
        %2647 = vmatprep.mubr.bf16.mxu0 %v542
        %2648 = vmatmul.mubr.bf16.gmra.mrb[0].mxu0 %v541
        %v2649 = vpop.f32.mrb[0].mxu0
        %v2650 = vadd.f32 %v2489, %v2649
        %v2651 = vpop.f32.mrb[0].mxu0
        %v2652 = vpop.f32.mrb[0].mxu0
        %v2653 = vadd.f32 %v2492, %v2652
        %v2654 = vpop.f32.mrb[0].mxu0
        %2655 = vmatprep.mubr.bf16.mxu0 %v549
        %2656 = vmatmul.mubr.bf16.gmra.mrb[0].mxu0 %v548
        %v2657 = vpop.f32.mrb[0].mxu0
        %v2658 = vadd.f32 %v2497, %v2657
        %v2659 = vpop.f32.mrb[0].mxu0
        %v2660 = vpop.f32.mrb[0].mxu0
        %v2661 = vadd.f32 %v2500, %v2660
        %v2662 = vpop.f32.mrb[0].mxu0
        %2663 = vmatprep.mubr.bf16.mxu0 %v556
        %2664 = vmatmul.mubr.bf16.gmra.mrb[0].mxu0 %v555
        %v2665 = vpop.f32.mrb[0].mxu0
        %v2666 = vadd.f32 %v2505, %v2665
        %v2667 = vpop.f32.mrb[0].mxu0
        %v2668 = vpop.f32.mrb[0].mxu0
        %v2669 = vadd.f32 %v2508, %v2668
        %v2670 = vpop.f32.mrb[0].mxu0
        %2671 = vmatprep.mubr.bf16.mxu0 %v563
        %2672 = vmatmul.mubr.bf16.gmra.mrb[0].mxu0 %v562
        %v2673 = vpop.f32.mrb[0].mxu0
        %v2674 = vadd.f32 %v2513, %v2673
        %v2675 = vpop.f32.mrb[0].mxu0
        %v2676 = vpop.f32.mrb[0].mxu0
        %v2677 = vadd.f32 %v2516, %v2676
        %v2678 = vpop.f32.mrb[0].mxu0
        %2679 = vmatprep.mubr.bf16.mxu0 %v570
        %2680 = vmatmul.mubr.bf16.gmra.mrb[0].mxu0 %v569
        %v2681 = vpop.f32.mrb[0].mxu0
        %v2682 = vadd.f32 %v2521, %v2681
        %v2683 = vpop.f32.mrb[0].mxu0
        %v2684 = vpop.f32.mrb[0].mxu0
        %v2685 = vadd.f32 %v2524, %v2684
        %v2686 = vpop.f32.mrb[0].mxu0
        %2687 = vmatprep.mubr.bf16.mxu0 %v577
        %2688 = vmatmul.mubr.bf16.gmra.mrb[0].mxu0 %v576
        %v2689 = vpop.f32.mrb[0].mxu0
        %v2690 = vadd.f32 %v2529, %v2689
        %v2691 = vpop.f32.mrb[0].mxu0
        %v2692 = vpop.f32.mrb[0].mxu0
        %v2693 = vadd.f32 %v2532, %v2692
        %v2694 = vpop.f32.mrb[0].mxu0
        %2695 = vmatprep.mubr.bf16.mxu0 %v584
        %2696 = vmatmul.mubr.bf16.gmra.mrb[0].mxu0 %v583
        %v2697 = vpop.f32.mrb[0].mxu0
        %v2698 = vadd.f32 %v2537, %v2697
        %v2699 = vpop.f32.mrb[0].mxu0
        %v2700 = vpop.f32.mrb[0].mxu0
        %v2701 = vadd.f32 %v2540, %v2700
        %v2702 = vpop.f32.mrb[0].mxu0
        %2703 = vmatprep.mubr.bf16.mxu0 %v591
        %2704 = vmatmul.mubr.bf16.gmra.mrb[0].mxu0 %v590
        %v2705 = vpop.f32.mrb[0].mxu0
        %v2706 = vadd.f32 %v2545, %v2705
        %v2707 = vpop.f32.mrb[0].mxu0
        %v2708 = vpop.f32.mrb[0].mxu0
        %v2709 = vadd.f32 %v2548, %v2708
        %v2710 = vpop.f32.mrb[0].mxu0
        %2711 = vmatprep.mubr.bf16.mxu0 %v598
        %2712 = vmatmul.mubr.bf16.gmra.mrb[0].mxu0 %v597
        %v2713 = vpop.f32.mrb[0].mxu0
        %v2714 = vadd.f32 %v2553, %v2713
        %v2715 = vpop.f32.mrb[0].mxu0
        %v2716 = vpop.f32.mrb[0].mxu0
        %v2717 = vadd.f32 %v2556, %v2716
        %v2718 = vpop.f32.mrb[0].mxu0
        %2719 = vmatprep.mubr.bf16.mxu0 %v605
        %2720 = vmatmul.mubr.bf16.gmra.mrb[0].mxu0 %v604
        %v2721 = vpop.f32.mrb[0].mxu0
        %v2722 = vadd.f32 %v2561, %v2721
        %v2723 = vpop.f32.mrb[0].mxu0
        %v2724 = vpop.f32.mrb[0].mxu0
        %v2725 = vadd.f32 %v2564, %v2724
        %v2726 = vpop.f32.mrb[0].mxu0
        %2727 = vmatprep.mubr.bf16.mxu0 %v612
        %2728 = vmatmul.mubr.bf16.gmra.mrb[0].mxu0 %v611
        %v2729 = vpop.f32.mrb[0].mxu0
        %v2730 = vadd.f32 %v2569, %v2729
        %v2731 = vpop.f32.mrb[0].mxu0
        %v2732 = vpop.f32.mrb[0].mxu0
        %v2733 = vadd.f32 %v2572, %v2732
        %v2734 = vpop.f32.mrb[0].mxu0
        %2735 = vmatprep.mubr.bf16.mxu0 %v619
        %2736 = vmatmul.mubr.bf16.gmra.mrb[0].mxu0 %v618
        %v2737 = vpop.f32.mrb[0].mxu0
        %v2738 = vadd.f32 %v2577, %v2737
        %v2739 = vpop.f32.mrb[0].mxu0
        %v2740 = vpop.f32.mrb[0].mxu0
        %v2741 = vadd.f32 %v2580, %v2740
        %v2742 = vpop.f32.mrb[0].mxu0
        %2743 = vmatprep.mubr.bf16.mxu0 %v626
        %2744 = vmatmul.mubr.bf16.gmra.mrb[0].mxu0 %v625
        %v2745 = vpop.f32.mrb[0].mxu0
        %v2746 = vadd.f32 %v2585, %v2745
        %v2747 = vpop.f32.mrb[0].mxu0
        %v2748 = vpop.f32.mrb[0].mxu0
        %v2749 = vadd.f32 %v2588, %v2748
        %v2750 = vpop.f32.mrb[0].mxu0
        %2751 = vmatprep.mubr.bf16.mxu0 %v633
        %2752 = vmatmul.mubr.bf16.gmra.mrb[0].mxu0 %v632
        %v2753 = vpop.f32.mrb[0].mxu0
        %v2754 = vadd.f32 %v2593, %v2753
        %v2755 = vpop.f32.mrb[0].mxu0
        %v2756 = vpop.f32.mrb[0].mxu0
        %v2757 = vadd.f32 %v2596, %v2756
        %v2758 = vpop.f32.mrb[0].mxu0
        %2759 = vdwg.mxu0
        %2760 = vmatprep.subr.bf16.mxu0 0
        %2761 = vmatpush1.bf16.msra.mxu0 %v1421
        %2762 = vmatprep.subr.bf16.mxu0 0
        %2763 = vmatpush1.bf16.msra.mxu0 %v1424
        %2764 = vmatprep.subr.bf16.mxu0 0
        %2765 = vmatpush1.bf16.msra.mxu0 %v1427
        %2766 = vmatprep.subr.bf16.mxu0 0
        %2767 = vmatpush1.bf16.msra.mxu0 %v1430
        %2768 = vmatprep.subr.bf16.mxu0 0
        %2769 = vmatpush1.bf16.msra.mxu0 %v1433
        %2770 = vmatprep.subr.bf16.mxu0 0
        %2771 = vmatpush1.bf16.msra.mxu0 %v1436
        %2772 = vmatprep.subr.bf16.mxu0 0
        %2773 = vmatpush1.bf16.msra.mxu0 %v1439
        %2774 = vmatprep.subr.bf16.mxu0 0
        %2775 = vmatpush1.bf16.msra.mxu0 %v1442
        %2776 = vmatprep.subr.bf16.mxu0 0
        %2777 = vmatpush1.bf16.msra.mxu0 %v1445
        %2778 = vmatprep.subr.bf16.mxu0 0
        %2779 = vmatpush1.bf16.msra.mxu0 %v1448
        %2780 = vmatprep.subr.bf16.mxu0 0
        %2781 = vmatpush1.bf16.msra.mxu0 %v1451
        %2782 = vmatprep.subr.bf16.mxu0 0
        %2783 = vmatpush1.bf16.msra.mxu0 %v1454
        %2784 = vmatprep.subr.bf16.mxu0 0
        %2785 = vmatpush1.bf16.msra.mxu0 %v1457
        %2786 = vmatprep.subr.bf16.mxu0 0
        %2787 = vmatpush1.bf16.msra.mxu0 %v1460
        %2788 = vmatprep.subr.bf16.mxu0 0
        %2789 = vmatpush1.bf16.msra.mxu0 %v1463
        %2790 = vmatprep.subr.bf16.mxu0 0
        %2791 = vmatpush1.bf16.msra.mxu0 %v1466
        %2792 = vmatprep.mubr.bf16.mxu0 %v530
        %2793 = vmatmul.mubr.bf16.gmra.mrb[0].mxu0 %v529
        %v2794 = vpop.f32.mrb[0].mxu0
        %v2795 = vadd.f32 %v2634, %v2794
        %v2796 = vpop.f32.mrb[0].mxu0
        %v2797 = vpop.f32.mrb[0].mxu0
        %v2798 = vadd.f32 %v2637, %v2797
        %v2799 = vpop.f32.mrb[0].mxu0
        %2800 = vmatprep.mubr.bf16.mxu0 %v537
        %2801 = vmatmul.mubr.bf16.gmra.mrb[0].mxu0 %v536
        %v2802 = vpop.f32.mrb[0].mxu0
        %v2803 = vadd.f32 %v2642, %v2802
        %v2804 = vpop.f32.mrb[0].mxu0
        %v2805 = vpop.f32.mrb[0].mxu0
        %v2806 = vadd.f32 %v2645, %v2805
        %v2807 = vpop.f32.mrb[0].mxu0
        %2808 = vmatprep.mubr.bf16.mxu0 %v544
        %2809 = vmatmul.mubr.bf16.gmra.mrb[0].mxu0 %v543
        %v2810 = vpop.f32.mrb[0].mxu0
        %v2811 = vadd.f32 %v2650, %v2810
        %v2812 = vpop.f32.mrb[0].mxu0
        %v2813 = vpop.f32.mrb[0].mxu0
        %v2814 = vadd.f32 %v2653, %v2813
        %v2815 = vpop.f32.mrb[0].mxu0
        %2816 = vmatprep.mubr.bf16.mxu0 %v551
        %2817 = vmatmul.mubr.bf16.gmra.mrb[0].mxu0 %v550
        %v2818 = vpop.f32.mrb[0].mxu0
        %v2819 = vadd.f32 %v2658, %v2818
        %v2820 = vpop.f32.mrb[0].mxu0
        %v2821 = vpop.f32.mrb[0].mxu0
        %v2822 = vadd.f32 %v2661, %v2821
        %v2823 = vpop.f32.mrb[0].mxu0
        %2824 = vmatprep.mubr.bf16.mxu0 %v558
        %2825 = vmatmul.mubr.bf16.gmra.mrb[0].mxu0 %v557
        %v2826 = vpop.f32.mrb[0].mxu0
        %v2827 = vadd.f32 %v2666, %v2826
        %v2828 = vpop.f32.mrb[0].mxu0
        %v2829 = vpop.f32.mrb[0].mxu0
        %v2830 = vadd.f32 %v2669, %v2829
        %v2831 = vpop.f32.mrb[0].mxu0
        %2832 = vmatprep.mubr.bf16.mxu0 %v565
        %2833 = vmatmul.mubr.bf16.gmra.mrb[0].mxu0 %v564
        %v2834 = vpop.f32.mrb[0].mxu0
        %v2835 = vadd.f32 %v2674, %v2834
        %v2836 = vpop.f32.mrb[0].mxu0
        %v2837 = vpop.f32.mrb[0].mxu0
        %v2838 = vadd.f32 %v2677, %v2837
        %v2839 = vpop.f32.mrb[0].mxu0
        %2840 = vmatprep.mubr.bf16.mxu0 %v572
        %2841 = vmatmul.mubr.bf16.gmra.mrb[0].mxu0 %v571
        %v2842 = vpop.f32.mrb[0].mxu0
        %v2843 = vadd.f32 %v2682, %v2842
        %v2844 = vpop.f32.mrb[0].mxu0
        %v2845 = vpop.f32.mrb[0].mxu0
        %v2846 = vadd.f32 %v2685, %v2845
        %v2847 = vpop.f32.mrb[0].mxu0
        %2848 = vmatprep.mubr.bf16.mxu0 %v579
        %2849 = vmatmul.mubr.bf16.gmra.mrb[0].mxu0 %v578
        %v2850 = vpop.f32.mrb[0].mxu0
        %v2851 = vadd.f32 %v2690, %v2850
        %v2852 = vpop.f32.mrb[0].mxu0
        %v2853 = vpop.f32.mrb[0].mxu0
        %v2854 = vadd.f32 %v2693, %v2853
        %v2855 = vpop.f32.mrb[0].mxu0
        %2856 = vmatprep.mubr.bf16.mxu0 %v586
        %2857 = vmatmul.mubr.bf16.gmra.mrb[0].mxu0 %v585
        %v2858 = vpop.f32.mrb[0].mxu0
        %v2859 = vadd.f32 %v2698, %v2858
        %v2860 = vpop.f32.mrb[0].mxu0
        %v2861 = vpop.f32.mrb[0].mxu0
        %v2862 = vadd.f32 %v2701, %v2861
        %v2863 = vpop.f32.mrb[0].mxu0
        %2864 = vmatprep.mubr.bf16.mxu0 %v593
        %2865 = vmatmul.mubr.bf16.gmra.mrb[0].mxu0 %v592
        %v2866 = vpop.f32.mrb[0].mxu0
        %v2867 = vadd.f32 %v2706, %v2866
        %v2868 = vpop.f32.mrb[0].mxu0
        %v2869 = vpop.f32.mrb[0].mxu0
        %v2870 = vadd.f32 %v2709, %v2869
        %v2871 = vpop.f32.mrb[0].mxu0
        %2872 = vmatprep.mubr.bf16.mxu0 %v600
        %2873 = vmatmul.mubr.bf16.gmra.mrb[0].mxu0 %v599
        %v2874 = vpop.f32.mrb[0].mxu0
        %v2875 = vadd.f32 %v2714, %v2874
        %v2876 = vpop.f32.mrb[0].mxu0
        %v2877 = vpop.f32.mrb[0].mxu0
        %v2878 = vadd.f32 %v2717, %v2877
        %v2879 = vpop.f32.mrb[0].mxu0
        %2880 = vmatprep.mubr.bf16.mxu0 %v607
        %2881 = vmatmul.mubr.bf16.gmra.mrb[0].mxu0 %v606
        %v2882 = vpop.f32.mrb[0].mxu0
        %v2883 = vadd.f32 %v2722, %v2882
        %v2884 = vpop.f32.mrb[0].mxu0
        %v2885 = vpop.f32.mrb[0].mxu0
        %v2886 = vadd.f32 %v2725, %v2885
        %v2887 = vpop.f32.mrb[0].mxu0
        %2888 = vmatprep.mubr.bf16.mxu0 %v614
        %2889 = vmatmul.mubr.bf16.gmra.mrb[0].mxu0 %v613
        %v2890 = vpop.f32.mrb[0].mxu0
        %v2891 = vadd.f32 %v2730, %v2890
        %v2892 = vpop.f32.mrb[0].mxu0
        %v2893 = vpop.f32.mrb[0].mxu0
        %v2894 = vadd.f32 %v2733, %v2893
        %v2895 = vpop.f32.mrb[0].mxu0
        %2896 = vmatprep.mubr.bf16.mxu0 %v621
        %2897 = vmatmul.mubr.bf16.gmra.mrb[0].mxu0 %v620
        %v2898 = vpop.f32.mrb[0].mxu0
        %v2899 = vadd.f32 %v2738, %v2898
        %v2900 = vpop.f32.mrb[0].mxu0
        %v2901 = vpop.f32.mrb[0].mxu0
        %v2902 = vadd.f32 %v2741, %v2901
        %v2903 = vpop.f32.mrb[0].mxu0
        %2904 = vmatprep.mubr.bf16.mxu0 %v628
        %2905 = vmatmul.mubr.bf16.gmra.mrb[0].mxu0 %v627
        %v2906 = vpop.f32.mrb[0].mxu0
        %v2907 = vadd.f32 %v2746, %v2906
        %v2908 = vpop.f32.mrb[0].mxu0
        %v2909 = vpop.f32.mrb[0].mxu0
        %v2910 = vadd.f32 %v2749, %v2909
        %v2911 = vpop.f32.mrb[0].mxu0
        %2912 = vmatprep.mubr.bf16.mxu0 %v635
        %2913 = vmatmul.mubr.bf16.gmra.mrb[0].mxu0 %v634
        %v2914 = vpop.f32.mrb[0].mxu0
        %v2915 = vadd.f32 %v2754, %v2914
        %v2916 = vpop.f32.mrb[0].mxu0
        %v2917 = vpop.f32.mrb[0].mxu0
        %v2918 = vadd.f32 %v2757, %v2917
        %v2919 = vpop.f32.mrb[0].mxu0
        %2920 = vdwg.mxu0
        %2921 = vmatprep.subr.bf16.mxu0 0
        %2922 = vmatpush1.bf16.msra.mxu0 %v1469
        %2923 = vmatprep.subr.bf16.mxu0 0
        %2924 = vmatpush1.bf16.msra.mxu0 0
        %2925 = vmatprep.subr.bf16.mxu0 0
        %2926 = vmatpush1.bf16.msra.mxu0 0
        %2927 = vmatprep.subr.bf16.mxu0 0
        %2928 = vmatpush1.bf16.msra.mxu0 0
        %2929 = vmatprep.subr.bf16.mxu0 0
        %2930 = vmatpush1.bf16.msra.mxu0 0
        %2931 = vmatprep.subr.bf16.mxu0 0
        %2932 = vmatpush1.bf16.msra.mxu0 0
        %2933 = vmatprep.subr.bf16.mxu0 0
        %2934 = vmatpush1.bf16.msra.mxu0 0
        %2935 = vmatprep.subr.bf16.mxu0 0
        %2936 = vmatpush1.bf16.msra.mxu0 0
        %2937 = vmatprep.subr.bf16.mxu0 0
        %2938 = vmatpush1.bf16.msra.mxu0 0
        %2939 = vmatprep.subr.bf16.mxu0 0
        %2940 = vmatpush1.bf16.msra.mxu0 0
        %2941 = vmatprep.subr.bf16.mxu0 0
        %2942 = vmatpush1.bf16.msra.mxu0 0
        %2943 = vmatprep.subr.bf16.mxu0 0
        %2944 = vmatpush1.bf16.msra.mxu0 0
        %2945 = vmatprep.subr.bf16.mxu0 0
        %2946 = vmatpush1.bf16.msra.mxu0 0
        %2947 = vmatprep.subr.bf16.mxu0 0
        %2948 = vmatpush1.bf16.msra.mxu0 0
        %2949 = vmatprep.subr.bf16.mxu0 0
        %2950 = vmatpush1.bf16.msra.mxu0 0
        %2951 = vmatprep.subr.bf16.mxu0 0
        %2952 = vmatpush1.bf16.msra.mxu0 0
        %2953 = vmatprep.mubr.bf16.mxu0 0
        %2954 = vmatmul.mubr.bf16.gmra.mrb[0].mxu0 %v1619
        %v2955 = vpop.f32.mrb[0].mxu0
        %v2956 = vadd.f32 %v2795, %v2955
        %v2957 = vpop.f32.mrb[0].mxu0
        %v2958 = vpop.f32.mrb[0].mxu0
        %v2959 = vadd.f32 %v2798, %v2958
        %v2960 = vpop.f32.mrb[0].mxu0
        %2961 = vmatprep.mubr.bf16.mxu0 0
        %2962 = vmatmul.mubr.bf16.gmra.mrb[0].mxu0 %v1622
        %v2963 = vpop.f32.mrb[0].mxu0
        %v2964 = vadd.f32 %v2803, %v2963
        %v2965 = vpop.f32.mrb[0].mxu0
        %v2966 = vpop.f32.mrb[0].mxu0
        %v2967 = vadd.f32 %v2806, %v2966
        %v2968 = vpop.f32.mrb[0].mxu0
        %2969 = vmatprep.mubr.bf16.mxu0 0
        %2970 = vmatmul.mubr.bf16.gmra.mrb[0].mxu0 %v1625
        %v2971 = vpop.f32.mrb[0].mxu0
        %v2972 = vadd.f32 %v2811, %v2971
        %v2973 = vpop.f32.mrb[0].mxu0
        %v2974 = vpop.f32.mrb[0].mxu0
        %v2975 = vadd.f32 %v2814, %v2974
        %v2976 = vpop.f32.mrb[0].mxu0
        %2977 = vmatprep.mubr.bf16.mxu0 0
        %2978 = vmatmul.mubr.bf16.gmra.mrb[0].mxu0 %v1628
        %v2979 = vpop.f32.mrb[0].mxu0
        %v2980 = vadd.f32 %v2819, %v2979
        %v2981 = vpop.f32.mrb[0].mxu0
        %v2982 = vpop.f32.mrb[0].mxu0
        %v2983 = vadd.f32 %v2822, %v2982
        %v2984 = vpop.f32.mrb[0].mxu0
        %2985 = vmatprep.mubr.bf16.mxu0 0
        %2986 = vmatmul.mubr.bf16.gmra.mrb[0].mxu0 %v1631
        %v2987 = vpop.f32.mrb[0].mxu0
        %v2988 = vadd.f32 %v2827, %v2987
        %v2989 = vpop.f32.mrb[0].mxu0
        %v2990 = vpop.f32.mrb[0].mxu0
        %v2991 = vadd.f32 %v2830, %v2990
        %v2992 = vpop.f32.mrb[0].mxu0
        %2993 = vmatprep.mubr.bf16.mxu0 0
        %2994 = vmatmul.mubr.bf16.gmra.mrb[0].mxu0 %v1634
        %v2995 = vpop.f32.mrb[0].mxu0
        %v2996 = vadd.f32 %v2835, %v2995
        %v2997 = vpop.f32.mrb[0].mxu0
        %v2998 = vpop.f32.mrb[0].mxu0
        %v2999 = vadd.f32 %v2838, %v2998
        %v3000 = vpop.f32.mrb[0].mxu0
        %3001 = vmatprep.mubr.bf16.mxu0 0
        %3002 = vmatmul.mubr.bf16.gmra.mrb[0].mxu0 %v1637
        %v3003 = vpop.f32.mrb[0].mxu0
        %v3004 = vadd.f32 %v2843, %v3003
        %v3005 = vpop.f32.mrb[0].mxu0
        %v3006 = vpop.f32.mrb[0].mxu0
        %v3007 = vadd.f32 %v2846, %v3006
        %v3008 = vpop.f32.mrb[0].mxu0
        %3009 = vmatprep.mubr.bf16.mxu0 0
        %3010 = vmatmul.mubr.bf16.gmra.mrb[0].mxu0 %v1640
        %v3011 = vpop.f32.mrb[0].mxu0
        %v3012 = vadd.f32 %v2851, %v3011
        %v3013 = vpop.f32.mrb[0].mxu0
        %v3014 = vpop.f32.mrb[0].mxu0
        %v3015 = vadd.f32 %v2854, %v3014
        %v3016 = vpop.f32.mrb[0].mxu0
        %3017 = vmatprep.mubr.bf16.mxu0 0
        %3018 = vmatmul.mubr.bf16.gmra.mrb[0].mxu0 %v1643
        %v3019 = vpop.f32.mrb[0].mxu0
        %v3020 = vadd.f32 %v2859, %v3019
        %v3021 = vpop.f32.mrb[0].mxu0
        %v3022 = vpop.f32.mrb[0].mxu0
        %v3023 = vadd.f32 %v2862, %v3022
        %v3024 = vpop.f32.mrb[0].mxu0
        %3025 = vmatprep.mubr.bf16.mxu0 0
        %3026 = vmatmul.mubr.bf16.gmra.mrb[0].mxu0 %v1646
        %v3027 = vpop.f32.mrb[0].mxu0
        %v3028 = vadd.f32 %v2867, %v3027
        %v3029 = vpop.f32.mrb[0].mxu0
        %v3030 = vpop.f32.mrb[0].mxu0
        %v3031 = vadd.f32 %v2870, %v3030
        %v3032 = vpop.f32.mrb[0].mxu0
        %3033 = vmatprep.mubr.bf16.mxu0 0
        %3034 = vmatmul.mubr.bf16.gmra.mrb[0].mxu0 %v1649
        %v3035 = vpop.f32.mrb[0].mxu0
        %v3036 = vadd.f32 %v2875, %v3035
        %v3037 = vpop.f32.mrb[0].mxu0
        %v3038 = vpop.f32.mrb[0].mxu0
        %v3039 = vadd.f32 %v2878, %v3038
        %v3040 = vpop.f32.mrb[0].mxu0
        %3041 = vmatprep.mubr.bf16.mxu0 0
        %3042 = vmatmul.mubr.bf16.gmra.mrb[0].mxu0 %v1652
        %v3043 = vpop.f32.mrb[0].mxu0
        %v3044 = vadd.f32 %v2883, %v3043
        %v3045 = vpop.f32.mrb[0].mxu0
        %v3046 = vpop.f32.mrb[0].mxu0
        %v3047 = vadd.f32 %v2886, %v3046
        %v3048 = vpop.f32.mrb[0].mxu0
        %3049 = vmatprep.mubr.bf16.mxu0 0
        %3050 = vmatmul.mubr.bf16.gmra.mrb[0].mxu0 %v1655
        %v3051 = vpop.f32.mrb[0].mxu0
        %v3052 = vadd.f32 %v2891, %v3051
        %v3053 = vpop.f32.mrb[0].mxu0
        %v3054 = vpop.f32.mrb[0].mxu0
        %v3055 = vadd.f32 %v2894, %v3054
        %v3056 = vpop.f32.mrb[0].mxu0
        %3057 = vmatprep.mubr.bf16.mxu0 0
        %3058 = vmatmul.mubr.bf16.gmra.mrb[0].mxu0 %v1658
        %v3059 = vpop.f32.mrb[0].mxu0
        %v3060 = vadd.f32 %v2899, %v3059
        %v3061 = vpop.f32.mrb[0].mxu0
        %v3062 = vpop.f32.mrb[0].mxu0
        %v3063 = vadd.f32 %v2902, %v3062
        %v3064 = vpop.f32.mrb[0].mxu0
        %3065 = vmatprep.mubr.bf16.mxu0 0
        %3066 = vmatmul.mubr.bf16.gmra.mrb[0].mxu0 %v1661
        %v3067 = vpop.f32.mrb[0].mxu0
        %v3068 = vadd.f32 %v2907, %v3067
        %v3069 = vpop.f32.mrb[0].mxu0
        %v3070 = vpop.f32.mrb[0].mxu0
        %v3071 = vadd.f32 %v2910, %v3070
        %v3072 = vpop.f32.mrb[0].mxu0
        %3073 = vmatprep.mubr.bf16.mxu0 0
        %3074 = vmatmul.mubr.bf16.gmra.mrb[0].mxu0 %v1664
        %v3075 = vpop.f32.mrb[0].mxu0
        %v3076 = vadd.f32 %v2915, %v3075
        %v3077 = vpop.f32.mrb[0].mxu0
        %v3078 = vpop.f32.mrb[0].mxu0
        %v3079 = vadd.f32 %v2918, %v3078
        %v3080 = vpop.f32.mrb[0].mxu0
        %3081 = vdwg.mxu0
        %vm3082 = vcmp.gt.f32.partialorder %v2280, 0.0
        %vm3083 = vcmp.gt.f32.partialorder %v2282, 0.0
        %vm3084 = vcmp.gt.f32.partialorder %v2956, 0.0
        %vm3085 = vcmp.gt.f32.partialorder %v2284, 0.0
        %vm3086 = vcmp.gt.f32.partialorder %v2286, 0.0
        %vm3087 = vcmp.gt.f32.partialorder %v2959, 0.0
        %vm3088 = vcmp.gt.f32.partialorder %v2290, 0.0
        %vm3089 = vcmp.gt.f32.partialorder %v2292, 0.0
        %vm3090 = vcmp.gt.f32.partialorder %v2964, 0.0
        %vm3091 = vcmp.gt.f32.partialorder %v2294, 0.0
        %vm3092 = vcmp.gt.f32.partialorder %v2296, 0.0
        %vm3093 = vcmp.gt.f32.partialorder %v2967, 0.0
        %vm3094 = vcmp.gt.f32.partialorder %v2300, 0.0
        %vm3095 = vcmp.gt.f32.partialorder %v2302, 0.0
        %vm3096 = vcmp.gt.f32.partialorder %v2972, 0.0
        %vm3097 = vcmp.gt.f32.partialorder %v2304, 0.0
        %vm3098 = vcmp.gt.f32.partialorder %v2306, 0.0
        %vm3099 = vcmp.gt.f32.partialorder %v2975, 0.0
        %vm3100 = vcmp.gt.f32.partialorder %v2310, 0.0
        %vm3101 = vcmp.gt.f32.partialorder %v2312, 0.0
        %vm3102 = vcmp.gt.f32.partialorder %v2980, 0.0
        %vm3103 = vcmp.gt.f32.partialorder %v2314, 0.0
        %vm3104 = vcmp.gt.f32.partialorder %v2316, 0.0
        %vm3105 = vcmp.gt.f32.partialorder %v2983, 0.0
        %vm3106 = vcmp.gt.f32.partialorder %v2320, 0.0
        %vm3107 = vcmp.gt.f32.partialorder %v2322, 0.0
        %vm3108 = vcmp.gt.f32.partialorder %v2988, 0.0
        %vm3109 = vcmp.gt.f32.partialorder %v2324, 0.0
        %vm3110 = vcmp.gt.f32.partialorder %v2326, 0.0
        %vm3111 = vcmp.gt.f32.partialorder %v2991, 0.0
        %vm3112 = vcmp.gt.f32.partialorder %v2330, 0.0
        %vm3113 = vcmp.gt.f32.partialorder %v2332, 0.0
        %vm3114 = vcmp.gt.f32.partialorder %v2996, 0.0
        %vm3115 = vcmp.gt.f32.partialorder %v2334, 0.0
        %vm3116 = vcmp.gt.f32.partialorder %v2336, 0.0
        %vm3117 = vcmp.gt.f32.partialorder %v2999, 0.0
        %vm3118 = vcmp.gt.f32.partialorder %v2340, 0.0
        %vm3119 = vcmp.gt.f32.partialorder %v2342, 0.0
        %vm3120 = vcmp.gt.f32.partialorder %v3004, 0.0
        %vm3121 = vcmp.gt.f32.partialorder %v2344, 0.0
        %vm3122 = vcmp.gt.f32.partialorder %v2346, 0.0
        %vm3123 = vcmp.gt.f32.partialorder %v3007, 0.0
        %vm3124 = vcmp.gt.f32.partialorder %v2350, 0.0
        %vm3125 = vcmp.gt.f32.partialorder %v2352, 0.0
        %vm3126 = vcmp.gt.f32.partialorder %v3012, 0.0
        %vm3127 = vcmp.gt.f32.partialorder %v2354, 0.0
        %vm3128 = vcmp.gt.f32.partialorder %v2356, 0.0
        %vm3129 = vcmp.gt.f32.partialorder %v3015, 0.0
        %vm3130 = vcmp.gt.f32.partialorder %v2360, 0.0
        %vm3131 = vcmp.gt.f32.partialorder %v2362, 0.0
        %vm3132 = vcmp.gt.f32.partialorder %v3020, 0.0
        %vm3133 = vcmp.gt.f32.partialorder %v2364, 0.0
        %vm3134 = vcmp.gt.f32.partialorder %v2366, 0.0
        %vm3135 = vcmp.gt.f32.partialorder %v3023, 0.0
        %vm3136 = vcmp.gt.f32.partialorder %v2370, 0.0
        %vm3137 = vcmp.gt.f32.partialorder %v2372, 0.0
        %vm3138 = vcmp.gt.f32.partialorder %v3028, 0.0
        %vm3139 = vcmp.gt.f32.partialorder %v2374, 0.0
        %vm3140 = vcmp.gt.f32.partialorder %v2376, 0.0
        %vm3141 = vcmp.gt.f32.partialorder %v3031, 0.0
        %vm3142 = vcmp.gt.f32.partialorder %v2380, 0.0
        %vm3143 = vcmp.gt.f32.partialorder %v2382, 0.0
        %vm3144 = vcmp.gt.f32.partialorder %v3036, 0.0
        %vm3145 = vcmp.gt.f32.partialorder %v2384, 0.0
        %vm3146 = vcmp.gt.f32.partialorder %v2386, 0.0
        %vm3147 = vcmp.gt.f32.partialorder %v3039, 0.0
        %vm3148 = vcmp.gt.f32.partialorder %v2390, 0.0
        %vm3149 = vcmp.gt.f32.partialorder %v2392, 0.0
        %vm3150 = vcmp.gt.f32.partialorder %v3044, 0.0
        %vm3151 = vcmp.gt.f32.partialorder %v2394, 0.0
        %vm3152 = vcmp.gt.f32.partialorder %v2396, 0.0
        %vm3153 = vcmp.gt.f32.partialorder %v3047, 0.0
        %vm3154 = vcmp.gt.f32.partialorder %v2400, 0.0
        %vm3155 = vcmp.gt.f32.partialorder %v2402, 0.0
        %vm3156 = vcmp.gt.f32.partialorder %v3052, 0.0
        %vm3157 = vcmp.gt.f32.partialorder %v2404, 0.0
        %vm3158 = vcmp.gt.f32.partialorder %v2406, 0.0
        %vm3159 = vcmp.gt.f32.partialorder %v3055, 0.0
        %vm3160 = vcmp.gt.f32.partialorder %v2410, 0.0
        %vm3161 = vcmp.gt.f32.partialorder %v2412, 0.0
        %vm3162 = vcmp.gt.f32.partialorder %v3060, 0.0
        %vm3163 = vcmp.gt.f32.partialorder %v2414, 0.0
        %vm3164 = vcmp.gt.f32.partialorder %v2416, 0.0
        %vm3165 = vcmp.gt.f32.partialorder %v3063, 0.0
        %vm3166 = vcmp.gt.f32.partialorder %v2420, 0.0
        %vm3167 = vcmp.gt.f32.partialorder %v2422, 0.0
        %vm3168 = vcmp.gt.f32.partialorder %v3068, 0.0
        %vm3169 = vcmp.gt.f32.partialorder %v2424, 0.0
        %vm3170 = vcmp.gt.f32.partialorder %v2426, 0.0
        %vm3171 = vcmp.gt.f32.partialorder %v3071, 0.0
        %vm3172 = vcmp.gt.f32.partialorder %v2430, 0.0
        %vm3173 = vcmp.gt.f32.partialorder %v2432, 0.0
        %vm3174 = vcmp.gt.f32.partialorder %v3076, 0.0
        %vm3175 = vcmp.gt.f32.partialorder %v2434, 0.0
        %vm3176 = vcmp.gt.f32.partialorder %v2436, 0.0
        %vm3177 = vcmp.gt.f32.partialorder %v3079, 0.0
        %v3178 = vmul.f32 %v2280, 0.01
        %v3179 = vmul.f32 %v2282, 0.01
        %v3180 = vmul.f32 %v2956, 0.01
        %v3181 = vmul.f32 %v2284, 0.01
        %v3182 = vmul.f32 %v2286, 0.01
        %v3183 = vmul.f32 %v2959, 0.01
        %v3184 = vmul.f32 %v2290, 0.01
        %v3185 = vmul.f32 %v2292, 0.01
        %v3186 = vmul.f32 %v2964, 0.01
        %v3187 = vmul.f32 %v2294, 0.01
        %v3188 = vmul.f32 %v2296, 0.01
        %v3189 = vmul.f32 %v2967, 0.01
        %v3190 = vmul.f32 %v2300, 0.01
        %v3191 = vmul.f32 %v2302, 0.01
        %v3192 = vmul.f32 %v2972, 0.01
        %v3193 = vmul.f32 %v2304, 0.01
        %v3194 = vmul.f32 %v2306, 0.01
        %v3195 = vmul.f32 %v2975, 0.01
        %v3196 = vmul.f32 %v2310, 0.01
        %v3197 = vmul.f32 %v2312, 0.01
        %v3198 = vmul.f32 %v2980, 0.01
        %v3199 = vmul.f32 %v2314, 0.01
        %v3200 = vmul.f32 %v2316, 0.01
        %v3201 = vmul.f32 %v2983, 0.01
        %v3202 = vmul.f32 %v2320, 0.01
        %v3203 = vmul.f32 %v2322, 0.01
        %v3204 = vmul.f32 %v2988, 0.01
        %v3205 = vmul.f32 %v2324, 0.01
        %v3206 = vmul.f32 %v2326, 0.01
        %v3207 = vmul.f32 %v2991, 0.01
        %v3208 = vmul.f32 %v2330, 0.01
        %v3209 = vmul.f32 %v2332, 0.01
        %v3210 = vmul.f32 %v2996, 0.01
        %v3211 = vmul.f32 %v2334, 0.01
        %v3212 = vmul.f32 %v2336, 0.01
        %v3213 = vmul.f32 %v2999, 0.01
        %v3214 = vmul.f32 %v2340, 0.01
        %v3215 = vmul.f32 %v2342, 0.01
        %v3216 = vmul.f32 %v3004, 0.01
        %v3217 = vmul.f32 %v2344, 0.01
        %v3218 = vmul.f32 %v2346, 0.01
        %v3219 = vmul.f32 %v3007, 0.01
        %v3220 = vmul.f32 %v2350, 0.01
        %v3221 = vmul.f32 %v2352, 0.01
        %v3222 = vmul.f32 %v3012, 0.01
        %v3223 = vmul.f32 %v2354, 0.01
        %v3224 = vmul.f32 %v2356, 0.01
        %v3225 = vmul.f32 %v3015, 0.01
        %v3226 = vmul.f32 %v2360, 0.01
        %v3227 = vmul.f32 %v2362, 0.01
        %v3228 = vmul.f32 %v3020, 0.01
        %v3229 = vmul.f32 %v2364, 0.01
        %v3230 = vmul.f32 %v2366, 0.01
        %v3231 = vmul.f32 %v3023, 0.01
        %v3232 = vmul.f32 %v2370, 0.01
        %v3233 = vmul.f32 %v2372, 0.01
        %v3234 = vmul.f32 %v3028, 0.01
        %v3235 = vmul.f32 %v2374, 0.01
        %v3236 = vmul.f32 %v2376, 0.01
        %v3237 = vmul.f32 %v3031, 0.01
        %v3238 = vmul.f32 %v2380, 0.01
        %v3239 = vmul.f32 %v2382, 0.01
        %v3240 = vmul.f32 %v3036, 0.01
        %v3241 = vmul.f32 %v2384, 0.01
        %v3242 = vmul.f32 %v2386, 0.01
        %v3243 = vmul.f32 %v3039, 0.01
        %v3244 = vmul.f32 %v2390, 0.01
        %v3245 = vmul.f32 %v2392, 0.01
        %v3246 = vmul.f32 %v3044, 0.01
        %v3247 = vmul.f32 %v2394, 0.01
        %v3248 = vmul.f32 %v2396, 0.01
        %v3249 = vmul.f32 %v3047, 0.01
        %v3250 = vmul.f32 %v2400, 0.01
        %v3251 = vmul.f32 %v2402, 0.01
        %v3252 = vmul.f32 %v3052, 0.01
        %v3253 = vmul.f32 %v2404, 0.01
        %v3254 = vmul.f32 %v2406, 0.01
        %v3255 = vmul.f32 %v3055, 0.01
        %v3256 = vmul.f32 %v2410, 0.01
        %v3257 = vmul.f32 %v2412, 0.01
        %v3258 = vmul.f32 %v3060, 0.01
        %v3259 = vmul.f32 %v2414, 0.01
        %v3260 = vmul.f32 %v2416, 0.01
        %v3261 = vmul.f32 %v3063, 0.01
        %v3262 = vmul.f32 %v2420, 0.01
        %v3263 = vmul.f32 %v2422, 0.01
        %v3264 = vmul.f32 %v3068, 0.01
        %v3265 = vmul.f32 %v2424, 0.01
        %v3266 = vmul.f32 %v2426, 0.01
        %v3267 = vmul.f32 %v3071, 0.01
        %v3268 = vmul.f32 %v2430, 0.01
        %v3269 = vmul.f32 %v2432, 0.01
        %v3270 = vmul.f32 %v3076, 0.01
        %v3271 = vmul.f32 %v2434, 0.01
        %v3272 = vmul.f32 %v2436, 0.01
        %v3273 = vmul.f32 %v3079, 0.01
        %v3274 = vsel %vm3082, %v2280, %v3178
        %v3275 = vsel %vm3083, %v2282, %v3179
        %v3276 = vsel %vm3084, %v2956, %v3180
        %v3277 = vsel %vm3085, %v2284, %v3181
        %v3278 = vsel %vm3086, %v2286, %v3182
        %v3279 = vsel %vm3087, %v2959, %v3183
        %v3280 = vsel %vm3088, %v2290, %v3184
        %v3281 = vsel %vm3089, %v2292, %v3185
        %v3282 = vsel %vm3090, %v2964, %v3186
        %v3283 = vsel %vm3091, %v2294, %v3187
        %v3284 = vsel %vm3092, %v2296, %v3188
        %v3285 = vsel %vm3093, %v2967, %v3189
        %v3286 = vsel %vm3094, %v2300, %v3190
        %v3287 = vsel %vm3095, %v2302, %v3191
        %v3288 = vsel %vm3096, %v2972, %v3192
        %v3289 = vsel %vm3097, %v2304, %v3193
        %v3290 = vsel %vm3098, %v2306, %v3194
        %v3291 = vsel %vm3099, %v2975, %v3195
        %v3292 = vsel %vm3100, %v2310, %v3196
        %v3293 = vsel %vm3101, %v2312, %v3197
        %v3294 = vsel %vm3102, %v2980, %v3198
        %v3295 = vsel %vm3103, %v2314, %v3199
        %v3296 = vsel %vm3104, %v2316, %v3200
        %v3297 = vsel %vm3105, %v2983, %v3201
        %v3298 = vsel %vm3106, %v2320, %v3202
        %v3299 = vsel %vm3107, %v2322, %v3203
        %v3300 = vsel %vm3108, %v2988, %v3204
        %v3301 = vsel %vm3109, %v2324, %v3205
        %v3302 = vsel %vm3110, %v2326, %v3206
        %v3303 = vsel %vm3111, %v2991, %v3207
        %v3304 = vsel %vm3112, %v2330, %v3208
        %v3305 = vsel %vm3113, %v2332, %v3209
        %v3306 = vsel %vm3114, %v2996, %v3210
        %v3307 = vsel %vm3115, %v2334, %v3211
        %v3308 = vsel %vm3116, %v2336, %v3212
        %v3309 = vsel %vm3117, %v2999, %v3213
        %v3310 = vsel %vm3118, %v2340, %v3214
        %v3311 = vsel %vm3119, %v2342, %v3215
        %v3312 = vsel %vm3120, %v3004, %v3216
        %v3313 = vsel %vm3121, %v2344, %v3217
        %v3314 = vsel %vm3122, %v2346, %v3218
        %v3315 = vsel %vm3123, %v3007, %v3219
        %v3316 = vsel %vm3124, %v2350, %v3220
        %v3317 = vsel %vm3125, %v2352, %v3221
        %v3318 = vsel %vm3126, %v3012, %v3222
        %v3319 = vsel %vm3127, %v2354, %v3223
        %v3320 = vsel %vm3128, %v2356, %v3224
        %v3321 = vsel %vm3129, %v3015, %v3225
        %v3322 = vsel %vm3130, %v2360, %v3226
        %v3323 = vsel %vm3131, %v2362, %v3227
        %v3324 = vsel %vm3132, %v3020, %v3228
        %v3325 = vsel %vm3133, %v2364, %v3229
        %v3326 = vsel %vm3134, %v2366, %v3230
        %v3327 = vsel %vm3135, %v3023, %v3231
        %v3328 = vsel %vm3136, %v2370, %v3232
        %v3329 = vsel %vm3137, %v2372, %v3233
        %v3330 = vsel %vm3138, %v3028, %v3234
        %v3331 = vsel %vm3139, %v2374, %v3235
        %v3332 = vsel %vm3140, %v2376, %v3236
        %v3333 = vsel %vm3141, %v3031, %v3237
        %v3334 = vsel %vm3142, %v2380, %v3238
        %v3335 = vsel %vm3143, %v2382, %v3239
        %v3336 = vsel %vm3144, %v3036, %v3240
        %v3337 = vsel %vm3145, %v2384, %v3241
        %v3338 = vsel %vm3146, %v2386, %v3242
        %v3339 = vsel %vm3147, %v3039, %v3243
        %v3340 = vsel %vm3148, %v2390, %v3244
        %v3341 = vsel %vm3149, %v2392, %v3245
        %v3342 = vsel %vm3150, %v3044, %v3246
        %v3343 = vsel %vm3151, %v2394, %v3247
        %v3344 = vsel %vm3152, %v2396, %v3248
        %v3345 = vsel %vm3153, %v3047, %v3249
        %v3346 = vsel %vm3154, %v2400, %v3250
        %v3347 = vsel %vm3155, %v2402, %v3251
        %v3348 = vsel %vm3156, %v3052, %v3252
        %v3349 = vsel %vm3157, %v2404, %v3253
        %v3350 = vsel %vm3158, %v2406, %v3254
        %v3351 = vsel %vm3159, %v3055, %v3255
        %v3352 = vsel %vm3160, %v2410, %v3256
        %v3353 = vsel %vm3161, %v2412, %v3257
        %v3354 = vsel %vm3162, %v3060, %v3258
        %v3355 = vsel %vm3163, %v2414, %v3259
        %v3356 = vsel %vm3164, %v2416, %v3260
        %v3357 = vsel %vm3165, %v3063, %v3261
        %v3358 = vsel %vm3166, %v2420, %v3262
        %v3359 = vsel %vm3167, %v2422, %v3263
        %v3360 = vsel %vm3168, %v3068, %v3264
        %v3361 = vsel %vm3169, %v2424, %v3265
        %v3362 = vsel %vm3170, %v2426, %v3266
        %v3363 = vsel %vm3171, %v3071, %v3267
        %v3364 = vsel %vm3172, %v2430, %v3268
        %v3365 = vsel %vm3173, %v2432, %v3269
        %v3366 = vsel %vm3174, %v3076, %v3270
        %v3367 = vsel %vm3175, %v2434, %v3271
        %v3368 = vsel %vm3176, %v2436, %v3272
        %v3369 = vsel %vm3177, %v3079, %v3273
        %v3370 = vpack.c.bf16 %v3277, %v3274
        %v3371 = vpack.c.bf16 %v3278, %v3275
        %v3372 = vpack.c.bf16 %v3279, %v3276
        %v3373 = vpack.c.bf16 %v3283, %v3280
        %v3374 = vpack.c.bf16 %v3284, %v3281
        %v3375 = vpack.c.bf16 %v3285, %v3282
        %v3376 = vpack.c.bf16 %v3289, %v3286
        %v3377 = vpack.c.bf16 %v3290, %v3287
        %v3378 = vpack.c.bf16 %v3291, %v3288
        %v3379 = vpack.c.bf16 %v3295, %v3292
        %v3380 = vpack.c.bf16 %v3296, %v3293
        %v3381 = vpack.c.bf16 %v3297, %v3294
        %v3382 = vpack.c.bf16 %v3301, %v3298
        %v3383 = vpack.c.bf16 %v3302, %v3299
        %v3384 = vpack.c.bf16 %v3303, %v3300
        %v3385 = vpack.c.bf16 %v3307, %v3304
        %v3386 = vpack.c.bf16 %v3308, %v3305
        %v3387 = vpack.c.bf16 %v3309, %v3306
        %v3388 = vpack.c.bf16 %v3313, %v3310
        %v3389 = vpack.c.bf16 %v3314, %v3311
        %v3390 = vpack.c.bf16 %v3315, %v3312
        %v3391 = vpack.c.bf16 %v3319, %v3316
        %v3392 = vpack.c.bf16 %v3320, %v3317
        %v3393 = vpack.c.bf16 %v3321, %v3318
        %v3394 = vpack.c.bf16 %v3325, %v3322
        %v3395 = vpack.c.bf16 %v3326, %v3323
        %v3396 = vpack.c.bf16 %v3327, %v3324
        %v3397 = vpack.c.bf16 %v3331, %v3328
        %v3398 = vpack.c.bf16 %v3332, %v3329
        %v3399 = vpack.c.bf16 %v3333, %v3330
        %v3400 = vpack.c.bf16 %v3337, %v3334
        %v3401 = vpack.c.bf16 %v3338, %v3335
        %v3402 = vpack.c.bf16 %v3339, %v3336
        %v3403 = vpack.c.bf16 %v3343, %v3340
        %v3404 = vpack.c.bf16 %v3344, %v3341
        %v3405 = vpack.c.bf16 %v3345, %v3342
        %v3406 = vpack.c.bf16 %v3349, %v3346
        %v3407 = vpack.c.bf16 %v3350, %v3347
        %v3408 = vpack.c.bf16 %v3351, %v3348
        %v3409 = vpack.c.bf16 %v3355, %v3352
        %v3410 = vpack.c.bf16 %v3356, %v3353
        %v3411 = vpack.c.bf16 %v3357, %v3354
        %v3412 = vpack.c.bf16 %v3361, %v3358
        %v3413 = vpack.c.bf16 %v3362, %v3359
        %v3414 = vpack.c.bf16 %v3363, %v3360
        %v3415 = vpack.c.bf16 %v3367, %v3364
        %v3416 = vpack.c.bf16 %v3368, %v3365
        %v3417 = vpack.c.bf16 %v3369, %v3366
        %v3418 = vld [vmem:[#allocation6] sm:$0xf]
        %v3419 = vld [vmem:[#allocation6 + $0x4] sm:$0xf]
        %v3420 = vld [vmem:[#allocation6 + $0x8] sm:$0xf]
        %v3421 = vld [vmem:[#allocation6 + $0xc] sm:$0xf]
        %v3422 = vld [vmem:[#allocation6 + $0x10] sm:$0xf]
        %v3423 = vld [vmem:[#allocation6 + $0x14] sm:$0xf]
        %v3424 = vld [vmem:[#allocation6 + $0x18] sm:$0xf]
        %v3425 = vld [vmem:[#allocation6 + $0x1c] sm:$0xf]
        %v3426 = vld [vmem:[#allocation6 + $0x20] sm:$0xf]
        %v3427 = vld [vmem:[#allocation6 + $0x24] sm:$0xf]
        %v3428 = vld [vmem:[#allocation6 + $0x28] sm:$0xf]
        %v3429 = vld [vmem:[#allocation6 + $0x2c] sm:$0xf]
        %v3430 = vld [vmem:[#allocation6 + $0x30] sm:$0xf]
        %v3431 = vld [vmem:[#allocation6 + $0x34] sm:$0xf]
        %v3432 = vld [vmem:[#allocation6 + $0x38] sm:$0xf]
        %v3433 = vld [vmem:[#allocation6 + $0x3c] sm:$0xf]
        %v3434 = vld [vmem:[#allocation6 + $0x40] sm:$0xf]
        %v3435 = vld [vmem:[#allocation6 + $0x44] sm:$0xf]
        %v3436 = vld [vmem:[#allocation6 + $0x48] sm:$0xf]
        %v3437 = vld [vmem:[#allocation6 + $0x4c] sm:$0xf]
        %v3438 = vld [vmem:[#allocation6 + $0x50] sm:$0xf]
        %v3439 = vld [vmem:[#allocation6 + $0x54] sm:$0xf]
        %v3440 = vld [vmem:[#allocation6 + $0x58] sm:$0xf]
        %v3441 = vld [vmem:[#allocation6 + $0x5c] sm:$0xf]
        %v3442 = vld [vmem:[#allocation6 + $0x60] sm:$0xf]
        %v3443 = vld [vmem:[#allocation6 + $0x64] sm:$0xf]
        %v3444 = vld [vmem:[#allocation6 + $0x68] sm:$0xf]
        %v3445 = vld [vmem:[#allocation6 + $0x6c] sm:$0xf]
        %v3446 = vld [vmem:[#allocation6 + $0x70] sm:$0xf]
        %v3447 = vld [vmem:[#allocation6 + $0x74] sm:$0xf]
        %v3448 = vld [vmem:[#allocation6 + $0x78] sm:$0xf]
        %v3449 = vld [vmem:[#allocation6 + $0x7c] sm:$0xf]
        %v3450 = vld [vmem:[#allocation6 + $0x80] sm:$0xf]
        %v3451 = vld [vmem:[#allocation6 + $0x84] sm:$0xf]
        %v3452 = vld [vmem:[#allocation6 + $0x88] sm:$0xf]
        %v3453 = vld [vmem:[#allocation6 + $0x8c] sm:$0xf]
        %v3454 = vld [vmem:[#allocation6 + $0x90] sm:$0xf]
        %v3455 = vld [vmem:[#allocation6 + $0x94] sm:$0xf]
        %v3456 = vld [vmem:[#allocation6 + $0x98] sm:$0xf]
        %v3457 = vld [vmem:[#allocation6 + $0x9c] sm:$0xf]
        %v3458 = vld [vmem:[#allocation6 + $0xa0] sm:$0xf]
        %v3459 = vld [vmem:[#allocation6 + $0xa4] sm:$0xf]
        %v3460 = vld [vmem:[#allocation6 + $0xa8] sm:$0xf]
        %v3461 = vld [vmem:[#allocation6 + $0xac] sm:$0xf]
        %v3462 = vld [vmem:[#allocation6 + $0xb0] sm:$0xf]
        %v3463 = vld [vmem:[#allocation6 + $0xb4] sm:$0xf]
        %v3464 = vld [vmem:[#allocation6 + $0xb8] sm:$0xf]
        %v3465 = vld [vmem:[#allocation6 + $0xbc] sm:$0xf]
        %v3514 = vunpack.c.l.b16 %v3418
        %v3515 = vunpack.c.l.b16 %v3419
        %v3516 = vunpack.c.l.b16 %v3420
        %v3517 = vunpack.c.l.b16 %v3421
        %v3518 = vunpack.c.l.b16 %v3422
        %v3519 = vunpack.c.l.b16 %v3423
        %v3520 = vunpack.c.l.b16 %v3424
        %v3521 = vunpack.c.l.b16 %v3425
        %v3522 = vunpack.c.l.b16 %v3426
        %v3523 = vunpack.c.l.b16 %v3427
        %v3524 = vunpack.c.l.b16 %v3428
        %v3525 = vunpack.c.l.b16 %v3429
        %v3526 = vunpack.c.l.b16 %v3430
        %v3527 = vunpack.c.l.b16 %v3431
        %v3528 = vunpack.c.l.b16 %v3432
        %v3529 = vunpack.c.l.b16 %v3433
        %v3530 = vunpack.c.l.b16 %v3434
        %v3531 = vunpack.c.l.b16 %v3435
        %v3532 = vunpack.c.l.b16 %v3436
        %v3533 = vunpack.c.l.b16 %v3437
        %v3534 = vunpack.c.l.b16 %v3438
        %v3535 = vunpack.c.l.b16 %v3439
        %v3536 = vunpack.c.l.b16 %v3440
        %v3537 = vunpack.c.l.b16 %v3441
        %v3538 = vunpack.c.l.b16 %v3442
        %v3539 = vunpack.c.l.b16 %v3443
        %v3540 = vunpack.c.l.b16 %v3444
        %v3541 = vunpack.c.l.b16 %v3445
        %v3542 = vunpack.c.l.b16 %v3446
        %v3543 = vunpack.c.l.b16 %v3447
        %v3544 = vunpack.c.l.b16 %v3448
        %v3545 = vunpack.c.l.b16 %v3449
        %v3546 = vunpack.c.l.b16 %v3450
        %v3547 = vunpack.c.l.b16 %v3451
        %v3548 = vunpack.c.l.b16 %v3452
        %v3549 = vunpack.c.l.b16 %v3453
        %v3550 = vunpack.c.l.b16 %v3454
        %v3551 = vunpack.c.l.b16 %v3455
        %v3552 = vunpack.c.l.b16 %v3456
        %v3553 = vunpack.c.l.b16 %v3457
        %v3554 = vunpack.c.l.b16 %v3458
        %v3555 = vunpack.c.l.b16 %v3459
        %v3556 = vunpack.c.l.b16 %v3460
        %v3557 = vunpack.c.l.b16 %v3461
        %v3558 = vunpack.c.l.b16 %v3462
        %v3559 = vunpack.c.l.b16 %v3463
        %v3560 = vunpack.c.l.b16 %v3464
        %v3561 = vunpack.c.l.b16 %v3465
        %v3562 = vpack.c.b16 %v3515, %v3514
        %v3563 = vpack.c.b16 %v3517, %v3516
        %v3564 = vpack.c.b16 %v3519, %v3518
        %v3565 = vpack.c.b16 %v3521, %v3520
        %v3566 = vpack.c.b16 %v3523, %v3522
        %v3567 = vpack.c.b16 %v3525, %v3524
        %v3568 = vpack.c.b16 %v3527, %v3526
        %v3569 = vpack.c.b16 %v3529, %v3528
        %v3570 = vpack.c.b16 %v3531, %v3530
        %v3571 = vpack.c.b16 %v3533, %v3532
        %v3572 = vpack.c.b16 %v3535, %v3534
        %v3573 = vpack.c.b16 %v3537, %v3536
        %v3574 = vpack.c.b16 %v3539, %v3538
        %v3575 = vpack.c.b16 %v3541, %v3540
        %v3576 = vpack.c.b16 %v3543, %v3542
        %v3577 = vpack.c.b16 %v3545, %v3544
        %v3578 = vpack.c.b16 %v3547, %v3546
        %v3579 = vpack.c.b16 %v3549, %v3548
        %v3580 = vpack.c.b16 %v3551, %v3550
        %v3581 = vpack.c.b16 %v3553, %v3552
        %v3582 = vpack.c.b16 %v3555, %v3554
        %v3583 = vpack.c.b16 %v3557, %v3556
        %v3584 = vpack.c.b16 %v3559, %v3558
        %v3585 = vpack.c.b16 %v3561, %v3560
        %3610 = vmatprep.subr.bf16.mxu0 0
        %3611 = vmatpush1.bf16.msra.mxu0 %v3562
        %3612 = vmatprep.subr.bf16.mxu0 0
        %3613 = vmatpush1.bf16.msra.mxu0 %v3563
        %3614 = vmatprep.subr.bf16.mxu0 0
        %3615 = vmatpush1.bf16.msra.mxu0 %v3564
        %3616 = vmatprep.subr.bf16.mxu0 0
        %3617 = vmatpush1.bf16.msra.mxu0 %v3565
        %3618 = vmatprep.subr.bf16.mxu0 0
        %3619 = vmatpush1.bf16.msra.mxu0 %v3566
        %3620 = vmatprep.subr.bf16.mxu0 0
        %3621 = vmatpush1.bf16.msra.mxu0 %v3567
        %3622 = vmatprep.subr.bf16.mxu0 0
        %3623 = vmatpush1.bf16.msra.mxu0 %v3568
        %3624 = vmatprep.subr.bf16.mxu0 0
        %3625 = vmatpush1.bf16.msra.mxu0 %v3569
        %3626 = vmatprep.subr.bf16.mxu0 0
        %3627 = vmatpush1.bf16.msra.mxu0 %v3570
        %3628 = vmatprep.subr.bf16.mxu0 0
        %3629 = vmatpush1.bf16.msra.mxu0 %v3571
        %3630 = vmatprep.subr.bf16.mxu0 0
        %3631 = vmatpush1.bf16.msra.mxu0 %v3572
        %3632 = vmatprep.subr.bf16.mxu0 0
        %3633 = vmatpush1.bf16.msra.mxu0 %v3573
        %3634 = vmatprep.subr.bf16.mxu0 0
        %3635 = vmatpush1.bf16.msra.mxu0 %v3574
        %3636 = vmatprep.subr.bf16.mxu0 0
        %3637 = vmatpush1.bf16.msra.mxu0 %v3575
        %3638 = vmatprep.subr.bf16.mxu0 0
        %3639 = vmatpush1.bf16.msra.mxu0 %v3576
        %3640 = vmatprep.subr.bf16.mxu0 0
        %3641 = vmatpush1.bf16.msra.mxu0 %v3577
        %3642 = vmatprep.mubr.bf16.mxu0 %v3371
        %3643 = vmatmul.mubr.bf16.gmra.mrb[0].mxu0 %v3370
        %v3644 = vpop.f32.mrb[0].mxu0
        %v3645 = vadd.f32 0.0, %v3644
        %v3646 = vpop.f32.mrb[0].mxu0
        %v3647 = vpop.f32.mrb[0].mxu0
        %v3648 = vadd.f32 0.0, %v3647
        %v3649 = vpop.f32.mrb[0].mxu0
        %3650 = vmatprep.mubr.bf16.mxu0 %v3374
        %3651 = vmatmul.mubr.bf16.gmra.mrb[0].mxu0 %v3373
        %v3652 = vpop.f32.mrb[0].mxu0
        %v3653 = vadd.f32 0.0, %v3652
        %v3654 = vpop.f32.mrb[0].mxu0
        %v3655 = vpop.f32.mrb[0].mxu0
        %v3656 = vadd.f32 0.0, %v3655
        %v3657 = vpop.f32.mrb[0].mxu0
        %3658 = vmatprep.mubr.bf16.mxu0 %v3377
        %3659 = vmatmul.mubr.bf16.gmra.mrb[0].mxu0 %v3376
        %v3660 = vpop.f32.mrb[0].mxu0
        %v3661 = vadd.f32 0.0, %v3660
        %v3662 = vpop.f32.mrb[0].mxu0
        %v3663 = vpop.f32.mrb[0].mxu0
        %v3664 = vadd.f32 0.0, %v3663
        %v3665 = vpop.f32.mrb[0].mxu0
        %3666 = vmatprep.mubr.bf16.mxu0 %v3380
        %3667 = vmatmul.mubr.bf16.gmra.mrb[0].mxu0 %v3379
        %v3668 = vpop.f32.mrb[0].mxu0
        %v3669 = vadd.f32 0.0, %v3668
        %v3670 = vpop.f32.mrb[0].mxu0
        %v3671 = vpop.f32.mrb[0].mxu0
        %v3672 = vadd.f32 0.0, %v3671
        %v3673 = vpop.f32.mrb[0].mxu0
        %3674 = vmatprep.mubr.bf16.mxu0 %v3383
        %3675 = vmatmul.mubr.bf16.gmra.mrb[0].mxu0 %v3382
        %v3676 = vpop.f32.mrb[0].mxu0
        %v3677 = vadd.f32 0.0, %v3676
        %v3678 = vpop.f32.mrb[0].mxu0
        %v3679 = vpop.f32.mrb[0].mxu0
        %v3680 = vadd.f32 0.0, %v3679
        %v3681 = vpop.f32.mrb[0].mxu0
        %3682 = vmatprep.mubr.bf16.mxu0 %v3386
        %3683 = vmatmul.mubr.bf16.gmra.mrb[0].mxu0 %v3385
        %v3684 = vpop.f32.mrb[0].mxu0
        %v3685 = vadd.f32 0.0, %v3684
        %v3686 = vpop.f32.mrb[0].mxu0
        %v3687 = vpop.f32.mrb[0].mxu0
        %v3688 = vadd.f32 0.0, %v3687
        %v3689 = vpop.f32.mrb[0].mxu0
        %3690 = vmatprep.mubr.bf16.mxu0 %v3389
        %3691 = vmatmul.mubr.bf16.gmra.mrb[0].mxu0 %v3388
        %v3692 = vpop.f32.mrb[0].mxu0
        %v3693 = vadd.f32 0.0, %v3692
        %v3694 = vpop.f32.mrb[0].mxu0
        %v3695 = vpop.f32.mrb[0].mxu0
        %v3696 = vadd.f32 0.0, %v3695
        %v3697 = vpop.f32.mrb[0].mxu0
        %3698 = vmatprep.mubr.bf16.mxu0 %v3392
        %3699 = vmatmul.mubr.bf16.gmra.mrb[0].mxu0 %v3391
        %v3700 = vpop.f32.mrb[0].mxu0
        %v3701 = vadd.f32 0.0, %v3700
        %v3702 = vpop.f32.mrb[0].mxu0
        %v3703 = vpop.f32.mrb[0].mxu0
        %v3704 = vadd.f32 0.0, %v3703
        %v3705 = vpop.f32.mrb[0].mxu0
        %3706 = vmatprep.mubr.bf16.mxu0 %v3395
        %3707 = vmatmul.mubr.bf16.gmra.mrb[0].mxu0 %v3394
        %v3708 = vpop.f32.mrb[0].mxu0
        %v3709 = vadd.f32 0.0, %v3708
        %v3710 = vpop.f32.mrb[0].mxu0
        %v3711 = vpop.f32.mrb[0].mxu0
        %v3712 = vadd.f32 0.0, %v3711
        %v3713 = vpop.f32.mrb[0].mxu0
        %3714 = vmatprep.mubr.bf16.mxu0 %v3398
        %3715 = vmatmul.mubr.bf16.gmra.mrb[0].mxu0 %v3397
        %v3716 = vpop.f32.mrb[0].mxu0
        %v3717 = vadd.f32 0.0, %v3716
        %v3718 = vpop.f32.mrb[0].mxu0
        %v3719 = vpop.f32.mrb[0].mxu0
        %v3720 = vadd.f32 0.0, %v3719
        %v3721 = vpop.f32.mrb[0].mxu0
        %3722 = vmatprep.mubr.bf16.mxu0 %v3401
        %3723 = vmatmul.mubr.bf16.gmra.mrb[0].mxu0 %v3400
        %v3724 = vpop.f32.mrb[0].mxu0
        %v3725 = vadd.f32 0.0, %v3724
        %v3726 = vpop.f32.mrb[0].mxu0
        %v3727 = vpop.f32.mrb[0].mxu0
        %v3728 = vadd.f32 0.0, %v3727
        %v3729 = vpop.f32.mrb[0].mxu0
        %3730 = vmatprep.mubr.bf16.mxu0 %v3404
        %3731 = vmatmul.mubr.bf16.gmra.mrb[0].mxu0 %v3403
        %v3732 = vpop.f32.mrb[0].mxu0
        %v3733 = vadd.f32 0.0, %v3732
        %v3734 = vpop.f32.mrb[0].mxu0
        %v3735 = vpop.f32.mrb[0].mxu0
        %v3736 = vadd.f32 0.0, %v3735
        %v3737 = vpop.f32.mrb[0].mxu0
        %3738 = vmatprep.mubr.bf16.mxu0 %v3407
        %3739 = vmatmul.mubr.bf16.gmra.mrb[0].mxu0 %v3406
        %v3740 = vpop.f32.mrb[0].mxu0
        %v3741 = vadd.f32 0.0, %v3740
        %v3742 = vpop.f32.mrb[0].mxu0
        %v3743 = vpop.f32.mrb[0].mxu0
        %v3744 = vadd.f32 0.0, %v3743
        %v3745 = vpop.f32.mrb[0].mxu0
        %3746 = vmatprep.mubr.bf16.mxu0 %v3410
        %3747 = vmatmul.mubr.bf16.gmra.mrb[0].mxu0 %v3409
        %v3748 = vpop.f32.mrb[0].mxu0
        %v3749 = vadd.f32 0.0, %v3748
        %v3750 = vpop.f32.mrb[0].mxu0
        %v3751 = vpop.f32.mrb[0].mxu0
        %v3752 = vadd.f32 0.0, %v3751
        %v3753 = vpop.f32.mrb[0].mxu0
        %3754 = vmatprep.mubr.bf16.mxu0 %v3413
        %3755 = vmatmul.mubr.bf16.gmra.mrb[0].mxu0 %v3412
        %v3756 = vpop.f32.mrb[0].mxu0
        %v3757 = vadd.f32 0.0, %v3756
        %v3758 = vpop.f32.mrb[0].mxu0
        %v3759 = vpop.f32.mrb[0].mxu0
        %v3760 = vadd.f32 0.0, %v3759
        %v3761 = vpop.f32.mrb[0].mxu0
        %3762 = vmatprep.mubr.bf16.mxu0 %v3416
        %3763 = vmatmul.mubr.bf16.gmra.mrb[0].mxu0 %v3415
        %v3764 = vpop.f32.mrb[0].mxu0
        %v3765 = vadd.f32 0.0, %v3764
        %v3766 = vpop.f32.mrb[0].mxu0
        %v3767 = vpop.f32.mrb[0].mxu0
        %v3768 = vadd.f32 0.0, %v3767
        %v3769 = vpop.f32.mrb[0].mxu0
        %3770 = vdwg.mxu0
        %3771 = vmatprep.subr.bf16.mxu0 0
        %3772 = vmatpush1.bf16.msra.mxu0 %v3578
        %3773 = vmatprep.subr.bf16.mxu0 0
        %3774 = vmatpush1.bf16.msra.mxu0 %v3579
        %3775 = vmatprep.subr.bf16.mxu0 0
        %3776 = vmatpush1.bf16.msra.mxu0 %v3580
        %3777 = vmatprep.subr.bf16.mxu0 0
        %3778 = vmatpush1.bf16.msra.mxu0 %v3581
        %3779 = vmatprep.subr.bf16.mxu0 0
        %3780 = vmatpush1.bf16.msra.mxu0 %v3582
        %3781 = vmatprep.subr.bf16.mxu0 0
        %3782 = vmatpush1.bf16.msra.mxu0 %v3583
        %3783 = vmatprep.subr.bf16.mxu0 0
        %3784 = vmatpush1.bf16.msra.mxu0 %v3584
        %3785 = vmatprep.subr.bf16.mxu0 0
        %3786 = vmatpush1.bf16.msra.mxu0 %v3585
        %3787 = vmatprep.subr.bf16.mxu0 0
        %3788 = vmatpush1.bf16.msra.mxu0 0
        %3789 = vmatprep.subr.bf16.mxu0 0
        %3790 = vmatpush1.bf16.msra.mxu0 0
        %3791 = vmatprep.subr.bf16.mxu0 0
        %3792 = vmatpush1.bf16.msra.mxu0 0
        %3793 = vmatprep.subr.bf16.mxu0 0
        %3794 = vmatpush1.bf16.msra.mxu0 0
        %3795 = vmatprep.subr.bf16.mxu0 0
        %3796 = vmatpush1.bf16.msra.mxu0 0
        %3797 = vmatprep.subr.bf16.mxu0 0
        %3798 = vmatpush1.bf16.msra.mxu0 0
        %3799 = vmatprep.subr.bf16.mxu0 0
        %3800 = vmatpush1.bf16.msra.mxu0 0
        %3801 = vmatprep.subr.bf16.mxu0 0
        %3802 = vmatpush1.bf16.msra.mxu0 0
        %3803 = vmatprep.mubr.bf16.mxu0 0
        %3804 = vmatmul.mubr.bf16.gmra.mrb[0].mxu0 %v3372
        %v3805 = vpop.f32.mrb[0].mxu0
        %v3806 = vadd.f32 %v3645, %v3805
        %v3807 = vpop.f32.mrb[0].mxu0
        %v3808 = vpop.f32.mrb[0].mxu0
        %v3809 = vadd.f32 %v3648, %v3808
        %v3810 = vpop.f32.mrb[0].mxu0
        %3811 = vmatprep.mubr.bf16.mxu0 0
        %3812 = vmatmul.mubr.bf16.gmra.mrb[0].mxu0 %v3375
        %v3813 = vpop.f32.mrb[0].mxu0
        %v3814 = vadd.f32 %v3653, %v3813
        %v3815 = vpop.f32.mrb[0].mxu0
        %v3816 = vpop.f32.mrb[0].mxu0
        %v3817 = vadd.f32 %v3656, %v3816
        %v3818 = vpop.f32.mrb[0].mxu0
        %3819 = vmatprep.mubr.bf16.mxu0 0
        %3820 = vmatmul.mubr.bf16.gmra.mrb[0].mxu0 %v3378
        %v3821 = vpop.f32.mrb[0].mxu0
        %v3822 = vadd.f32 %v3661, %v3821
        %v3823 = vpop.f32.mrb[0].mxu0
        %v3824 = vpop.f32.mrb[0].mxu0
        %v3825 = vadd.f32 %v3664, %v3824
        %v3826 = vpop.f32.mrb[0].mxu0
        %3827 = vmatprep.mubr.bf16.mxu0 0
        %3828 = vmatmul.mubr.bf16.gmra.mrb[0].mxu0 %v3381
        %v3829 = vpop.f32.mrb[0].mxu0
        %v3830 = vadd.f32 %v3669, %v3829
        %v3831 = vpop.f32.mrb[0].mxu0
        %v3832 = vpop.f32.mrb[0].mxu0
        %v3833 = vadd.f32 %v3672, %v3832
        %v3834 = vpop.f32.mrb[0].mxu0
        %3835 = vmatprep.mubr.bf16.mxu0 0
        %3836 = vmatmul.mubr.bf16.gmra.mrb[0].mxu0 %v3384
        %v3837 = vpop.f32.mrb[0].mxu0
        %v3838 = vadd.f32 %v3677, %v3837
        %v3839 = vpop.f32.mrb[0].mxu0
        %v3840 = vpop.f32.mrb[0].mxu0
        %v3841 = vadd.f32 %v3680, %v3840
        %v3842 = vpop.f32.mrb[0].mxu0
        %3843 = vmatprep.mubr.bf16.mxu0 0
        %3844 = vmatmul.mubr.bf16.gmra.mrb[0].mxu0 %v3387
        %v3845 = vpop.f32.mrb[0].mxu0
        %v3846 = vadd.f32 %v3685, %v3845
        %v3847 = vpop.f32.mrb[0].mxu0
        %v3848 = vpop.f32.mrb[0].mxu0
        %v3849 = vadd.f32 %v3688, %v3848
        %v3850 = vpop.f32.mrb[0].mxu0
        %3851 = vmatprep.mubr.bf16.mxu0 0
        %3852 = vmatmul.mubr.bf16.gmra.mrb[0].mxu0 %v3390
        %v3853 = vpop.f32.mrb[0].mxu0
        %v3854 = vadd.f32 %v3693, %v3853
        %v3855 = vpop.f32.mrb[0].mxu0
        %v3856 = vpop.f32.mrb[0].mxu0
        %v3857 = vadd.f32 %v3696, %v3856
        %v3858 = vpop.f32.mrb[0].mxu0
        %3859 = vmatprep.mubr.bf16.mxu0 0
        %3860 = vmatmul.mubr.bf16.gmra.mrb[0].mxu0 %v3393
        %v3861 = vpop.f32.mrb[0].mxu0
        %v3862 = vadd.f32 %v3701, %v3861
        %v3863 = vpop.f32.mrb[0].mxu0
        %v3864 = vpop.f32.mrb[0].mxu0
        %v3865 = vadd.f32 %v3704, %v3864
        %v3866 = vpop.f32.mrb[0].mxu0
        %3867 = vmatprep.mubr.bf16.mxu0 0
        %3868 = vmatmul.mubr.bf16.gmra.mrb[0].mxu0 %v3396
        %v3869 = vpop.f32.mrb[0].mxu0
        %v3870 = vadd.f32 %v3709, %v3869
        %v3871 = vpop.f32.mrb[0].mxu0
        %v3872 = vpop.f32.mrb[0].mxu0
        %v3873 = vadd.f32 %v3712, %v3872
        %v3874 = vpop.f32.mrb[0].mxu0
        %3875 = vmatprep.mubr.bf16.mxu0 0
        %3876 = vmatmul.mubr.bf16.gmra.mrb[0].mxu0 %v3399
        %v3877 = vpop.f32.mrb[0].mxu0
        %v3878 = vadd.f32 %v3717, %v3877
        %v3879 = vpop.f32.mrb[0].mxu0
        %v3880 = vpop.f32.mrb[0].mxu0
        %v3881 = vadd.f32 %v3720, %v3880
        %v3882 = vpop.f32.mrb[0].mxu0
        %3883 = vmatprep.mubr.bf16.mxu0 0
        %3884 = vmatmul.mubr.bf16.gmra.mrb[0].mxu0 %v3402
        %v3885 = vpop.f32.mrb[0].mxu0
        %v3886 = vadd.f32 %v3725, %v3885
        %v3887 = vpop.f32.mrb[0].mxu0
        %v3888 = vpop.f32.mrb[0].mxu0
        %v3889 = vadd.f32 %v3728, %v3888
        %v3890 = vpop.f32.mrb[0].mxu0
        %3891 = vmatprep.mubr.bf16.mxu0 0
        %3892 = vmatmul.mubr.bf16.gmra.mrb[0].mxu0 %v3405
        %v3893 = vpop.f32.mrb[0].mxu0
        %v3894 = vadd.f32 %v3733, %v3893
        %v3895 = vpop.f32.mrb[0].mxu0
        %v3896 = vpop.f32.mrb[0].mxu0
        %v3897 = vadd.f32 %v3736, %v3896
        %v3898 = vpop.f32.mrb[0].mxu0
        %3899 = vmatprep.mubr.bf16.mxu0 0
        %3900 = vmatmul.mubr.bf16.gmra.mrb[0].mxu0 %v3408
        %v3901 = vpop.f32.mrb[0].mxu0
        %v3902 = vadd.f32 %v3741, %v3901
        %v3903 = vpop.f32.mrb[0].mxu0
        %v3904 = vpop.f32.mrb[0].mxu0
        %v3905 = vadd.f32 %v3744, %v3904
        %v3906 = vpop.f32.mrb[0].mxu0
        %3907 = vmatprep.mubr.bf16.mxu0 0
        %3908 = vmatmul.mubr.bf16.gmra.mrb[0].mxu0 %v3411
        %v3909 = vpop.f32.mrb[0].mxu0
        %v3910 = vadd.f32 %v3749, %v3909
        %v3911 = vpop.f32.mrb[0].mxu0
        %v3912 = vpop.f32.mrb[0].mxu0
        %v3913 = vadd.f32 %v3752, %v3912
        %v3914 = vpop.f32.mrb[0].mxu0
        %3915 = vmatprep.mubr.bf16.mxu0 0
        %3916 = vmatmul.mubr.bf16.gmra.mrb[0].mxu0 %v3414
        %v3917 = vpop.f32.mrb[0].mxu0
        %v3918 = vadd.f32 %v3757, %v3917
        %v3919 = vpop.f32.mrb[0].mxu0
        %v3920 = vpop.f32.mrb[0].mxu0
        %v3921 = vadd.f32 %v3760, %v3920
        %v3922 = vpop.f32.mrb[0].mxu0
        %3923 = vmatprep.mubr.bf16.mxu0 0
        %3924 = vmatmul.mubr.bf16.gmra.mrb[0].mxu0 %v3417
        %v3925 = vpop.f32.mrb[0].mxu0
        %v3926 = vadd.f32 %v3765, %v3925
        %v3927 = vpop.f32.mrb[0].mxu0
        %v3928 = vpop.f32.mrb[0].mxu0
        %v3929 = vadd.f32 %v3768, %v3928
        %v3930 = vpop.f32.mrb[0].mxu0
        %3931 = vdwg.mxu0
        %vm3932 = vcmp.gt.f32.partialorder %v3806, 0.0
        %vm3933 = vcmp.gt.f32.partialorder %v3809, 0.0
        %vm3934 = vcmp.gt.f32.partialorder %v3814, 0.0
        %vm3935 = vcmp.gt.f32.partialorder %v3817, 0.0
        %vm3936 = vcmp.gt.f32.partialorder %v3822, 0.0
        %vm3937 = vcmp.gt.f32.partialorder %v3825, 0.0
        %vm3938 = vcmp.gt.f32.partialorder %v3830, 0.0
        %vm3939 = vcmp.gt.f32.partialorder %v3833, 0.0
        %vm3940 = vcmp.gt.f32.partialorder %v3838, 0.0
        %vm3941 = vcmp.gt.f32.partialorder %v3841, 0.0
        %vm3942 = vcmp.gt.f32.partialorder %v3846, 0.0
        %vm3943 = vcmp.gt.f32.partialorder %v3849, 0.0
        %vm3944 = vcmp.gt.f32.partialorder %v3854, 0.0
        %vm3945 = vcmp.gt.f32.partialorder %v3857, 0.0
        %vm3946 = vcmp.gt.f32.partialorder %v3862, 0.0
        %vm3947 = vcmp.gt.f32.partialorder %v3865, 0.0
        %vm3948 = vcmp.gt.f32.partialorder %v3870, 0.0
        %vm3949 = vcmp.gt.f32.partialorder %v3873, 0.0
        %vm3950 = vcmp.gt.f32.partialorder %v3878, 0.0
        %vm3951 = vcmp.gt.f32.partialorder %v3881, 0.0
        %vm3952 = vcmp.gt.f32.partialorder %v3886, 0.0
        %vm3953 = vcmp.gt.f32.partialorder %v3889, 0.0
        %vm3954 = vcmp.gt.f32.partialorder %v3894, 0.0
        %vm3955 = vcmp.gt.f32.partialorder %v3897, 0.0
        %vm3956 = vcmp.gt.f32.partialorder %v3902, 0.0
        %vm3957 = vcmp.gt.f32.partialorder %v3905, 0.0
        %vm3958 = vcmp.gt.f32.partialorder %v3910, 0.0
        %vm3959 = vcmp.gt.f32.partialorder %v3913, 0.0
        %vm3960 = vcmp.gt.f32.partialorder %v3918, 0.0
        %vm3961 = vcmp.gt.f32.partialorder %v3921, 0.0
        %vm3962 = vcmp.gt.f32.partialorder %v3926, 0.0
        %vm3963 = vcmp.gt.f32.partialorder %v3929, 0.0
        %v3964 = vmul.f32 %v3806, 0.01
        %v3965 = vmul.f32 %v3809, 0.01
        %v3966 = vmul.f32 %v3814, 0.01
        %v3967 = vmul.f32 %v3817, 0.01
        %v3968 = vmul.f32 %v3822, 0.01
        %v3969 = vmul.f32 %v3825, 0.01
        %v3970 = vmul.f32 %v3830, 0.01
        %v3971 = vmul.f32 %v3833, 0.01
        %v3972 = vmul.f32 %v3838, 0.01
        %v3973 = vmul.f32 %v3841, 0.01
        %v3974 = vmul.f32 %v3846, 0.01
        %v3975 = vmul.f32 %v3849, 0.01
        %v3976 = vmul.f32 %v3854, 0.01
        %v3977 = vmul.f32 %v3857, 0.01
        %v3978 = vmul.f32 %v3862, 0.01
        %v3979 = vmul.f32 %v3865, 0.01
        %v3980 = vmul.f32 %v3870, 0.01
        %v3981 = vmul.f32 %v3873, 0.01
        %v3982 = vmul.f32 %v3878, 0.01
        %v3983 = vmul.f32 %v3881, 0.01
        %v3984 = vmul.f32 %v3886, 0.01
        %v3985 = vmul.f32 %v3889, 0.01
        %v3986 = vmul.f32 %v3894, 0.01
        %v3987 = vmul.f32 %v3897, 0.01
        %v3988 = vmul.f32 %v3902, 0.01
        %v3989 = vmul.f32 %v3905, 0.01
        %v3990 = vmul.f32 %v3910, 0.01
        %v3991 = vmul.f32 %v3913, 0.01
        %v3992 = vmul.f32 %v3918, 0.01
        %v3993 = vmul.f32 %v3921, 0.01
        %v3994 = vmul.f32 %v3926, 0.01
        %v3995 = vmul.f32 %v3929, 0.01
        %v3996 = vsel %vm3932, %v3806, %v3964
        %v3997 = vsel %vm3933, %v3809, %v3965
        %v3998 = vsel %vm3934, %v3814, %v3966
        %v3999 = vsel %vm3935, %v3817, %v3967
        %v4000 = vsel %vm3936, %v3822, %v3968
        %v4001 = vsel %vm3937, %v3825, %v3969
        %v4002 = vsel %vm3938, %v3830, %v3970
        %v4003 = vsel %vm3939, %v3833, %v3971
        %v4004 = vsel %vm3940, %v3838, %v3972
        %v4005 = vsel %vm3941, %v3841, %v3973
        %v4006 = vsel %vm3942, %v3846, %v3974
        %v4007 = vsel %vm3943, %v3849, %v3975
        %v4008 = vsel %vm3944, %v3854, %v3976
        %v4009 = vsel %vm3945, %v3857, %v3977
        %v4010 = vsel %vm3946, %v3862, %v3978
        %v4011 = vsel %vm3947, %v3865, %v3979
        %v4012 = vsel %vm3948, %v3870, %v3980
        %v4013 = vsel %vm3949, %v3873, %v3981
        %v4014 = vsel %vm3950, %v3878, %v3982
        %v4015 = vsel %vm3951, %v3881, %v3983
        %v4016 = vsel %vm3952, %v3886, %v3984
        %v4017 = vsel %vm3953, %v3889, %v3985
        %v4018 = vsel %vm3954, %v3894, %v3986
        %v4019 = vsel %vm3955, %v3897, %v3987
        %v4020 = vsel %vm3956, %v3902, %v3988
        %v4021 = vsel %vm3957, %v3905, %v3989
        %v4022 = vsel %vm3958, %v3910, %v3990
        %v4023 = vsel %vm3959, %v3913, %v3991
        %v4024 = vsel %vm3960, %v3918, %v3992
        %v4025 = vsel %vm3961, %v3921, %v3993
        %v4026 = vsel %vm3962, %v3926, %v3994
        %v4027 = vsel %vm3963, %v3929, %v3995
        %v4028 = vpack.c.bf16 %v3997, %v3996
        %v4029 = vpack.c.bf16 %v3999, %v3998
        %v4030 = vpack.c.bf16 %v4001, %v4000
        %v4031 = vpack.c.bf16 %v4003, %v4002
        %v4032 = vpack.c.bf16 %v4005, %v4004
        %v4033 = vpack.c.bf16 %v4007, %v4006
        %v4034 = vpack.c.bf16 %v4009, %v4008
        %v4035 = vpack.c.bf16 %v4011, %v4010
        %v4036 = vpack.c.bf16 %v4013, %v4012
        %v4037 = vpack.c.bf16 %v4015, %v4014
        %v4038 = vpack.c.bf16 %v4017, %v4016
        %v4039 = vpack.c.bf16 %v4019, %v4018
        %v4040 = vpack.c.bf16 %v4021, %v4020
        %v4041 = vpack.c.bf16 %v4023, %v4022
        %v4042 = vpack.c.bf16 %v4025, %v4024
        %v4043 = vpack.c.bf16 %v4027, %v4026
        %v4044 = vld [vmem:[%s3] sm:$0xf]
        %v4045 = vld [vmem:[%s3 + $0x4] sm:$0xf]
        %v4046 = vld [vmem:[%s3 + $0x8] sm:$0xf]
        %v4047 = vld [vmem:[%s3 + $0xc] sm:$0xf]
        %v4048 = vld [vmem:[%s3 + $0x10] sm:$0xf]
        %v4049 = vld [vmem:[%s3 + $0x14] sm:$0xf]
        %v4050 = vld [vmem:[%s3 + $0x18] sm:$0xf]
        %v4051 = vld [vmem:[%s3 + $0x1c] sm:$0xf]
        %v4052 = vld [vmem:[%s3 + $0x20] sm:$0xf]
        %v4053 = vld [vmem:[%s3 + $0x24] sm:$0xf]
        %v4054 = vld [vmem:[%s3 + $0x28] sm:$0xf]
        %v4055 = vld [vmem:[%s3 + $0x2c] sm:$0xf]
        %v4056 = vld [vmem:[%s3 + $0x30] sm:$0xf]
        %v4057 = vld [vmem:[%s3 + $0x34] sm:$0xf]
        %v4058 = vld [vmem:[%s3 + $0x38] sm:$0xf]
        %v4059 = vld [vmem:[%s3 + $0x3c] sm:$0xf]
        %v4076 = vunpack.c.l.b16 %v4044
        %v4077 = vunpack.c.l.b16 %v4045
        %v4078 = vunpack.c.l.b16 %v4046
        %v4079 = vunpack.c.l.b16 %v4047
        %v4080 = vunpack.c.l.b16 %v4048
        %v4081 = vunpack.c.l.b16 %v4049
        %v4082 = vunpack.c.l.b16 %v4050
        %v4083 = vunpack.c.l.b16 %v4051
        %v4084 = vunpack.c.l.b16 %v4052
        %v4085 = vunpack.c.l.b16 %v4053
        %v4086 = vunpack.c.l.b16 %v4054
        %v4087 = vunpack.c.l.b16 %v4055
        %v4088 = vunpack.c.l.b16 %v4056
        %v4089 = vunpack.c.l.b16 %v4057
        %v4090 = vunpack.c.l.b16 %v4058
        %v4091 = vunpack.c.l.b16 %v4059
        %v4092 = vpack.c.b16 %v4077, %v4076
        %v4093 = vpack.c.b16 %v4079, %v4078
        %v4094 = vpack.c.b16 %v4081, %v4080
        %v4095 = vpack.c.b16 %v4083, %v4082
        %v4096 = vpack.c.b16 %v4085, %v4084
        %v4097 = vpack.c.b16 %v4087, %v4086
        %v4098 = vpack.c.b16 %v4089, %v4088
        %v4099 = vpack.c.b16 %v4091, %v4090
        %4108 = vmatprep.subr.bf16.mxu0 0
        %4109 = vmatpush1.bf16.msra.mxu0 %v4092
        %4110 = vmatprep.subr.bf16.mxu0 0
        %4111 = vmatpush1.bf16.msra.mxu0 %v4093
        %4112 = vmatprep.subr.bf16.mxu0 0
        %4113 = vmatpush1.bf16.msra.mxu0 %v4094
        %4114 = vmatprep.subr.bf16.mxu0 0
        %4115 = vmatpush1.bf16.msra.mxu0 %v4095
        %4116 = vmatprep.subr.bf16.mxu0 0
        %4117 = vmatpush1.bf16.msra.mxu0 %v4096
        %4118 = vmatprep.subr.bf16.mxu0 0
        %4119 = vmatpush1.bf16.msra.mxu0 %v4097
        %4120 = vmatprep.subr.bf16.mxu0 0
        %4121 = vmatpush1.bf16.msra.mxu0 %v4098
        %4122 = vmatprep.subr.bf16.mxu0 0
        %4123 = vmatpush1.bf16.msra.mxu0 %v4099
        %4124 = vmatprep.subr.bf16.mxu0 0
        %4125 = vmatpush1.bf16.msra.mxu0 0
        %4126 = vmatprep.subr.bf16.mxu0 0
        %4127 = vmatpush1.bf16.msra.mxu0 0
        %4128 = vmatprep.subr.bf16.mxu0 0
        %4129 = vmatpush1.bf16.msra.mxu0 0
        %4130 = vmatprep.subr.bf16.mxu0 0
        %4131 = vmatpush1.bf16.msra.mxu0 0
        %4132 = vmatprep.subr.bf16.mxu0 0
        %4133 = vmatpush1.bf16.msra.mxu0 0
        %4134 = vmatprep.subr.bf16.mxu0 0
        %4135 = vmatpush1.bf16.msra.mxu0 0
        %4136 = vmatprep.subr.bf16.mxu0 0
        %4137 = vmatpush1.bf16.msra.mxu0 0
        %4138 = vmatprep.subr.bf16.mxu0 0
        %4139 = vmatpush1.bf16.msra.mxu0 0
        %4140 = vmatprep.mubr.bf16.mxu0 0
        %4141 = vmatmul.mubr.bf16.gmra.mrb[0].mxu0 %v4028
        %v4142 = vpop.f32.mrb[0].mxu0
        %v4143 = vadd.f32 0.0, %v4142
        %v4144 = vpop.f32.mrb[0].mxu0
        %v4145 = vpop.f32.mrb[0].mxu0
        %v4146 = vadd.f32 0.0, %v4145
        %v4147 = vpop.f32.mrb[0].mxu0
        %4148 = vmatprep.mubr.bf16.mxu0 0
        %4149 = vmatmul.mubr.bf16.gmra.mrb[0].mxu0 %v4029
        %v4150 = vpop.f32.mrb[0].mxu0
        %v4151 = vadd.f32 0.0, %v4150
        %v4152 = vpop.f32.mrb[0].mxu0
        %v4153 = vpop.f32.mrb[0].mxu0
        %v4154 = vadd.f32 0.0, %v4153
        %v4155 = vpop.f32.mrb[0].mxu0
        %4156 = vmatprep.mubr.bf16.mxu0 0
        %4157 = vmatmul.mubr.bf16.gmra.mrb[0].mxu0 %v4030
        %v4158 = vpop.f32.mrb[0].mxu0
        %v4159 = vadd.f32 0.0, %v4158
        %v4160 = vpop.f32.mrb[0].mxu0
        %v4161 = vpop.f32.mrb[0].mxu0
        %v4162 = vadd.f32 0.0, %v4161
        %v4163 = vpop.f32.mrb[0].mxu0
        %4164 = vmatprep.mubr.bf16.mxu0 0
        %4165 = vmatmul.mubr.bf16.gmra.mrb[0].mxu0 %v4031
        %v4166 = vpop.f32.mrb[0].mxu0
        %v4167 = vadd.f32 0.0, %v4166
        %v4168 = vpop.f32.mrb[0].mxu0
        %v4169 = vpop.f32.mrb[0].mxu0
        %v4170 = vadd.f32 0.0, %v4169
        %v4171 = vpop.f32.mrb[0].mxu0
        %4172 = vmatprep.mubr.bf16.mxu0 0
        %4173 = vmatmul.mubr.bf16.gmra.mrb[0].mxu0 %v4032
        %v4174 = vpop.f32.mrb[0].mxu0
        %v4175 = vadd.f32 0.0, %v4174
        %v4176 = vpop.f32.mrb[0].mxu0
        %v4177 = vpop.f32.mrb[0].mxu0
        %v4178 = vadd.f32 0.0, %v4177
        %v4179 = vpop.f32.mrb[0].mxu0
        %4180 = vmatprep.mubr.bf16.mxu0 0
        %4181 = vmatmul.mubr.bf16.gmra.mrb[0].mxu0 %v4033
        %v4182 = vpop.f32.mrb[0].mxu0
        %v4183 = vadd.f32 0.0, %v4182
        %v4184 = vpop.f32.mrb[0].mxu0
        %v4185 = vpop.f32.mrb[0].mxu0
        %v4186 = vadd.f32 0.0, %v4185
        %v4187 = vpop.f32.mrb[0].mxu0
        %4188 = vmatprep.mubr.bf16.mxu0 0
        %4189 = vmatmul.mubr.bf16.gmra.mrb[0].mxu0 %v4034
        %v4190 = vpop.f32.mrb[0].mxu0
        %v4191 = vadd.f32 0.0, %v4190
        %v4192 = vpop.f32.mrb[0].mxu0
        %v4193 = vpop.f32.mrb[0].mxu0
        %v4194 = vadd.f32 0.0, %v4193
        %v4195 = vpop.f32.mrb[0].mxu0
        %4196 = vmatprep.mubr.bf16.mxu0 0
        %4197 = vmatmul.mubr.bf16.gmra.mrb[0].mxu0 %v4035
        %v4198 = vpop.f32.mrb[0].mxu0
        %v4199 = vadd.f32 0.0, %v4198
        %v4200 = vpop.f32.mrb[0].mxu0
        %v4201 = vpop.f32.mrb[0].mxu0
        %v4202 = vadd.f32 0.0, %v4201
        %v4203 = vpop.f32.mrb[0].mxu0
        %4204 = vmatprep.mubr.bf16.mxu0 0
        %4205 = vmatmul.mubr.bf16.gmra.mrb[0].mxu0 %v4036
        %v4206 = vpop.f32.mrb[0].mxu0
        %v4207 = vadd.f32 0.0, %v4206
        %v4208 = vpop.f32.mrb[0].mxu0
        %v4209 = vpop.f32.mrb[0].mxu0
        %v4210 = vadd.f32 0.0, %v4209
        %v4211 = vpop.f32.mrb[0].mxu0
        %4212 = vmatprep.mubr.bf16.mxu0 0
        %4213 = vmatmul.mubr.bf16.gmra.mrb[0].mxu0 %v4037
        %v4214 = vpop.f32.mrb[0].mxu0
        %v4215 = vadd.f32 0.0, %v4214
        %v4216 = vpop.f32.mrb[0].mxu0
        %v4217 = vpop.f32.mrb[0].mxu0
        %v4218 = vadd.f32 0.0, %v4217
        %v4219 = vpop.f32.mrb[0].mxu0
        %4220 = vmatprep.mubr.bf16.mxu0 0
        %4221 = vmatmul.mubr.bf16.gmra.mrb[0].mxu0 %v4038
        %v4222 = vpop.f32.mrb[0].mxu0
        %v4223 = vadd.f32 0.0, %v4222
        %v4224 = vpop.f32.mrb[0].mxu0
        %v4225 = vpop.f32.mrb[0].mxu0
        %v4226 = vadd.f32 0.0, %v4225
        %v4227 = vpop.f32.mrb[0].mxu0
        %4228 = vmatprep.mubr.bf16.mxu0 0
        %4229 = vmatmul.mubr.bf16.gmra.mrb[0].mxu0 %v4039
        %v4230 = vpop.f32.mrb[0].mxu0
        %v4231 = vadd.f32 0.0, %v4230
        %v4232 = vpop.f32.mrb[0].mxu0
        %v4233 = vpop.f32.mrb[0].mxu0
        %v4234 = vadd.f32 0.0, %v4233
        %v4235 = vpop.f32.mrb[0].mxu0
        %4236 = vmatprep.mubr.bf16.mxu0 0
        %4237 = vmatmul.mubr.bf16.gmra.mrb[0].mxu0 %v4040
        %v4238 = vpop.f32.mrb[0].mxu0
        %v4239 = vadd.f32 0.0, %v4238
        %v4240 = vpop.f32.mrb[0].mxu0
        %v4241 = vpop.f32.mrb[0].mxu0
        %v4242 = vadd.f32 0.0, %v4241
        %v4243 = vpop.f32.mrb[0].mxu0
        %4244 = vmatprep.mubr.bf16.mxu0 0
        %4245 = vmatmul.mubr.bf16.gmra.mrb[0].mxu0 %v4041
        %v4246 = vpop.f32.mrb[0].mxu0
        %v4247 = vadd.f32 0.0, %v4246
        %v4248 = vpop.f32.mrb[0].mxu0
        %v4249 = vpop.f32.mrb[0].mxu0
        %v4250 = vadd.f32 0.0, %v4249
        %v4251 = vpop.f32.mrb[0].mxu0
        %4252 = vmatprep.mubr.bf16.mxu0 0
        %4253 = vmatmul.mubr.bf16.gmra.mrb[0].mxu0 %v4042
        %v4254 = vpop.f32.mrb[0].mxu0
        %v4255 = vadd.f32 0.0, %v4254
        %v4256 = vpop.f32.mrb[0].mxu0
        %v4257 = vpop.f32.mrb[0].mxu0
        %v4258 = vadd.f32 0.0, %v4257
        %v4259 = vpop.f32.mrb[0].mxu0
        %4260 = vmatprep.mubr.bf16.mxu0 0
        %4261 = vmatmul.mubr.bf16.gmra.mrb[0].mxu0 %v4043
        %v4262 = vpop.f32.mrb[0].mxu0
        %v4263 = vadd.f32 0.0, %v4262
        %v4264 = vpop.f32.mrb[0].mxu0
        %v4265 = vpop.f32.mrb[0].mxu0
        %v4266 = vadd.f32 0.0, %v4265
        %v4267 = vpop.f32.mrb[0].mxu0
        %4268 = vdwg.mxu0
        %vm4269 = vcmp.gt.f32.partialorder %v4143, 0.0
        %vm4270 = vcmp.gt.f32.partialorder %v4146, 0.0
        %vm4271 = vcmp.gt.f32.partialorder %v4151, 0.0
        %vm4272 = vcmp.gt.f32.partialorder %v4154, 0.0
        %vm4273 = vcmp.gt.f32.partialorder %v4159, 0.0
        %vm4274 = vcmp.gt.f32.partialorder %v4162, 0.0
        %vm4275 = vcmp.gt.f32.partialorder %v4167, 0.0
        %vm4276 = vcmp.gt.f32.partialorder %v4170, 0.0
        %vm4277 = vcmp.gt.f32.partialorder %v4175, 0.0
        %vm4278 = vcmp.gt.f32.partialorder %v4178, 0.0
        %vm4279 = vcmp.gt.f32.partialorder %v4183, 0.0
        %vm4280 = vcmp.gt.f32.partialorder %v4186, 0.0
        %vm4281 = vcmp.gt.f32.partialorder %v4191, 0.0
        %vm4282 = vcmp.gt.f32.partialorder %v4194, 0.0
        %vm4283 = vcmp.gt.f32.partialorder %v4199, 0.0
        %vm4284 = vcmp.gt.f32.partialorder %v4202, 0.0
        %vm4285 = vcmp.gt.f32.partialorder %v4207, 0.0
        %vm4286 = vcmp.gt.f32.partialorder %v4210, 0.0
        %vm4287 = vcmp.gt.f32.partialorder %v4215, 0.0
        %vm4288 = vcmp.gt.f32.partialorder %v4218, 0.0
        %vm4289 = vcmp.gt.f32.partialorder %v4223, 0.0
        %vm4290 = vcmp.gt.f32.partialorder %v4226, 0.0
        %vm4291 = vcmp.gt.f32.partialorder %v4231, 0.0
        %vm4292 = vcmp.gt.f32.partialorder %v4234, 0.0
        %vm4293 = vcmp.gt.f32.partialorder %v4239, 0.0
        %vm4294 = vcmp.gt.f32.partialorder %v4242, 0.0
        %vm4295 = vcmp.gt.f32.partialorder %v4247, 0.0
        %vm4296 = vcmp.gt.f32.partialorder %v4250, 0.0
        %vm4297 = vcmp.gt.f32.partialorder %v4255, 0.0
        %vm4298 = vcmp.gt.f32.partialorder %v4258, 0.0
        %vm4299 = vcmp.gt.f32.partialorder %v4263, 0.0
        %vm4300 = vcmp.gt.f32.partialorder %v4266, 0.0
        %v4301 = vmul.f32 %v4143, 0.01
        %v4302 = vmul.f32 %v4146, 0.01
        %v4303 = vmul.f32 %v4151, 0.01
        %v4304 = vmul.f32 %v4154, 0.01
        %v4305 = vmul.f32 %v4159, 0.01
        %v4306 = vmul.f32 %v4162, 0.01
        %v4307 = vmul.f32 %v4167, 0.01
        %v4308 = vmul.f32 %v4170, 0.01
        %v4309 = vmul.f32 %v4175, 0.01
        %v4310 = vmul.f32 %v4178, 0.01
        %v4311 = vmul.f32 %v4183, 0.01
        %v4312 = vmul.f32 %v4186, 0.01
        %v4313 = vmul.f32 %v4191, 0.01
        %v4314 = vmul.f32 %v4194, 0.01
        %v4315 = vmul.f32 %v4199, 0.01
        %v4316 = vmul.f32 %v4202, 0.01
        %v4317 = vmul.f32 %v4207, 0.01
        %v4318 = vmul.f32 %v4210, 0.01
        %v4319 = vmul.f32 %v4215, 0.01
        %v4320 = vmul.f32 %v4218, 0.01
        %v4321 = vmul.f32 %v4223, 0.01
        %v4322 = vmul.f32 %v4226, 0.01
        %v4323 = vmul.f32 %v4231, 0.01
        %v4324 = vmul.f32 %v4234, 0.01
        %v4325 = vmul.f32 %v4239, 0.01
        %v4326 = vmul.f32 %v4242, 0.01
        %v4327 = vmul.f32 %v4247, 0.01
        %v4328 = vmul.f32 %v4250, 0.01
        %v4329 = vmul.f32 %v4255, 0.01
        %v4330 = vmul.f32 %v4258, 0.01
        %v4331 = vmul.f32 %v4263, 0.01
        %v4332 = vmul.f32 %v4266, 0.01
        %v4333 = vsel %vm4269, %v4143, %v4301
        %v4334 = vsel %vm4270, %v4146, %v4302
        %v4335 = vsel %vm4271, %v4151, %v4303
        %v4336 = vsel %vm4272, %v4154, %v4304
        %v4337 = vsel %vm4273, %v4159, %v4305
        %v4338 = vsel %vm4274, %v4162, %v4306
        %v4339 = vsel %vm4275, %v4167, %v4307
        %v4340 = vsel %vm4276, %v4170, %v4308
        %v4341 = vsel %vm4277, %v4175, %v4309
        %v4342 = vsel %vm4278, %v4178, %v4310
        %v4343 = vsel %vm4279, %v4183, %v4311
        %v4344 = vsel %vm4280, %v4186, %v4312
        %v4345 = vsel %vm4281, %v4191, %v4313
        %v4346 = vsel %vm4282, %v4194, %v4314
        %v4347 = vsel %vm4283, %v4199, %v4315
        %v4348 = vsel %vm4284, %v4202, %v4316
        %v4349 = vsel %vm4285, %v4207, %v4317
        %v4350 = vsel %vm4286, %v4210, %v4318
        %v4351 = vsel %vm4287, %v4215, %v4319
        %v4352 = vsel %vm4288, %v4218, %v4320
        %v4353 = vsel %vm4289, %v4223, %v4321
        %v4354 = vsel %vm4290, %v4226, %v4322
        %v4355 = vsel %vm4291, %v4231, %v4323
        %v4356 = vsel %vm4292, %v4234, %v4324
        %v4357 = vsel %vm4293, %v4239, %v4325
        %v4358 = vsel %vm4294, %v4242, %v4326
        %v4359 = vsel %vm4295, %v4247, %v4327
        %v4360 = vsel %vm4296, %v4250, %v4328
        %v4361 = vsel %vm4297, %v4255, %v4329
        %v4362 = vsel %vm4298, %v4258, %v4330
        %v4363 = vsel %vm4299, %v4263, %v4331
        %v4364 = vsel %vm4300, %v4266, %v4332
        %v4365 = vld [vmem:[#allocation7] sm:$0x1]
        %v4366 = vpack.c.bf16 %v4334, %v4333
        %v4367 = vpack.c.bf16 %v4336, %v4335
        %v4368 = vpack.c.bf16 %v4338, %v4337
        %v4369 = vpack.c.bf16 %v4340, %v4339
        %v4370 = vpack.c.bf16 %v4342, %v4341
        %v4371 = vpack.c.bf16 %v4344, %v4343
        %v4372 = vpack.c.bf16 %v4346, %v4345
        %v4373 = vpack.c.bf16 %v4348, %v4347
        %v4374 = vpack.c.bf16 %v4350, %v4349
        %v4375 = vpack.c.bf16 %v4352, %v4351
        %v4376 = vpack.c.bf16 %v4354, %v4353
        %v4377 = vpack.c.bf16 %v4356, %v4355
        %v4378 = vpack.c.bf16 %v4358, %v4357
        %v4379 = vpack.c.bf16 %v4360, %v4359
        %v4380 = vpack.c.bf16 %v4362, %v4361
        %v4381 = vpack.c.bf16 %v4364, %v4363
        %vm4382 = vcmask 261120
        %v4384 = vsel %vm4382, %v4365, 0
        %v4387 = vsel %vm4382, %v4366, 0
        %v4390 = vsel %vm4382, %v4367, 0
        %v4393 = vsel %vm4382, %v4368, 0
        %v4396 = vsel %vm4382, %v4369, 0
        %v4399 = vsel %vm4382, %v4370, 0
        %v4402 = vsel %vm4382, %v4371, 0
        %v4405 = vsel %vm4382, %v4372, 0
        %v4408 = vsel %vm4382, %v4373, 0
        %v4411 = vsel %vm4382, %v4374, 0
        %v4414 = vsel %vm4382, %v4375, 0
        %v4417 = vsel %vm4382, %v4376, 0
        %v4420 = vsel %vm4382, %v4377, 0
        %v4423 = vsel %vm4382, %v4378, 0
        %v4426 = vsel %vm4382, %v4379, 0
        %v4429 = vsel %vm4382, %v4380, 0
        %v4432 = vsel %vm4382, %v4381, 0
        %4434 = vmatprep.subr.bf16.mxu0 0
        %4435 = vmatpush1.bf16.xpose.msra.mxu0 %v4387
        %4436 = vmatprep.subr.bf16.mxu0 0
        %4437 = vmatpush1.bf16.xpose.msra.mxu0 %v4390
        %4438 = vmatprep.subr.bf16.mxu0 0
        %4439 = vmatpush1.bf16.xpose.msra.mxu0 %v4393
        %4440 = vmatprep.subr.bf16.mxu0 0
        %4441 = vmatpush1.bf16.xpose.msra.mxu0 %v4396
        %4442 = vmatprep.subr.bf16.mxu0 0
        %4443 = vmatpush1.bf16.xpose.msra.mxu0 %v4399
        %4444 = vmatprep.subr.bf16.mxu0 0
        %4445 = vmatpush1.bf16.xpose.msra.mxu0 %v4402
        %4446 = vmatprep.subr.bf16.mxu0 0
        %4447 = vmatpush1.bf16.xpose.msra.mxu0 %v4405
        %4448 = vmatprep.subr.bf16.mxu0 0
        %4449 = vmatpush1.bf16.xpose.msra.mxu0 %v4408
        %4450 = vmatprep.subr.bf16.mxu0 0
        %4451 = vmatpush1.bf16.xpose.msra.mxu0 %v4411
        %4452 = vmatprep.subr.bf16.mxu0 0
        %4453 = vmatpush1.bf16.xpose.msra.mxu0 %v4414
        %4454 = vmatprep.subr.bf16.mxu0 0
        %4455 = vmatpush1.bf16.xpose.msra.mxu0 %v4417
        %4456 = vmatprep.subr.bf16.mxu0 0
        %4457 = vmatpush1.bf16.xpose.msra.mxu0 %v4420
        %4458 = vmatprep.subr.bf16.mxu0 0
        %4459 = vmatpush1.bf16.xpose.msra.mxu0 %v4423
        %4460 = vmatprep.subr.bf16.mxu0 0
        %4461 = vmatpush1.bf16.xpose.msra.mxu0 %v4426
        %4462 = vmatprep.subr.bf16.mxu0 0
        %4463 = vmatpush1.bf16.xpose.msra.mxu0 %v4429
        %4464 = vmatprep.subr.bf16.mxu0 0
        %4465 = vmatpush1.bf16.xpose.msra.mxu0 %v4432
        %4466 = vmatprep.mubr.bf16.mxu0 0
        %4467 = vmatmul.mubr.bf16.gmra.mrb[0].mxu0 %v4384
        %v4468 = vpop.f32.mrb[0].mxu0
        %v4469 = vadd.f32 0.0, %v4468
        %v4470 = vpop.f32.mrb[0].mxu0
        %v4471 = vadd.f32 0.0, %v4470
        %v4472 = vpop.f32.mrb[0].mxu0
        %v4473 = vpop.f32.mrb[0].mxu0
        %4474 = vdwg.mxu0
        %v4475 = vsub.f32 0.0, %v4469
        %v4476 = vsub.f32 0.0, %v4471
        %v4477 = vmul.f32 %v4475, 1.442695
        %v4478 = vpow.pop %v4477
        %v4479 = vmul.f32 %v4476, 1.442695
        %v4480 = vpow.pop %v4479
        %v4481 = vadd.f32 %v4478, 1.0
        %v4482 = vadd.f32 %v4480, 1.0
        %v4483 = vrcp.pop %v4481
        %v4484 = vrcp.pop %v4482
        %v4487 = vcombine.low %v4483, %v4484
        %v4489 = vunpack.c.l.s4 1966171168
        %v4490 = vunpack.c.0.s8 %v4489
        %v4491 = vlaneseq
        %v4492 = vshrl.u32 %v4491, 7
        %v4493 = vsub.s32 %v4490, %v4492
        %v4494 = vrot.slane %v4487, %v4493
        %v4496 = vunpack.c.l.s4 1966171168
        %v4497 = vunpack.c.0.s8 %v4496
        %v4498 = vlaneseq
        %v4499 = vshrl.u32 %v4498, 7
        %v4500 = vsub.s32 %v4497, %v4499
        %v4501 = vrot.slane %v4494, %v4500
        %v4503 = vlaneseq
        %vm4504 = vcmp.ge.s32.totalorder %v4503, 0
        %vm4505 = vcmp.lt.s32.totalorder %v4503, 256
        %vm4506 = vmand %vm4504, %vm4505
        %4507 = vst.msk [vmem:[%s298] sm:$0x3] %vm4506, %v4501
        %s4508 = smul.u32 2, %s21
        %p4509 = scmp.lt.s32.totalorder %s4508, 3
        %s4510 = scalar_select %p4509, %s4508, 3
        %s4511 = scalar_lea.vmem %s5, %s4510
        // Predicated region
        $region57: #{discriminator_forward.1} parent=39 // pred_check
          %p4512 = pneg %p149
        $region58: #{discriminator_forward.1} parent=39 // pred_check_branch
          %4514 = sbr.rel (%p4512) target = $region60
        $region59: #{discriminator_forward.1} parent=39 // pred_region
          %s4515 = smul.u32 2, %s21
        $region60: #{discriminator_forward.1} parent=39 // pred_fallthru
          _
      $region40: #{discriminator_forward.1} parent=5 // pred_fallthru
        _
      %p4516 = scmp.le.s32.totalorder 2, %s16
      // Predicated region
      $region61: #{discriminator_forward.1} parent=5 // pred_check
        %p4517 = pneg %p4516
      $region62: #{discriminator_forward.1} parent=5 // pred_check_branch
        %4519 = sbr.rel (%p4517) target = $region64
      $region63: #{discriminator_forward.1} parent=5 // pred_region
        %s4520 = ssub.s32 %s16, 2
        // Predicated region
        $region65: #{discriminator_forward.1} parent=63 // pred_check
          %p4521 = pneg %p155
        $region66: #{discriminator_forward.1} parent=63 // pred_check_branch
          %4523 = sbr.rel (%p4521) target = $region68
        $region67: #{discriminator_forward.1} parent=63 // pred_region
          %s4524 = smul.u32 2, %s22
          %p4525 = scmp.lt.s32.totalorder %s4524, 3
          %s4526 = scalar_select %p4525, %s4524, 3
          %s4527 = scalar_lea.vmem %s5, %s4526
        $region68: #{discriminator_forward.1} parent=63 // pred_fallthru
          _
      $region64: #{discriminator_forward.1} parent=5 // pred_fallthru
        _
    $region6: #{discriminator_forward.1} parent=1 // loop_footer
      %s20 = sadd.s32 1, %s16
    $region7: #{discriminator_forward.1} parent=1 // loop_footer_branch
      %15 = sbr.rel target = $region3
    $region8: #{discriminator_forward.1} parent=1 // loop_exit
      _
    %4528 = vsyncpa [#allocation3], 1
    %s4529 = scalar_lea.sflag [#allocation3], 1
    %4530 = vsyncpa %s4529, 1
    %4531 = vsyncpa [#allocation5], 1
    %4532 = vsyncpa [#allocation8], 1

</llo_original>
